<compile_context>
chip_gen: v7x
topology: tpu7x:2x2x1
jax: 0.10.0
libtpu: 0.0.40
codegen_flags: <defaults>
</compile_context>

<pallas_src>
import jax
import jax.numpy as jnp
from jax.experimental import pallas as pl
from jax.experimental.pallas import tpu as pltpu


_HIGHEST = jax.lax.Precision.HIGHEST


# --------------------------------------------------------------------------
# Pallas kernels
# --------------------------------------------------------------------------
def _gru_dir_kernel(gi_ref, whh_ref, bhh_ref, y_ref):
    """Full GRU recurrence (all T steps) for one direction.

    Grid axis 0 = direction (0: forward, 1: backward), marked "parallel".

    gi_ref  : (T, 3, B, H)  precomputed x @ W_i{r,z,n}^T + b_i{r,z,n}
    whh_ref : (3, H, H)     W_h{r,z,n}^T  (kernel computes h @ whh[g])
    bhh_ref : (3, 1, H)     b_h{r,z,n}
    y_ref   : (T, B, H)     per-step hidden states for this direction
    """
    T, B, H = y_ref.shape
    d = pl.program_id(0)                     # 0 = forward, 1 = backward

    # Recurrent weights / biases stay resident across the whole time loop.
    w_r, w_z, w_n = whh_ref[0], whh_ref[1], whh_ref[2]
    b_r, b_z, b_n = bhh_ref[0], bhh_ref[1], bhh_ref[2]

    def step(t, h):
        # Forward walks t = 0..T-1; backward walks T-1..0.  The hidden state
        # is emitted at the same time index it consumed (PyTorch layout).
        idx = jnp.where(d == 0, t, T - 1 - t)
        gi = gi_ref[idx]                                    # (3, B, H)
        gh_r = jnp.dot(h, w_r, preferred_element_type=jnp.float32) + b_r
        gh_z = jnp.dot(h, w_z, preferred_element_type=jnp.float32) + b_z
        gh_n = jnp.dot(h, w_n, preferred_element_type=jnp.float32) + b_n
        r = jax.nn.sigmoid(gi[0] + gh_r)
        z = jax.nn.sigmoid(gi[1] + gh_z)
        n = jnp.tanh(gi[2] + r * gh_n)
        h_new = (1.0 - z) * n + z * h
        y_ref[idx] = h_new
        return h_new

    jax.lax.fori_loop(0, T, step, jnp.zeros((B, H), jnp.float32), unroll=True)


def gru_recurrence(gi, whh_t, bhh):
    """Run the recurrence for all directions of one layer in one pallas_call.

    gi    : (nd, T, 3, B, H)  hoisted input projections (bias included)
    whh_t : (nd, 3, H, H)     transposed recurrent weights
    bhh   : (nd, 3, 1, H)     recurrent biases
    returns (nd, T, B, H) per-step hidden states.
    """
    nd, T, _, B, H = gi.shape
    return pl.pallas_call(
        _gru_dir_kernel,
        out_shape=jax.ShapeDtypeStruct((nd, T, B, H), jnp.float32),
        grid_spec=pltpu.PrefetchScalarGridSpec(
            num_scalar_prefetch=0,
            grid=(nd,),
            in_specs=[
                pl.BlockSpec((None, T, 3, B, H), lambda d: (d, 0, 0, 0, 0)),
                pl.BlockSpec((None, 3, H, H), lambda d: (d, 0, 0, 0)),
                pl.BlockSpec((None, 3, 1, H), lambda d: (d, 0, 0, 0)),
            ],
            out_specs=pl.BlockSpec((None, T, B, H), lambda d: (d, 0, 0, 0)),
        ),
        compiler_params=pltpu.CompilerParams(
            # Directions are independent -> one per TensorCore on v7x;
            # harmless (sequential) on v5e/v6e.
            dimension_semantics=("parallel",)),
    )(gi, whh_t, bhh)


def _fc_relu_kernel(x_ref, w_ref, b_ref, o_ref):
    y = jnp.dot(x_ref[...], w_ref[...],
                preferred_element_type=jnp.float32) + b_ref[...]
    o_ref[...] = jnp.maximum(y, 0.0)


def fc_relu(x, w_t, b_row):
    """x: (B, F); w_t: (F, O); b_row: (1, O) -> relu(x @ w_t + b): (B, O)."""
    B = x.shape[0]
    O = w_t.shape[1]
    return pl.pallas_call(
        _fc_relu_kernel,
        out_shape=jax.ShapeDtypeStruct((B, O), jnp.float32),
    )(x, w_t, b_row)


# --------------------------------------------------------------------------
# Model wrapper (parameter setup + glue in plain JAX)
# --------------------------------------------------------------------------
class GRUModelPallas:
    def __init__(self, input_dim, hidden_dim, output_dim, num_layers,
                 bidirectional, dropout, key):
        self.input_dim = input_dim
        self.hidden_dim = hidden_dim
        self.output_dim = output_dim
        self.num_layers = num_layers
        self.bidirectional = bidirectional
        self.num_directions = 2 if bidirectional else 1
        self.dropout = dropout  # nn.GRU dropout is train-only: identity here

        H = hidden_dim
        nd = self.num_directions
        k_gru = 1.0 / (H ** 0.5)

        self.layers = []  # per layer: raw params + kernel-ready layouts
        for layer in range(num_layers):
            in_size = input_dim if layer == 0 else H * nd
            w_ih_l, w_hh_l, b_ih_l, b_hh_l = [], [], [], []
            for _ in range(nd):
                key, k1, k2, k3, k4 = jax.random.split(key, 5)
                # gate order [r | z | n], matching PyTorch (3H, in) reshaped.
                w_ih_l.append(jax.random.uniform(
                    k1, (3, H, in_size), jnp.float32, -k_gru, k_gru))
                w_hh_l.append(jax.random.uniform(
                    k2, (3, H, H), jnp.float32, -k_gru, k_gru))
                b_ih_l.append(jax.random.uniform(
                    k3, (3, H), jnp.float32, -k_gru, k_gru))
                b_hh_l.append(jax.random.uniform(
                    k4, (3, H), jnp.float32, -k_gru, k_gru))
            w_ih = jnp.stack(w_ih_l)          # (nd, 3, H, in_size)
            w_hh = jnp.stack(w_hh_l)          # (nd, 3, H, H)
            b_ih = jnp.stack(b_ih_l)          # (nd, 3, H)
            b_hh = jnp.stack(b_hh_l)          # (nd, 3, H)
            self.layers.append(dict(
                w_ih=w_ih, w_hh=w_hh, b_ih=b_ih, b_hh=b_hh,
                # kernel-ready layouts, prepared once (not per forward):
                w_hh_t=jnp.swapaxes(w_hh, -1, -2),          # (nd, 3, H, H)
                b_ih_b=b_ih[:, None, :, None, :],           # (nd, 1, 3, 1, H)
                b_hh_b=b_hh[:, :, None, :],                 # (nd, 3, 1, H)
            ))

        fc_in = H * nd
        k_fc = 1.0 / (fc_in ** 0.5)
        key, k1, k2 = jax.random.split(key, 3)
        self.fc_w = jax.random.uniform(k1, (output_dim, fc_in), jnp.float32,
                                       -k_fc, k_fc)
        self.fc_b = jax.random.uniform(k2, (output_dim,), jnp.float32,
                                       -k_fc, k_fc)
        self.fc_w_t = self.fc_w.T                            # (fc_in, O)
        self.fc_b_row = self.fc_b.reshape(1, output_dim)     # (1, O)

    def __call__(self, x_btd):
        """x_btd: (B, T, input_dim) float32 (PyTorch batch_first layout)."""
        h = jnp.transpose(x_btd, (1, 0, 2)).astype(jnp.float32)   # (T, B, D)
        for lp in self.layers:
            # Hoisted input projection: single batched matmul over all T*B
            # rows per (direction, gate); bias b_ih folded in here.
            gi = jnp.einsum('tbd,cghd->ctgbh', h, lp['w_ih'],
                            precision=_HIGHEST) + lp['b_ih_b']    # (nd,T,3,B,H)
            out = gru_recurrence(gi, lp['w_hh_t'], lp['b_hh_b'])  # (nd,T,B,H)
            h = jnp.concatenate(
                [out[i] for i in range(self.num_directions)], axis=-1)
            # inter-layer dropout is inactive at inference (and dropout == 0.0)
        last = h[-1]                          # out[:, -1, :] in torch terms
        return fc_relu(last, self.fc_w_t, self.fc_b_row)


# --------------------------------------------------------------------------
# Pure-JAX reference (independent path, for numerical sanity check)
# --------------------------------------------------------------------------
def _ref_gru_dir(x_tbd, w_ih, w_hh, b_ih, b_hh):
    """w_ih: (3,H,in), w_hh: (3,H,H), b_*: (3,H)."""
    B = x_tbd.shape[1]
    H = w_hh.shape[-1]

    def step(h, x):
        gi = jnp.einsum('bd,ghd->gbh', x, w_ih,
                        precision=_HIGHEST) + b_ih[:, None, :]
        gh = jnp.einsum('bh,gkh->gbk', h, w_hh,
                        precision=_HIGHEST) + b_hh[:, None, :]
        r = jax.nn.sigmoid(gi[0] + gh[0])
        z = jax.nn.sigmoid(gi[1] + gh[1])
        n = jnp.tanh(gi[2] + r * gh[2])
        h_new = (1.0 - z) * n + z * h
        return h_new, h_new

    h0 = jnp.zeros((B, H), jnp.float32)
    _, ys = jax.lax.scan(step, h0, x_tbd)
    return ys


def _ref_forward(model, x_btd):
    h = jnp.transpose(x_btd, (1, 0, 2)).astype(jnp.float32)
    for lp in model.layers:
        outs = []
        for d in range(model.num_directions):
            xin = h if d == 0 else jnp.flip(h, axis=0)
            ys = _ref_gru_dir(xin, lp['w_ih'][d], lp['w_hh'][d],
                              lp['b_ih'][d], lp['b_hh'][d])
            outs.append(ys if d == 0 else jnp.flip(ys, axis=0))
        h = jnp.concatenate(outs, axis=-1)
    last = h[-1]
    return jnp.maximum(
        jnp.dot(last, model.fc_w.T, precision=_HIGHEST) + model.fc_b, 0.0)


# --------------------------------------------------------------------------
if __name__ == "__main__":
    B, T = 2, 8
    INPUT_DIM, HIDDEN_DIM, OUTPUT_DIM = 16, 32, 8
    NUM_LAYERS, BIDIRECTIONAL, DROPOUT = 2, True, 0.0

    key = jax.random.PRNGKey(0)
    key, xk, pk = jax.random.split(key, 3)
    x = jax.random.normal(xk, (B, T, INPUT_DIM), jnp.float32)

    model = GRUModelPallas(INPUT_DIM, HIDDEN_DIM, OUTPUT_DIM,
                           NUM_LAYERS, BIDIRECTIONAL, DROPOUT, pk)

    fwd = jax.jit(lambda xx: model(xx))
    out = jax.block_until_ready(fwd(x))
    assert out.shape == (B, OUTPUT_DIM), out.shape

    ref = jax.block_until_ready(_ref_forward(model, x))
    if not jnp.allclose(out, ref, atol=1e-3, rtol=1e-3):
        raise AssertionError(
            f"mismatch: max abs diff {jnp.max(jnp.abs(out - ref))}")

    print("KERNEL_OK")
</pallas_src>

<mosaic_0001>
module attributes {stable_mosaic.version = 11 : i64} {
  func.func @_gru_dir_kernel(%arg0: i32, %arg1: memref<1x8x3x2x32xf32, #tpu.memory_space<vmem>>, %arg2: memref<1x3x32x32xf32, #tpu.memory_space<vmem>>, %arg3: memref<1x3x1x32xf32, #tpu.memory_space<vmem>>, %arg4: memref<1x8x2x32xf32, #tpu.memory_space<vmem>>) attributes {dimension_semantics = [#tpu.dimension_semantics<parallel>], iteration_bounds = array<i64: 2>, scalar_prefetch = 0 : i64, scratch_operands = 0 : i64, tpu.core_type = #tpu.core_type<tc>, window_params = [{transform_indices = @transform_0, window_bounds = array<i64: 1, 8, 3, 2, 32>}, {transform_indices = @transform_1, window_bounds = array<i64: 1, 3, 32, 32>}, {transform_indices = @transform_2, window_bounds = array<i64: 1, 3, 1, 32>}, {transform_indices = @transform_3, window_bounds = array<i64: 1, 8, 2, 32>}]} {
    %c0 = arith.constant 0 : index
    %c0_0 = arith.constant 0 : index
    %c0_1 = arith.constant 0 : index
    %c0_2 = arith.constant 0 : index
    %0 = vector.load %arg2[%c0, %c0_0, %c0_1, %c0_2] : memref<1x3x32x32xf32, #tpu.memory_space<vmem>>, vector<1x1x32x32xf32>
    %1 = vector.shape_cast %0 : vector<1x1x32x32xf32> to vector<32x32xf32>
    %c0_3 = arith.constant 0 : index
    %c1 = arith.constant 1 : index
    %c0_4 = arith.constant 0 : index
    %c0_5 = arith.constant 0 : index
    %2 = vector.load %arg2[%c0_3, %c1, %c0_4, %c0_5] : memref<1x3x32x32xf32, #tpu.memory_space<vmem>>, vector<1x1x32x32xf32>
    %3 = vector.shape_cast %2 : vector<1x1x32x32xf32> to vector<32x32xf32>
    %c0_6 = arith.constant 0 : index
    %c2 = arith.constant 2 : index
    %c0_7 = arith.constant 0 : index
    %c0_8 = arith.constant 0 : index
    %4 = vector.load %arg2[%c0_6, %c2, %c0_7, %c0_8] : memref<1x3x32x32xf32, #tpu.memory_space<vmem>>, vector<1x1x32x32xf32>
    %5 = vector.shape_cast %4 : vector<1x1x32x32xf32> to vector<32x32xf32>
    %c0_9 = arith.constant 0 : index
    %c0_10 = arith.constant 0 : index
    %c0_11 = arith.constant 0 : index
    %c0_12 = arith.constant 0 : index
    %6 = vector.load %arg3[%c0_9, %c0_10, %c0_11, %c0_12] : memref<1x3x1x32xf32, #tpu.memory_space<vmem>>, vector<1x1x1x32xf32>
    %7 = vector.shape_cast %6 : vector<1x1x1x32xf32> to vector<1x32xf32>
    %c0_13 = arith.constant 0 : index
    %c1_14 = arith.constant 1 : index
    %c0_15 = arith.constant 0 : index
    %c0_16 = arith.constant 0 : index
    %8 = vector.load %arg3[%c0_13, %c1_14, %c0_15, %c0_16] : memref<1x3x1x32xf32, #tpu.memory_space<vmem>>, vector<1x1x1x32xf32>
    %9 = vector.shape_cast %8 : vector<1x1x1x32xf32> to vector<1x32xf32>
    %c0_17 = arith.constant 0 : index
    %c2_18 = arith.constant 2 : index
    %c0_19 = arith.constant 0 : index
    %c0_20 = arith.constant 0 : index
    %10 = vector.load %arg3[%c0_17, %c2_18, %c0_19, %c0_20] : memref<1x3x1x32xf32, #tpu.memory_space<vmem>>, vector<1x1x1x32xf32>
    %11 = vector.shape_cast %10 : vector<1x1x1x32xf32> to vector<1x32xf32>
    %cst = arith.constant 0.000000e+00 : f32
    %12 = vector.broadcast %cst : f32 to vector<2x32xf32>
    %c0_i32 = arith.constant 0 : i32
    %c0_i32_21 = arith.constant 0 : i32
    %13 = arith.cmpi eq, %arg0, %c0_i32_21 : i32
    %c7_i32 = arith.constant 7 : i32
    %14 = arith.subi %c7_i32, %c0_i32 : i32
    %15 = arith.select %13, %c0_i32, %14 : i32
    %c0_22 = arith.constant 0 : index
    %16 = arith.index_cast %15 : i32 to index
    %c0_23 = arith.constant 0 : index
    %c0_24 = arith.constant 0 : index
    %c0_25 = arith.constant 0 : index
    %17 = vector.load %arg1[%c0_22, %16, %c0_23, %c0_24, %c0_25] : memref<1x8x3x2x32xf32, #tpu.memory_space<vmem>>, vector<1x1x3x2x32xf32>
    %18 = vector.shape_cast %17 : vector<1x1x3x2x32xf32> to vector<3x2x32xf32>
    %cst_26 = arith.constant dense<0.000000e+00> : vector<2x32xf32>
    %19 = tpu.matmul %12, %1, %cst_26 {dimension_numbers = #tpu.dot_dimension_numbers<[1], [0], [0], [1], [0, 0, 1, 1], [], []>} : vector<2x32xf32>, vector<32x32xf32>, vector<2x32xf32> -> vector<2x32xf32>
    %20 = vector.broadcast %7 : vector<1x32xf32> to vector<2x32xf32>
    %21 = arith.addf %19, %20 : vector<2x32xf32>
    %cst_27 = arith.constant dense<0.000000e+00> : vector<2x32xf32>
    %22 = tpu.matmul %12, %3, %cst_27 {dimension_numbers = #tpu.dot_dimension_numbers<[1], [0], [0], [1], [0, 0, 1, 1], [], []>} : vector<2x32xf32>, vector<32x32xf32>, vector<2x32xf32> -> vector<2x32xf32>
    %23 = vector.broadcast %9 : vector<1x32xf32> to vector<2x32xf32>
    %24 = arith.addf %22, %23 : vector<2x32xf32>
    %cst_28 = arith.constant dense<0.000000e+00> : vector<2x32xf32>
    %25 = tpu.matmul %12, %5, %cst_28 {dimension_numbers = #tpu.dot_dimension_numbers<[1], [0], [0], [1], [0, 0, 1, 1], [], []>} : vector<2x32xf32>, vector<32x32xf32>, vector<2x32xf32> -> vector<2x32xf32>
    %26 = vector.broadcast %11 : vector<1x32xf32> to vector<2x32xf32>
    %27 = arith.addf %25, %26 : vector<2x32xf32>
    %28 = vector.extract_strided_slice %18 {offsets = [0, 0, 0], sizes = [1, 2, 32], strides = [1, 1, 1]} : vector<3x2x32xf32> to vector<1x2x32xf32>
    %29 = vector.shape_cast %28 : vector<1x2x32xf32> to vector<2x32xf32>
    %30 = arith.addf %29, %21 : vector<2x32xf32>
    %31 = arith.negf %30 : vector<2x32xf32>
    %32 = math.exp %31 : vector<2x32xf32>
    %cst_29 = arith.constant 1.000000e+00 : f32
    %33 = vector.broadcast %cst_29 : f32 to vector<2x32xf32>
    %34 = arith.addf %33, %32 : vector<2x32xf32>
    %35 = arith.divf %33, %34 : vector<2x32xf32>
    %36 = vector.extract_strided_slice %18 {offsets = [1, 0, 0], sizes = [1, 2, 32], strides = [1, 1, 1]} : vector<3x2x32xf32> to vector<1x2x32xf32>
    %37 = vector.shape_cast %36 : vector<1x2x32xf32> to vector<2x32xf32>
    %38 = arith.addf %37, %24 : vector<2x32xf32>
    %39 = arith.negf %38 : vector<2x32xf32>
    %40 = math.exp %39 : vector<2x32xf32>
    %cst_30 = arith.constant 1.000000e+00 : f32
    %41 = vector.broadcast %cst_30 : f32 to vector<2x32xf32>
    %42 = arith.addf %41, %40 : vector<2x32xf32>
    %43 = arith.divf %41, %42 : vector<2x32xf32>
    %44 = vector.extract_strided_slice %18 {offsets = [2, 0, 0], sizes = [1, 2, 32], strides = [1, 1, 1]} : vector<3x2x32xf32> to vector<1x2x32xf32>
    %45 = vector.shape_cast %44 : vector<1x2x32xf32> to vector<2x32xf32>
    %46 = arith.mulf %35, %27 : vector<2x32xf32>
    %47 = arith.addf %45, %46 : vector<2x32xf32>
    %48 = math.tanh %47 : vector<2x32xf32>
    %cst_31 = arith.constant 1.000000e+00 : f32
    %49 = vector.broadcast %cst_31 : f32 to vector<2x32xf32>
    %50 = arith.subf %49, %43 : vector<2x32xf32>
    %51 = arith.mulf %50, %48 : vector<2x32xf32>
    %52 = arith.mulf %43, %12 : vector<2x32xf32>
    %53 = arith.addf %51, %52 : vector<2x32xf32>
    %c0_32 = arith.constant 0 : index
    %54 = arith.index_cast %15 : i32 to index
    %c0_33 = arith.constant 0 : index
    %c0_34 = arith.constant 0 : index
    %55 = vector.load %arg4[%c0_32, %54, %c0_33, %c0_34] : memref<1x8x2x32xf32, #tpu.memory_space<vmem>>, vector<1x1x2x32xf32>
    %56 = vector.shape_cast %55 : vector<1x1x2x32xf32> to vector<2x32xf32>
    %57 = vector.shape_cast %53 : vector<2x32xf32> to vector<1x1x2x32xf32>
    tpu.vector_store %arg4[%c0_32, %54, %c0_33, %c0_34], %57 {strides = array<i32>} : memref<1x8x2x32xf32, #tpu.memory_space<vmem>>, vector<1x1x2x32xf32>,
    %c1_i32 = arith.constant 1 : i32
    %c0_i32_35 = arith.constant 0 : i32
    %58 = arith.cmpi eq, %arg0, %c0_i32_35 : i32
    %c7_i32_36 = arith.constant 7 : i32
    %59 = arith.subi %c7_i32_36, %c1_i32 : i32
    %60 = arith.select %58, %c1_i32, %59 : i32
    %c0_37 = arith.constant 0 : index
    %61 = arith.index_cast %60 : i32 to index
    %c0_38 = arith.constant 0 : index
    %c0_39 = arith.constant 0 : index
    %c0_40 = arith.constant 0 : index
    %62 = vector.load %arg1[%c0_37, %61, %c0_38, %c0_39, %c0_40] : memref<1x8x3x2x32xf32, #tpu.memory_space<vmem>>, vector<1x1x3x2x32xf32>
    %63 = vector.shape_cast %62 : vector<1x1x3x2x32xf32> to vector<3x2x32xf32>
    %cst_41 = arith.constant dense<0.000000e+00> : vector<2x32xf32>
    %64 = tpu.matmul %53, %1, %cst_41 {dimension_numbers = #tpu.dot_dimension_numbers<[1], [0], [0], [1], [0, 0, 1, 1], [], []>} : vector<2x32xf32>, vector<32x32xf32>, vector<2x32xf32> -> vector<2x32xf32>
    %65 = vector.broadcast %7 : vector<1x32xf32> to vector<2x32xf32>
    %66 = arith.addf %64, %65 : vector<2x32xf32>
    %cst_42 = arith.constant dense<0.000000e+00> : vector<2x32xf32>
    %67 = tpu.matmul %53, %3, %cst_42 {dimension_numbers = #tpu.dot_dimension_numbers<[1], [0], [0], [1], [0, 0, 1, 1], [], []>} : vector<2x32xf32>, vector<32x32xf32>, vector<2x32xf32> -> vector<2x32xf32>
    %68 = vector.broadcast %9 : vector<1x32xf32> to vector<2x32xf32>
    %69 = arith.addf %67, %68 : vector<2x32xf32>
    %cst_43 = arith.constant dense<0.000000e+00> : vector<2x32xf32>
    %70 = tpu.matmul %53, %5, %cst_43 {dimension_numbers = #tpu.dot_dimension_numbers<[1], [0], [0], [1], [0, 0, 1, 1], [], []>} : vector<2x32xf32>, vector<32x32xf32>, vector<2x32xf32> -> vector<2x32xf32>
    %71 = vector.broadcast %11 : vector<1x32xf32> to vector<2x32xf32>
    %72 = arith.addf %70, %71 : vector<2x32xf32>
    %73 = vector.extract_strided_slice %63 {offsets = [0, 0, 0], sizes = [1, 2, 32], strides = [1, 1, 1]} : vector<3x2x32xf32> to vector<1x2x32xf32>
    %74 = vector.shape_cast %73 : vector<1x2x32xf32> to vector<2x32xf32>
    %75 = arith.addf %74, %66 : vector<2x32xf32>
    %76 = arith.negf %75 : vector<2x32xf32>
    %77 = math.exp %76 : vector<2x32xf32>
    %cst_44 = arith.constant 1.000000e+00 : f32
    %78 = vector.broadcast %cst_44 : f32 to vector<2x32xf32>
    %79 = arith.addf %78, %77 : vector<2x32xf32>
    %80 = arith.divf %78, %79 : vector<2x32xf32>
    %81 = vector.extract_strided_slice %63 {offsets = [1, 0, 0], sizes = [1, 2, 32], strides = [1, 1, 1]} : vector<3x2x32xf32> to vector<1x2x32xf32>
    %82 = vector.shape_cast %81 : vector<1x2x32xf32> to vector<2x32xf32>
    %83 = arith.addf %82, %69 : vector<2x32xf32>
    %84 = arith.negf %83 : vector<2x32xf32>
    %85 = math.exp %84 : vector<2x32xf32>
    %cst_45 = arith.constant 1.000000e+00 : f32
    %86 = vector.broadcast %cst_45 : f32 to vector<2x32xf32>
    %87 = arith.addf %86, %85 : vector<2x32xf32>
    %88 = arith.divf %86, %87 : vector<2x32xf32>
    %89 = vector.extract_strided_slice %63 {offsets = [2, 0, 0], sizes = [1, 2, 32], strides = [1, 1, 1]} : vector<3x2x32xf32> to vector<1x2x32xf32>
    %90 = vector.shape_cast %89 : vector<1x2x32xf32> to vector<2x32xf32>
    %91 = arith.mulf %80, %72 : vector<2x32xf32>
    %92 = arith.addf %90, %91 : vector<2x32xf32>
    %93 = math.tanh %92 : vector<2x32xf32>
    %cst_46 = arith.constant 1.000000e+00 : f32
    %94 = vector.broadcast %cst_46 : f32 to vector<2x32xf32>
    %95 = arith.subf %94, %88 : vector<2x32xf32>
    %96 = arith.mulf %95, %93 : vector<2x32xf32>
    %97 = arith.mulf %88, %53 : vector<2x32xf32>
    %98 = arith.addf %96, %97 : vector<2x32xf32>
    %c0_47 = arith.constant 0 : index
    %99 = arith.index_cast %60 : i32 to index
    %c0_48 = arith.constant 0 : index
    %c0_49 = arith.constant 0 : index
    %100 = vector.load %arg4[%c0_47, %99, %c0_48, %c0_49] : memref<1x8x2x32xf32, #tpu.memory_space<vmem>>, vector<1x1x2x32xf32>
    %101 = vector.shape_cast %100 : vector<1x1x2x32xf32> to vector<2x32xf32>
    %102 = vector.shape_cast %98 : vector<2x32xf32> to vector<1x1x2x32xf32>
    tpu.vector_store %arg4[%c0_47, %99, %c0_48, %c0_49], %102 {strides = array<i32>} : memref<1x8x2x32xf32, #tpu.memory_space<vmem>>, vector<1x1x2x32xf32>,
    %c2_i32 = arith.constant 2 : i32
    %c0_i32_50 = arith.constant 0 : i32
    %103 = arith.cmpi eq, %arg0, %c0_i32_50 : i32
    %c7_i32_51 = arith.constant 7 : i32
    %104 = arith.subi %c7_i32_51, %c2_i32 : i32
    %105 = arith.select %103, %c2_i32, %104 : i32
    %c0_52 = arith.constant 0 : index
    %106 = arith.index_cast %105 : i32 to index
    %c0_53 = arith.constant 0 : index
    %c0_54 = arith.constant 0 : index
    %c0_55 = arith.constant 0 : index
    %107 = vector.load %arg1[%c0_52, %106, %c0_53, %c0_54, %c0_55] : memref<1x8x3x2x32xf32, #tpu.memory_space<vmem>>, vector<1x1x3x2x32xf32>
    %108 = vector.shape_cast %107 : vector<1x1x3x2x32xf32> to vector<3x2x32xf32>
    %cst_56 = arith.constant dense<0.000000e+00> : vector<2x32xf32>
    %109 = tpu.matmul %98, %1, %cst_56 {dimension_numbers = #tpu.dot_dimension_numbers<[1], [0], [0], [1], [0, 0, 1, 1], [], []>} : vector<2x32xf32>, vector<32x32xf32>, vector<2x32xf32> -> vector<2x32xf32>
    %110 = vector.broadcast %7 : vector<1x32xf32> to vector<2x32xf32>
    %111 = arith.addf %109, %110 : vector<2x32xf32>
    %cst_57 = arith.constant dense<0.000000e+00> : vector<2x32xf32>
    %112 = tpu.matmul %98, %3, %cst_57 {dimension_numbers = #tpu.dot_dimension_numbers<[1], [0], [0], [1], [0, 0, 1, 1], [], []>} : vector<2x32xf32>, vector<32x32xf32>, vector<2x32xf32> -> vector<2x32xf32>
    %113 = vector.broadcast %9 : vector<1x32xf32> to vector<2x32xf32>
    %114 = arith.addf %112, %113 : vector<2x32xf32>
    %cst_58 = arith.constant dense<0.000000e+00> : vector<2x32xf32>
    %115 = tpu.matmul %98, %5, %cst_58 {dimension_numbers = #tpu.dot_dimension_numbers<[1], [0], [0], [1], [0, 0, 1, 1], [], []>} : vector<2x32xf32>, vector<32x32xf32>, vector<2x32xf32> -> vector<2x32xf32>
    %116 = vector.broadcast %11 : vector<1x32xf32> to vector<2x32xf32>
    %117 = arith.addf %115, %116 : vector<2x32xf32>
    %118 = vector.extract_strided_slice %108 {offsets = [0, 0, 0], sizes = [1, 2, 32], strides = [1, 1, 1]} : vector<3x2x32xf32> to vector<1x2x32xf32>
    %119 = vector.shape_cast %118 : vector<1x2x32xf32> to vector<2x32xf32>
    %120 = arith.addf %119, %111 : vector<2x32xf32>
    %121 = arith.negf %120 : vector<2x32xf32>
    %122 = math.exp %121 : vector<2x32xf32>
    %cst_59 = arith.constant 1.000000e+00 : f32
    %123 = vector.broadcast %cst_59 : f32 to vector<2x32xf32>
    %124 = arith.addf %123, %122 : vector<2x32xf32>
    %125 = arith.divf %123, %124 : vector<2x32xf32>
    %126 = vector.extract_strided_slice %108 {offsets = [1, 0, 0], sizes = [1, 2, 32], strides = [1, 1, 1]} : vector<3x2x32xf32> to vector<1x2x32xf32>
    %127 = vector.shape_cast %126 : vector<1x2x32xf32> to vector<2x32xf32>
    %128 = arith.addf %127, %114 : vector<2x32xf32>
    %129 = arith.negf %128 : vector<2x32xf32>
    %130 = math.exp %129 : vector<2x32xf32>
    %cst_60 = arith.constant 1.000000e+00 : f32
    %131 = vector.broadcast %cst_60 : f32 to vector<2x32xf32>
    %132 = arith.addf %131, %130 : vector<2x32xf32>
    %133 = arith.divf %131, %132 : vector<2x32xf32>
    %134 = vector.extract_strided_slice %108 {offsets = [2, 0, 0], sizes = [1, 2, 32], strides = [1, 1, 1]} : vector<3x2x32xf32> to vector<1x2x32xf32>
    %135 = vector.shape_cast %134 : vector<1x2x32xf32> to vector<2x32xf32>
    %136 = arith.mulf %125, %117 : vector<2x32xf32>
    %137 = arith.addf %135, %136 : vector<2x32xf32>
    %138 = math.tanh %137 : vector<2x32xf32>
    %cst_61 = arith.constant 1.000000e+00 : f32
    %139 = vector.broadcast %cst_61 : f32 to vector<2x32xf32>
    %140 = arith.subf %139, %133 : vector<2x32xf32>
    %141 = arith.mulf %140, %138 : vector<2x32xf32>
    %142 = arith.mulf %133, %98 : vector<2x32xf32>
    %143 = arith.addf %141, %142 : vector<2x32xf32>
    %c0_62 = arith.constant 0 : index
    %144 = arith.index_cast %105 : i32 to index
    %c0_63 = arith.constant 0 : index
    %c0_64 = arith.constant 0 : index
    %145 = vector.load %arg4[%c0_62, %144, %c0_63, %c0_64] : memref<1x8x2x32xf32, #tpu.memory_space<vmem>>, vector<1x1x2x32xf32>
    %146 = vector.shape_cast %145 : vector<1x1x2x32xf32> to vector<2x32xf32>
    %147 = vector.shape_cast %143 : vector<2x32xf32> to vector<1x1x2x32xf32>
    tpu.vector_store %arg4[%c0_62, %144, %c0_63, %c0_64], %147 {strides = array<i32>} : memref<1x8x2x32xf32, #tpu.memory_space<vmem>>, vector<1x1x2x32xf32>,
    %c3_i32 = arith.constant 3 : i32
    %c0_i32_65 = arith.constant 0 : i32
    %148 = arith.cmpi eq, %arg0, %c0_i32_65 : i32
    %c7_i32_66 = arith.constant 7 : i32
    %149 = arith.subi %c7_i32_66, %c3_i32 : i32
    %150 = arith.select %148, %c3_i32, %149 : i32
    %c0_67 = arith.constant 0 : index
    %151 = arith.index_cast %150 : i32 to index
    %c0_68 = arith.constant 0 : index
    %c0_69 = arith.constant 0 : index
    %c0_70 = arith.constant 0 : index
    %152 = vector.load %arg1[%c0_67, %151, %c0_68, %c0_69, %c0_70] : memref<1x8x3x2x32xf32, #tpu.memory_space<vmem>>, vector<1x1x3x2x32xf32>
    %153 = vector.shape_cast %152 : vector<1x1x3x2x32xf32> to vector<3x2x32xf32>
    %cst_71 = arith.constant dense<0.000000e+00> : vector<2x32xf32>
    %154 = tpu.matmul %143, %1, %cst_71 {dimension_numbers = #tpu.dot_dimension_numbers<[1], [0], [0], [1], [0, 0, 1, 1], [], []>} : vector<2x32xf32>, vector<32x32xf32>, vector<2x32xf32> -> vector<2x32xf32>
    %155 = vector.broadcast %7 : vector<1x32xf32> to vector<2x32xf32>
    %156 = arith.addf %154, %155 : vector<2x32xf32>
    %cst_72 = arith.constant dense<0.000000e+00> : vector<2x32xf32>
    %157 = tpu.matmul %143, %3, %cst_72 {dimension_numbers = #tpu.dot_dimension_numbers<[1], [0], [0], [1], [0, 0, 1, 1], [], []>} : vector<2x32xf32>, vector<32x32xf32>, vector<2x32xf32> -> vector<2x32xf32>
    %158 = vector.broadcast %9 : vector<1x32xf32> to vector<2x32xf32>
    %159 = arith.addf %157, %158 : vector<2x32xf32>
    %cst_73 = arith.constant dense<0.000000e+00> : vector<2x32xf32>
    %160 = tpu.matmul %143, %5, %cst_73 {dimension_numbers = #tpu.dot_dimension_numbers<[1], [0], [0], [1], [0, 0, 1, 1], [], []>} : vector<2x32xf32>, vector<32x32xf32>, vector<2x32xf32> -> vector<2x32xf32>
    %161 = vector.broadcast %11 : vector<1x32xf32> to vector<2x32xf32>
    %162 = arith.addf %160, %161 : vector<2x32xf32>
    %163 = vector.extract_strided_slice %153 {offsets = [0, 0, 0], sizes = [1, 2, 32], strides = [1, 1, 1]} : vector<3x2x32xf32> to vector<1x2x32xf32>
    %164 = vector.shape_cast %163 : vector<1x2x32xf32> to vector<2x32xf32>
    %165 = arith.addf %164, %156 : vector<2x32xf32>
    %166 = arith.negf %165 : vector<2x32xf32>
    %167 = math.exp %166 : vector<2x32xf32>
    %cst_74 = arith.constant 1.000000e+00 : f32
    %168 = vector.broadcast %cst_74 : f32 to vector<2x32xf32>
    %169 = arith.addf %168, %167 : vector<2x32xf32>
    %170 = arith.divf %168, %169 : vector<2x32xf32>
    %171 = vector.extract_strided_slice %153 {offsets = [1, 0, 0], sizes = [1, 2, 32], strides = [1, 1, 1]} : vector<3x2x32xf32> to vector<1x2x32xf32>
    %172 = vector.shape_cast %171 : vector<1x2x32xf32> to vector<2x32xf32>
    %173 = arith.addf %172, %159 : vector<2x32xf32>
    %174 = arith.negf %173 : vector<2x32xf32>
    %175 = math.exp %174 : vector<2x32xf32>
    %cst_75 = arith.constant 1.000000e+00 : f32
    %176 = vector.broadcast %cst_75 : f32 to vector<2x32xf32>
    %177 = arith.addf %176, %175 : vector<2x32xf32>
    %178 = arith.divf %176, %177 : vector<2x32xf32>
    %179 = vector.extract_strided_slice %153 {offsets = [2, 0, 0], sizes = [1, 2, 32], strides = [1, 1, 1]} : vector<3x2x32xf32> to vector<1x2x32xf32>
    %180 = vector.shape_cast %179 : vector<1x2x32xf32> to vector<2x32xf32>
    %181 = arith.mulf %170, %162 : vector<2x32xf32>
    %182 = arith.addf %180, %181 : vector<2x32xf32>
    %183 = math.tanh %182 : vector<2x32xf32>
    %cst_76 = arith.constant 1.000000e+00 : f32
    %184 = vector.broadcast %cst_76 : f32 to vector<2x32xf32>
    %185 = arith.subf %184, %178 : vector<2x32xf32>
    %186 = arith.mulf %185, %183 : vector<2x32xf32>
    %187 = arith.mulf %178, %143 : vector<2x32xf32>
    %188 = arith.addf %186, %187 : vector<2x32xf32>
    %c0_77 = arith.constant 0 : index
    %189 = arith.index_cast %150 : i32 to index
    %c0_78 = arith.constant 0 : index
    %c0_79 = arith.constant 0 : index
    %190 = vector.load %arg4[%c0_77, %189, %c0_78, %c0_79] : memref<1x8x2x32xf32, #tpu.memory_space<vmem>>, vector<1x1x2x32xf32>
    %191 = vector.shape_cast %190 : vector<1x1x2x32xf32> to vector<2x32xf32>
    %192 = vector.shape_cast %188 : vector<2x32xf32> to vector<1x1x2x32xf32>
    tpu.vector_store %arg4[%c0_77, %189, %c0_78, %c0_79], %192 {strides = array<i32>} : memref<1x8x2x32xf32, #tpu.memory_space<vmem>>, vector<1x1x2x32xf32>,
    %c4_i32 = arith.constant 4 : i32
    %c0_i32_80 = arith.constant 0 : i32
    %193 = arith.cmpi eq, %arg0, %c0_i32_80 : i32
    %c7_i32_81 = arith.constant 7 : i32
    %194 = arith.subi %c7_i32_81, %c4_i32 : i32
    %195 = arith.select %193, %c4_i32, %194 : i32
    %c0_82 = arith.constant 0 : index
    %196 = arith.index_cast %195 : i32 to index
    %c0_83 = arith.constant 0 : index
    %c0_84 = arith.constant 0 : index
    %c0_85 = arith.constant 0 : index
    %197 = vector.load %arg1[%c0_82, %196, %c0_83, %c0_84, %c0_85] : memref<1x8x3x2x32xf32, #tpu.memory_space<vmem>>, vector<1x1x3x2x32xf32>
    %198 = vector.shape_cast %197 : vector<1x1x3x2x32xf32> to vector<3x2x32xf32>
    %cst_86 = arith.constant dense<0.000000e+00> : vector<2x32xf32>
    %199 = tpu.matmul %188, %1, %cst_86 {dimension_numbers = #tpu.dot_dimension_numbers<[1], [0], [0], [1], [0, 0, 1, 1], [], []>} : vector<2x32xf32>, vector<32x32xf32>, vector<2x32xf32> -> vector<2x32xf32>
    %200 = vector.broadcast %7 : vector<1x32xf32> to vector<2x32xf32>
    %201 = arith.addf %199, %200 : vector<2x32xf32>
    %cst_87 = arith.constant dense<0.000000e+00> : vector<2x32xf32>
    %202 = tpu.matmul %188, %3, %cst_87 {dimension_numbers = #tpu.dot_dimension_numbers<[1], [0], [0], [1], [0, 0, 1, 1], [], []>} : vector<2x32xf32>, vector<32x32xf32>, vector<2x32xf32> -> vector<2x32xf32>
    %203 = vector.broadcast %9 : vector<1x32xf32> to vector<2x32xf32>
    %204 = arith.addf %202, %203 : vector<2x32xf32>
    %cst_88 = arith.constant dense<0.000000e+00> : vector<2x32xf32>
    %205 = tpu.matmul %188, %5, %cst_88 {dimension_numbers = #tpu.dot_dimension_numbers<[1], [0], [0], [1], [0, 0, 1, 1], [], []>} : vector<2x32xf32>, vector<32x32xf32>, vector<2x32xf32> -> vector<2x32xf32>
    %206 = vector.broadcast %11 : vector<1x32xf32> to vector<2x32xf32>
    %207 = arith.addf %205, %206 : vector<2x32xf32>
    %208 = vector.extract_strided_slice %198 {offsets = [0, 0, 0], sizes = [1, 2, 32], strides = [1, 1, 1]} : vector<3x2x32xf32> to vector<1x2x32xf32>
    %209 = vector.shape_cast %208 : vector<1x2x32xf32> to vector<2x32xf32>
    %210 = arith.addf %209, %201 : vector<2x32xf32>
    %211 = arith.negf %210 : vector<2x32xf32>
    %212 = math.exp %211 : vector<2x32xf32>
    %cst_89 = arith.constant 1.000000e+00 : f32
    %213 = vector.broadcast %cst_89 : f32 to vector<2x32xf32>
    %214 = arith.addf %213, %212 : vector<2x32xf32>
    %215 = arith.divf %213, %214 : vector<2x32xf32>
    %216 = vector.extract_strided_slice %198 {offsets = [1, 0, 0], sizes = [1, 2, 32], strides = [1, 1, 1]} : vector<3x2x32xf32> to vector<1x2x32xf32>
    %217 = vector.shape_cast %216 : vector<1x2x32xf32> to vector<2x32xf32>
    %218 = arith.addf %217, %204 : vector<2x32xf32>
    %219 = arith.negf %218 : vector<2x32xf32>
    %220 = math.exp %219 : vector<2x32xf32>
    %cst_90 = arith.constant 1.000000e+00 : f32
    %221 = vector.broadcast %cst_90 : f32 to vector<2x32xf32>
    %222 = arith.addf %221, %220 : vector<2x32xf32>
    %223 = arith.divf %221, %222 : vector<2x32xf32>
    %224 = vector.extract_strided_slice %198 {offsets = [2, 0, 0], sizes = [1, 2, 32], strides = [1, 1, 1]} : vector<3x2x32xf32> to vector<1x2x32xf32>
    %225 = vector.shape_cast %224 : vector<1x2x32xf32> to vector<2x32xf32>
    %226 = arith.mulf %215, %207 : vector<2x32xf32>
    %227 = arith.addf %225, %226 : vector<2x32xf32>
    %228 = math.tanh %227 : vector<2x32xf32>
    %cst_91 = arith.constant 1.000000e+00 : f32
    %229 = vector.broadcast %cst_91 : f32 to vector<2x32xf32>
    %230 = arith.subf %229, %223 : vector<2x32xf32>
    %231 = arith.mulf %230, %228 : vector<2x32xf32>
    %232 = arith.mulf %223, %188 : vector<2x32xf32>
    %233 = arith.addf %231, %232 : vector<2x32xf32>
    %c0_92 = arith.constant 0 : index
    %234 = arith.index_cast %195 : i32 to index
    %c0_93 = arith.constant 0 : index
    %c0_94 = arith.constant 0 : index
    %235 = vector.load %arg4[%c0_92, %234, %c0_93, %c0_94] : memref<1x8x2x32xf32, #tpu.memory_space<vmem>>, vector<1x1x2x32xf32>
    %236 = vector.shape_cast %235 : vector<1x1x2x32xf32> to vector<2x32xf32>
    %237 = vector.shape_cast %233 : vector<2x32xf32> to vector<1x1x2x32xf32>
    tpu.vector_store %arg4[%c0_92, %234, %c0_93, %c0_94], %237 {strides = array<i32>} : memref<1x8x2x32xf32, #tpu.memory_space<vmem>>, vector<1x1x2x32xf32>,
    %c5_i32 = arith.constant 5 : i32
    %c0_i32_95 = arith.constant 0 : i32
    %238 = arith.cmpi eq, %arg0, %c0_i32_95 : i32
    %c7_i32_96 = arith.constant 7 : i32
    %239 = arith.subi %c7_i32_96, %c5_i32 : i32
    %240 = arith.select %238, %c5_i32, %239 : i32
    %c0_97 = arith.constant 0 : index
    %241 = arith.index_cast %240 : i32 to index
    %c0_98 = arith.constant 0 : index
    %c0_99 = arith.constant 0 : index
    %c0_100 = arith.constant 0 : index
    %242 = vector.load %arg1[%c0_97, %241, %c0_98, %c0_99, %c0_100] : memref<1x8x3x2x32xf32, #tpu.memory_space<vmem>>, vector<1x1x3x2x32xf32>
    %243 = vector.shape_cast %242 : vector<1x1x3x2x32xf32> to vector<3x2x32xf32>
    %cst_101 = arith.constant dense<0.000000e+00> : vector<2x32xf32>
    %244 = tpu.matmul %233, %1, %cst_101 {dimension_numbers = #tpu.dot_dimension_numbers<[1], [0], [0], [1], [0, 0, 1, 1], [], []>} : vector<2x32xf32>, vector<32x32xf32>, vector<2x32xf32> -> vector<2x32xf32>
    %245 = vector.broadcast %7 : vector<1x32xf32> to vector<2x32xf32>
    %246 = arith.addf %244, %245 : vector<2x32xf32>
    %cst_102 = arith.constant dense<0.000000e+00> : vector<2x32xf32>
    %247 = tpu.matmul %233, %3, %cst_102 {dimension_numbers = #tpu.dot_dimension_numbers<[1], [0], [0], [1], [0, 0, 1, 1], [], []>} : vector<2x32xf32>, vector<32x32xf32>, vector<2x32xf32> -> vector<2x32xf32>
    %248 = vector.broadcast %9 : vector<1x32xf32> to vector<2x32xf32>
    %249 = arith.addf %247, %248 : vector<2x32xf32>
    %cst_103 = arith.constant dense<0.000000e+00> : vector<2x32xf32>
    %250 = tpu.matmul %233, %5, %cst_103 {dimension_numbers = #tpu.dot_dimension_numbers<[1], [0], [0], [1], [0, 0, 1, 1], [], []>} : vector<2x32xf32>, vector<32x32xf32>, vector<2x32xf32> -> vector<2x32xf32>
    %251 = vector.broadcast %11 : vector<1x32xf32> to vector<2x32xf32>
    %252 = arith.addf %250, %251 : vector<2x32xf32>
    %253 = vector.extract_strided_slice %243 {offsets = [0, 0, 0], sizes = [1, 2, 32], strides = [1, 1, 1]} : vector<3x2x32xf32> to vector<1x2x32xf32>
    %254 = vector.shape_cast %253 : vector<1x2x32xf32> to vector<2x32xf32>
    %255 = arith.addf %254, %246 : vector<2x32xf32>
    %256 = arith.negf %255 : vector<2x32xf32>
    %257 = math.exp %256 : vector<2x32xf32>
    %cst_104 = arith.constant 1.000000e+00 : f32
    %258 = vector.broadcast %cst_104 : f32 to vector<2x32xf32>
    %259 = arith.addf %258, %257 : vector<2x32xf32>
    %260 = arith.divf %258, %259 : vector<2x32xf32>
    %261 = vector.extract_strided_slice %243 {offsets = [1, 0, 0], sizes = [1, 2, 32], strides = [1, 1, 1]} : vector<3x2x32xf32> to vector<1x2x32xf32>
    %262 = vector.shape_cast %261 : vector<1x2x32xf32> to vector<2x32xf32>
    %263 = arith.addf %262, %249 : vector<2x32xf32>
    %264 = arith.negf %263 : vector<2x32xf32>
    %265 = math.exp %264 : vector<2x32xf32>
    %cst_105 = arith.constant 1.000000e+00 : f32
    %266 = vector.broadcast %cst_105 : f32 to vector<2x32xf32>
    %267 = arith.addf %266, %265 : vector<2x32xf32>
    %268 = arith.divf %266, %267 : vector<2x32xf32>
    %269 = vector.extract_strided_slice %243 {offsets = [2, 0, 0], sizes = [1, 2, 32], strides = [1, 1, 1]} : vector<3x2x32xf32> to vector<1x2x32xf32>
    %270 = vector.shape_cast %269 : vector<1x2x32xf32> to vector<2x32xf32>
    %271 = arith.mulf %260, %252 : vector<2x32xf32>
    %272 = arith.addf %270, %271 : vector<2x32xf32>
    %273 = math.tanh %272 : vector<2x32xf32>
    %cst_106 = arith.constant 1.000000e+00 : f32
    %274 = vector.broadcast %cst_106 : f32 to vector<2x32xf32>
    %275 = arith.subf %274, %268 : vector<2x32xf32>
    %276 = arith.mulf %275, %273 : vector<2x32xf32>
    %277 = arith.mulf %268, %233 : vector<2x32xf32>
    %278 = arith.addf %276, %277 : vector<2x32xf32>
    %c0_107 = arith.constant 0 : index
    %279 = arith.index_cast %240 : i32 to index
    %c0_108 = arith.constant 0 : index
    %c0_109 = arith.constant 0 : index
    %280 = vector.load %arg4[%c0_107, %279, %c0_108, %c0_109] : memref<1x8x2x32xf32, #tpu.memory_space<vmem>>, vector<1x1x2x32xf32>
    %281 = vector.shape_cast %280 : vector<1x1x2x32xf32> to vector<2x32xf32>
    %282 = vector.shape_cast %278 : vector<2x32xf32> to vector<1x1x2x32xf32>
    tpu.vector_store %arg4[%c0_107, %279, %c0_108, %c0_109], %282 {strides = array<i32>} : memref<1x8x2x32xf32, #tpu.memory_space<vmem>>, vector<1x1x2x32xf32>,
    %c6_i32 = arith.constant 6 : i32
    %c0_i32_110 = arith.constant 0 : i32
    %283 = arith.cmpi eq, %arg0, %c0_i32_110 : i32
    %c7_i32_111 = arith.constant 7 : i32
    %284 = arith.subi %c7_i32_111, %c6_i32 : i32
    %285 = arith.select %283, %c6_i32, %284 : i32
    %c0_112 = arith.constant 0 : index
    %286 = arith.index_cast %285 : i32 to index
    %c0_113 = arith.constant 0 : index
    %c0_114 = arith.constant 0 : index
    %c0_115 = arith.constant 0 : index
    %287 = vector.load %arg1[%c0_112, %286, %c0_113, %c0_114, %c0_115] : memref<1x8x3x2x32xf32, #tpu.memory_space<vmem>>, vector<1x1x3x2x32xf32>
    %288 = vector.shape_cast %287 : vector<1x1x3x2x32xf32> to vector<3x2x32xf32>
    %cst_116 = arith.constant dense<0.000000e+00> : vector<2x32xf32>
    %289 = tpu.matmul %278, %1, %cst_116 {dimension_numbers = #tpu.dot_dimension_numbers<[1], [0], [0], [1], [0, 0, 1, 1], [], []>} : vector<2x32xf32>, vector<32x32xf32>, vector<2x32xf32> -> vector<2x32xf32>
    %290 = vector.broadcast %7 : vector<1x32xf32> to vector<2x32xf32>
    %291 = arith.addf %289, %290 : vector<2x32xf32>
    %cst_117 = arith.constant dense<0.000000e+00> : vector<2x32xf32>
    %292 = tpu.matmul %278, %3, %cst_117 {dimension_numbers = #tpu.dot_dimension_numbers<[1], [0], [0], [1], [0, 0, 1, 1], [], []>} : vector<2x32xf32>, vector<32x32xf32>, vector<2x32xf32> -> vector<2x32xf32>
    %293 = vector.broadcast %9 : vector<1x32xf32> to vector<2x32xf32>
    %294 = arith.addf %292, %293 : vector<2x32xf32>
    %cst_118 = arith.constant dense<0.000000e+00> : vector<2x32xf32>
    %295 = tpu.matmul %278, %5, %cst_118 {dimension_numbers = #tpu.dot_dimension_numbers<[1], [0], [0], [1], [0, 0, 1, 1], [], []>} : vector<2x32xf32>, vector<32x32xf32>, vector<2x32xf32> -> vector<2x32xf32>
    %296 = vector.broadcast %11 : vector<1x32xf32> to vector<2x32xf32>
    %297 = arith.addf %295, %296 : vector<2x32xf32>
    %298 = vector.extract_strided_slice %288 {offsets = [0, 0, 0], sizes = [1, 2, 32], strides = [1, 1, 1]} : vector<3x2x32xf32> to vector<1x2x32xf32>
    %299 = vector.shape_cast %298 : vector<1x2x32xf32> to vector<2x32xf32>
    %300 = arith.addf %299, %291 : vector<2x32xf32>
    %301 = arith.negf %300 : vector<2x32xf32>
    %302 = math.exp %301 : vector<2x32xf32>
    %cst_119 = arith.constant 1.000000e+00 : f32
    %303 = vector.broadcast %cst_119 : f32 to vector<2x32xf32>
    %304 = arith.addf %303, %302 : vector<2x32xf32>
    %305 = arith.divf %303, %304 : vector<2x32xf32>
    %306 = vector.extract_strided_slice %288 {offsets = [1, 0, 0], sizes = [1, 2, 32], strides = [1, 1, 1]} : vector<3x2x32xf32> to vector<1x2x32xf32>
    %307 = vector.shape_cast %306 : vector<1x2x32xf32> to vector<2x32xf32>
    %308 = arith.addf %307, %294 : vector<2x32xf32>
    %309 = arith.negf %308 : vector<2x32xf32>
    %310 = math.exp %309 : vector<2x32xf32>
    %cst_120 = arith.constant 1.000000e+00 : f32
    %311 = vector.broadcast %cst_120 : f32 to vector<2x32xf32>
    %312 = arith.addf %311, %310 : vector<2x32xf32>
    %313 = arith.divf %311, %312 : vector<2x32xf32>
    %314 = vector.extract_strided_slice %288 {offsets = [2, 0, 0], sizes = [1, 2, 32], strides = [1, 1, 1]} : vector<3x2x32xf32> to vector<1x2x32xf32>
    %315 = vector.shape_cast %314 : vector<1x2x32xf32> to vector<2x32xf32>
    %316 = arith.mulf %305, %297 : vector<2x32xf32>
    %317 = arith.addf %315, %316 : vector<2x32xf32>
    %318 = math.tanh %317 : vector<2x32xf32>
    %cst_121 = arith.constant 1.000000e+00 : f32
    %319 = vector.broadcast %cst_121 : f32 to vector<2x32xf32>
    %320 = arith.subf %319, %313 : vector<2x32xf32>
    %321 = arith.mulf %320, %318 : vector<2x32xf32>
    %322 = arith.mulf %313, %278 : vector<2x32xf32>
    %323 = arith.addf %321, %322 : vector<2x32xf32>
    %c0_122 = arith.constant 0 : index
    %324 = arith.index_cast %285 : i32 to index
    %c0_123 = arith.constant 0 : index
    %c0_124 = arith.constant 0 : index
    %325 = vector.load %arg4[%c0_122, %324, %c0_123, %c0_124] : memref<1x8x2x32xf32, #tpu.memory_space<vmem>>, vector<1x1x2x32xf32>
    %326 = vector.shape_cast %325 : vector<1x1x2x32xf32> to vector<2x32xf32>
    %327 = vector.shape_cast %323 : vector<2x32xf32> to vector<1x1x2x32xf32>
    tpu.vector_store %arg4[%c0_122, %324, %c0_123, %c0_124], %327 {strides = array<i32>} : memref<1x8x2x32xf32, #tpu.memory_space<vmem>>, vector<1x1x2x32xf32>,
    %c7_i32_125 = arith.constant 7 : i32
    %c0_i32_126 = arith.constant 0 : i32
    %328 = arith.cmpi eq, %arg0, %c0_i32_126 : i32
    %c7_i32_127 = arith.constant 7 : i32
    %329 = arith.subi %c7_i32_127, %c7_i32_125 : i32
    %330 = arith.select %328, %c7_i32_125, %329 : i32
    %c0_128 = arith.constant 0 : index
    %331 = arith.index_cast %330 : i32 to index
    %c0_129 = arith.constant 0 : index
    %c0_130 = arith.constant 0 : index
    %c0_131 = arith.constant 0 : index
    %332 = vector.load %arg1[%c0_128, %331, %c0_129, %c0_130, %c0_131] : memref<1x8x3x2x32xf32, #tpu.memory_space<vmem>>, vector<1x1x3x2x32xf32>
    %333 = vector.shape_cast %332 : vector<1x1x3x2x32xf32> to vector<3x2x32xf32>
    %cst_132 = arith.constant dense<0.000000e+00> : vector<2x32xf32>
    %334 = tpu.matmul %323, %1, %cst_132 {dimension_numbers = #tpu.dot_dimension_numbers<[1], [0], [0], [1], [0, 0, 1, 1], [], []>} : vector<2x32xf32>, vector<32x32xf32>, vector<2x32xf32> -> vector<2x32xf32>
    %335 = vector.broadcast %7 : vector<1x32xf32> to vector<2x32xf32>
    %336 = arith.addf %334, %335 : vector<2x32xf32>
    %cst_133 = arith.constant dense<0.000000e+00> : vector<2x32xf32>
    %337 = tpu.matmul %323, %3, %cst_133 {dimension_numbers = #tpu.dot_dimension_numbers<[1], [0], [0], [1], [0, 0, 1, 1], [], []>} : vector<2x32xf32>, vector<32x32xf32>, vector<2x32xf32> -> vector<2x32xf32>
    %338 = vector.broadcast %9 : vector<1x32xf32> to vector<2x32xf32>
    %339 = arith.addf %337, %338 : vector<2x32xf32>
    %cst_134 = arith.constant dense<0.000000e+00> : vector<2x32xf32>
    %340 = tpu.matmul %323, %5, %cst_134 {dimension_numbers = #tpu.dot_dimension_numbers<[1], [0], [0], [1], [0, 0, 1, 1], [], []>} : vector<2x32xf32>, vector<32x32xf32>, vector<2x32xf32> -> vector<2x32xf32>
    %341 = vector.broadcast %11 : vector<1x32xf32> to vector<2x32xf32>
    %342 = arith.addf %340, %341 : vector<2x32xf32>
    %343 = vector.extract_strided_slice %333 {offsets = [0, 0, 0], sizes = [1, 2, 32], strides = [1, 1, 1]} : vector<3x2x32xf32> to vector<1x2x32xf32>
    %344 = vector.shape_cast %343 : vector<1x2x32xf32> to vector<2x32xf32>
    %345 = arith.addf %344, %336 : vector<2x32xf32>
    %346 = arith.negf %345 : vector<2x32xf32>
    %347 = math.exp %346 : vector<2x32xf32>
    %cst_135 = arith.constant 1.000000e+00 : f32
    %348 = vector.broadcast %cst_135 : f32 to vector<2x32xf32>
    %349 = arith.addf %348, %347 : vector<2x32xf32>
    %350 = arith.divf %348, %349 : vector<2x32xf32>
    %351 = vector.extract_strided_slice %333 {offsets = [1, 0, 0], sizes = [1, 2, 32], strides = [1, 1, 1]} : vector<3x2x32xf32> to vector<1x2x32xf32>
    %352 = vector.shape_cast %351 : vector<1x2x32xf32> to vector<2x32xf32>
    %353 = arith.addf %352, %339 : vector<2x32xf32>
    %354 = arith.negf %353 : vector<2x32xf32>
    %355 = math.exp %354 : vector<2x32xf32>
    %cst_136 = arith.constant 1.000000e+00 : f32
    %356 = vector.broadcast %cst_136 : f32 to vector<2x32xf32>
    %357 = arith.addf %356, %355 : vector<2x32xf32>
    %358 = arith.divf %356, %357 : vector<2x32xf32>
    %359 = vector.extract_strided_slice %333 {offsets = [2, 0, 0], sizes = [1, 2, 32], strides = [1, 1, 1]} : vector<3x2x32xf32> to vector<1x2x32xf32>
    %360 = vector.shape_cast %359 : vector<1x2x32xf32> to vector<2x32xf32>
    %361 = arith.mulf %350, %342 : vector<2x32xf32>
    %362 = arith.addf %360, %361 : vector<2x32xf32>
    %363 = math.tanh %362 : vector<2x32xf32>
    %cst_137 = arith.constant 1.000000e+00 : f32
    %364 = vector.broadcast %cst_137 : f32 to vector<2x32xf32>
    %365 = arith.subf %364, %358 : vector<2x32xf32>
    %366 = arith.mulf %365, %363 : vector<2x32xf32>
    %367 = arith.mulf %358, %323 : vector<2x32xf32>
    %368 = arith.addf %366, %367 : vector<2x32xf32>
    %c0_138 = arith.constant 0 : index
    %369 = arith.index_cast %330 : i32 to index
    %c0_139 = arith.constant 0 : index
    %c0_140 = arith.constant 0 : index
    %370 = vector.load %arg4[%c0_138, %369, %c0_139, %c0_140] : memref<1x8x2x32xf32, #tpu.memory_space<vmem>>, vector<1x1x2x32xf32>
    %371 = vector.shape_cast %370 : vector<1x1x2x32xf32> to vector<2x32xf32>
    %372 = vector.shape_cast %368 : vector<2x32xf32> to vector<1x1x2x32xf32>
    tpu.vector_store %arg4[%c0_138, %369, %c0_139, %c0_140], %372 {strides = array<i32>} : memref<1x8x2x32xf32, #tpu.memory_space<vmem>>, vector<1x1x2x32xf32>,
    %c8_i32 = arith.constant 8 : i32
    return
  }
  func.func @transform_0(%arg0: i32) -> (i32, i32, i32, i32, i32) {
    %c0_i32 = arith.constant 0 : i32
    %c0_i32_0 = arith.constant 0 : i32
    %c0_i32_1 = arith.constant 0 : i32
    %c0_i32_2 = arith.constant 0 : i32
    %c0_i32_3 = arith.constant 0 : i32
    return %arg0, %c0_i32, %c0_i32_0, %c0_i32_1, %c0_i32_2 : i32, i32, i32, i32, i32
  }
  func.func @transform_1(%arg0: i32) -> (i32, i32, i32, i32) {
    %c0_i32 = arith.constant 0 : i32
    %c0_i32_0 = arith.constant 0 : i32
    %c0_i32_1 = arith.constant 0 : i32
    %c0_i32_2 = arith.constant 0 : i32
    return %arg0, %c0_i32, %c0_i32_0, %c0_i32_1 : i32, i32, i32, i32
  }
  func.func @transform_2(%arg0: i32) -> (i32, i32, i32, i32) {
    %c0_i32 = arith.constant 0 : i32
    %c0_i32_0 = arith.constant 0 : i32
    %c0_i32_1 = arith.constant 0 : i32
    %c0_i32_2 = arith.constant 0 : i32
    return %arg0, %c0_i32, %c0_i32_0, %c0_i32_1 : i32, i32, i32, i32
  }
  func.func @transform_3(%arg0: i32) -> (i32, i32, i32, i32) {
    %c0_i32 = arith.constant 0 : i32
    %c0_i32_0 = arith.constant 0 : i32
    %c0_i32_1 = arith.constant 0 : i32
    %c0_i32_2 = arith.constant 0 : i32
    return %arg0, %c0_i32, %c0_i32_0, %c0_i32_1 : i32, i32, i32, i32
  }
}

module attributes {stable_mosaic.version = 11 : i64} {
  func.func @_fc_relu_kernel(%arg0: memref<2x64xf32, #tpu.memory_space<vmem>>, %arg1: memref<64x8xf32, #tpu.memory_space<vmem>>, %arg2: memref<1x8xf32, #tpu.memory_space<vmem>>, %arg3: memref<2x8xf32, #tpu.memory_space<vmem>>) attributes {dimension_semantics = [], scalar_prefetch = 0 : i64, scratch_operands = 0 : i64, tpu.core_type = #tpu.core_type<tc>} {
    %c0 = arith.constant 0 : index
    %c0_0 = arith.constant 0 : index
    %0 = vector.load %arg0[%c0, %c0_0] : memref<2x64xf32, #tpu.memory_space<vmem>>, vector<2x64xf32>
    %c0_1 = arith.constant 0 : index
    %c0_2 = arith.constant 0 : index
    %1 = vector.load %arg1[%c0_1, %c0_2] : memref<64x8xf32, #tpu.memory_space<vmem>>, vector<64x8xf32>
    %cst = arith.constant dense<0.000000e+00> : vector<2x8xf32>
    %2 = tpu.matmul %0, %1, %cst {dimension_numbers = #tpu.dot_dimension_numbers<[1], [0], [0], [1], [0, 0, 1, 1], [], []>} : vector<2x64xf32>, vector<64x8xf32>, vector<2x8xf32> -> vector<2x8xf32>
    %c0_3 = arith.constant 0 : index
    %c0_4 = arith.constant 0 : index
    %3 = vector.load %arg2[%c0_3, %c0_4] : memref<1x8xf32, #tpu.memory_space<vmem>>, vector<1x8xf32>
    %4 = vector.broadcast %3 : vector<1x8xf32> to vector<2x8xf32>
    %5 = arith.addf %2, %4 : vector<2x8xf32>
    %cst_5 = arith.constant 0.000000e+00 : f32
    %6 = vector.broadcast %cst_5 : f32 to vector<2x8xf32>
    %7 = arith.maximumf %5, %6 : vector<2x8xf32>
    %c0_6 = arith.constant 0 : index
    %c0_7 = arith.constant 0 : index
    %8 = vector.load %arg3[%c0_6, %c0_7] : memref<2x8xf32, #tpu.memory_space<vmem>>, vector<2x8xf32>
    tpu.vector_store %arg3[%c0_6, %c0_7], %7 {strides = array<i32>} : memref<2x8xf32, #tpu.memory_space<vmem>>, vector<2x8xf32>,
    return
  }
}

</mosaic_0001>

<llo_original>
// kernel: _lambda_.5
$region0: #{_lambda_.5}
  #allocation0 [shape = 'u32[]', space=smem, size = 0x4, offset = 0x4, fixed_abs, tag = 'smem constant byte address 0x4 - core index']
  #allocation1 [shape = 'u32[144,128]{1,0:T(1,128)}', space=vmem, size = 0x12000, scoped, tag = 'internal scratch']
  %s0 = inlined_call_operand.vmem [shape: f32[2,64], index: 0, kind: input, shape index: {}]
  %s1 = inlined_call_operand.vmem [shape: f32[64,8], index: 1, kind: input, shape index: {}]
  %s2 = inlined_call_operand.vmem [shape: f32[1,8], index: 2, kind: input, shape index: {}]
  %s3 = inlined_call_operand.hbm [shape: f32[2,8], index: 3, kind: output, shape index: {}]
  %s4 = sld [smem:[#allocation0]]
  $region22: #{_lambda_.5} parent=0
    _
  %s6 = ssub.s32 1, %s4
  %s7 = scalar_select 0, %s6, %s4
  $region1: #{_lambda_.5} parent=0
    #allocation2 [shape = 'u8[1024]{0}', space=vmem, size = 0x400, scoped, tag = 'output window, operand 0, single buffered']
    #allocation3 [shape = 's32[1]{0}', space=sflag, size = 0x4, scoped, tag = 'scoped memory for _lambda_.5']
    %8 = vsyncpa [#allocation3], 0
    // Predicated region
    $region2: #{_lambda_.5} parent=1 // pred_check
      _
    $region3: #{_lambda_.5} parent=1 // pred_check_branch
      %10 = sbr.rel (0) target = $region5
    $region4: #{_lambda_.5} parent=1 // pred_region
      _
    $region5: #{_lambda_.5} parent=1 // pred_fallthru
      _
    // Predicated region
    $region6: #{_lambda_.5} parent=1 // pred_check
      _
    $region7: #{_lambda_.5} parent=1 // pred_check_branch
      %12 = sbr.rel (0) target = $region9
    $region8: #{_lambda_.5} parent=1 // pred_region
      _
    $region9: #{_lambda_.5} parent=1 // pred_fallthru
      _
    // Predicated region
    $region10: #{_lambda_.5} parent=1 // pred_check
      _
    $region11: #{_lambda_.5} parent=1 // pred_check_branch
      %14 = sbr.rel (0) target = $region13
    $region12: #{_lambda_.5} parent=1 // pred_region
      _
    $region13: #{_lambda_.5} parent=1 // pred_fallthru
      _
    %v15 = vld [vmem:[%s0] sm:$0x3]
    %v16 = vld [vmem:[%s1] sm:$0xff]
    %v17 = vld [vmem:[%s1 + $0x8] sm:$0xff]
    %v18 = vld [vmem:[%s1 + $0x10] sm:$0xff]
    %v19 = vld [vmem:[%s1 + $0x18] sm:$0xff]
    %v20 = vld [vmem:[%s1 + $0x20] sm:$0xff]
    %v21 = vld [vmem:[%s1 + $0x28] sm:$0xff]
    %v22 = vld [vmem:[%s1 + $0x30] sm:$0xff]
    %v23 = vld [vmem:[%s1 + $0x38] sm:$0xff]
    %v24 = vld [vmem:[%s2] sm:$0x1]
    %v26 = vlaneseq
    %v27 = vshrl.u32 %v26, 7
    %v28 = vsub.s32 0, %v27
    %v29 = vrot.slane %v24, %v28
    %vm31 = vcmask 523264
    %v33 = vsel %vm31, %v15, 0
    %35 = vmatprep.subr.mxu0 0.0
    %36 = vmatpush1.msra.mxu0 %v16
    %37 = vmatprep.subr.mxu0 0.0
    %38 = vmatpush1.msra.mxu0 %v17
    %39 = vmatprep.subr.mxu0 0.0
    %40 = vmatpush1.msra.mxu0 %v18
    %41 = vmatprep.subr.mxu0 0.0
    %42 = vmatpush1.msra.mxu0 %v19
    %43 = vmatprep.subr.mxu0 0.0
    %44 = vmatpush1.msra.mxu0 %v20
    %45 = vmatprep.subr.mxu0 0.0
    %46 = vmatpush1.msra.mxu0 %v21
    %47 = vmatprep.subr.mxu0 0.0
    %48 = vmatpush1.msra.mxu0 %v22
    %49 = vmatprep.subr.mxu0 0.0
    %50 = vmatpush1.msra.mxu0 %v23
    %51 = vmatprep.subr.mxu0 0.0
    %52 = vmatpush1.msra.mxu0 0.0
    %53 = vmatprep.subr.mxu0 0.0
    %54 = vmatpush1.msra.mxu0 0.0
    %55 = vmatprep.subr.mxu0 0.0
    %56 = vmatpush1.msra.mxu0 0.0
    %57 = vmatprep.subr.mxu0 0.0
    %58 = vmatpush1.msra.mxu0 0.0
    %59 = vmatprep.subr.mxu0 0.0
    %60 = vmatpush1.msra.mxu0 0.0
    %61 = vmatprep.subr.mxu0 0.0
    %62 = vmatpush1.msra.mxu0 0.0
    %63 = vmatprep.subr.mxu0 0.0
    %64 = vmatpush1.msra.mxu0 0.0
    %65 = vmatprep.subr.mxu0 0.0
    %66 = vmatpush1.msra.mxu0 0.0
    %67 = vmatprep.subr.mxu0 0.0
    %68 = vmatpush1.msra.mxu0 0.0
    %69 = vmatprep.subr.mxu0 0.0
    %70 = vmatpush1.msra.mxu0 0.0
    %71 = vmatprep.subr.mxu0 0.0
    %72 = vmatpush1.msra.mxu0 0.0
    %73 = vmatprep.subr.mxu0 0.0
    %74 = vmatpush1.msra.mxu0 0.0
    %75 = vmatprep.subr.mxu0 0.0
    %76 = vmatpush1.msra.mxu0 0.0
    %77 = vmatprep.subr.mxu0 0.0
    %78 = vmatpush1.msra.mxu0 0.0
    %79 = vmatprep.subr.mxu0 0.0
    %80 = vmatpush1.msra.mxu0 0.0
    %81 = vmatprep.subr.mxu0 0.0
    %82 = vmatpush1.msra.mxu0 0.0
    %83 = vmatprep.subr.mxu0 0.0
    %84 = vmatpush1.msra.mxu0 0.0
    %85 = vmatprep.subr.mxu0 0.0
    %86 = vmatpush1.msra.mxu0 0.0
    %87 = vmatprep.subr.mxu0 0.0
    %88 = vmatpush1.msra.mxu0 0.0
    %89 = vmatprep.subr.mxu0 0.0
    %90 = vmatpush1.msra.mxu0 0.0
    %91 = vmatprep.subr.mxu0 0.0
    %92 = vmatpush1.msra.mxu0 0.0
    %93 = vmatprep.subr.mxu0 0.0
    %94 = vmatpush1.msra.mxu0 0.0
    %95 = vmatprep.subr.mxu0 0.0
    %96 = vmatpush1.msra.mxu0 0.0
    %97 = vmatprep.subr.mxu0 0.0
    %98 = vmatpush1.msra.mxu0 0.0
    %99 = vmatprep.mubr.f32.mxu0 0.0
    %100 = vmatmul.mubr.f32.gmra.mrb[0].mxu0 %v33
    %v101 = vpop.f32.mrb[0].mxu0
    %v102 = vadd.f32 %v29, %v101
    %v103 = vpop.f32.mrb[0].mxu0
    %104 = vdwg.mxu0
    %v105 = vmax.f32 %v102, 0.0
    %vm106 = vcmask 58368
    %107 = vst.msk [vmem:[#allocation2] sm:$0x3] %vm106, %v105
    // Predicated region
    $region14: #{_lambda_.5} parent=1 // pred_check
      _
    $region15: #{_lambda_.5} parent=1 // pred_check_branch
      %109 = sbr.rel (0) target = $region17
    $region16: #{_lambda_.5} parent=1 // pred_region
      %s111 = ssub.s32 32, 32
      %112 = vsyncadd [#allocation3], %s111
      %s114 = sshll.u32 [#allocation2], 4
      %s115 = int_to_ptr.vmem [resolvable:$true] %s114
      %117 = dma.vmem_to_hbm [thread:$0]  %s115, 32, %s3, [#allocation3]
    $region17: #{_lambda_.5} parent=1 // pred_fallthru
      _
    // Predicated region
    $region18: #{_lambda_.5} parent=1 // pred_check
      _
    $region19: #{_lambda_.5} parent=1 // pred_check_branch
      %119 = sbr.rel (0) target = $region21
    $region20: #{_lambda_.5} parent=1 // pred_region
      %120 = dma.done [#allocation3], 32
    $region21: #{_lambda_.5} parent=1 // pred_fallthru
      _
    %121 = vsyncpa [#allocation3], 1

// kernel: _lambda_.3
$region0: #{_lambda_.3}
  #allocation0 [shape = 'u32[]', space=smem, size = 0x4, offset = 0x4, fixed_abs, tag = 'smem constant byte address 0x4 - core index']
  #allocation1 [shape = 'u32[144,128]{1,0:T(1,128)}', space=vmem, size = 0x12000, scoped, tag = 'internal scratch']
  %s0 = inlined_call_operand.vmem [shape: f32[2,8,3,2,32], index: 0, kind: input, shape index: {}]
  %s1 = inlined_call_operand.vmem [shape: f32[2,3,32,32], index: 1, kind: input, shape index: {}]
  %s2 = inlined_call_operand.vmem [shape: f32[2,3,1,32], index: 2, kind: input, shape index: {}]
  %s3 = inlined_call_operand.vmem [shape: f32[2,8,2,32], index: 3, kind: output, shape index: {}]
  %s4 = sld [smem:[#allocation0]]
  $region45: #{_lambda_.3} parent=0
    _
  %s6 = ssub.s32 1, %s4
  %s7 = scalar_select 0, %s6, %s4
  loop: start=0, step=1, limit=4
  $region2: #{_lambda_.3} parent=0 // loop_pre_header
    _
  $region3: #{_lambda_.3} parent=0 // loop_header
    %s9 = sphi 0, %s13
    %p10 = scmp.ge.s32.totalorder %s9, 4
    %s19 = sphi 0, %s21
    %s22 = sphi 0, %s19
    %s23 = sphi 0, %s22
    %s39 = sphi 0, %s23
    %s45 = sphi 0, %s47
    %s48 = sphi 0, %s45
    %s49 = sphi 0, %s48
    %s65 = sphi 0, %s49
    %s71 = sphi 0, %s73
    %s74 = sphi 0, %s71
    %s75 = sphi 0, %s74
    %s91 = sphi 0, %s75
    %s97 = sphi 0, %s99
    %s100 = sphi 0, %s97
    %s101 = sphi 0, %s100
    %s117 = sphi 0, %s101
  $region4: #{_lambda_.3} parent=0 // loop_header_branch
    %12 = sbr.rel (%p10) target = $region8
  $region5: #{_lambda_.3} parent=0 // loop_body
    %s14 = ssub.s32 %s9, 1
    %s15 = ssub.s32 %s9, 2
    %s16 = sadd.s32 %s9, 1
    %s17 = ssub.s32 %s9, %s16
    %p18 = scmp.eq.s32.totalorder %s17, 0
    %s20 = sadd.s32 %s19, 1
    %s21 = scalar_select %p18, %s19, %s20
    %p24 = pneg %p18
    %p25 = scmp.eq.s32.totalorder %s9, 1
    %p26 = por %p24, %p25
    %p27 = scmp.ne.s32.totalorder %s19, %s22
    %p28 = scmp.eq.s32.totalorder %s9, 0
    %p29 = por %p27, %p28
    %p30 = scmp.ne.s32.totalorder %s19, %s22
    %p31 = scmp.eq.s32.totalorder %s14, 1
    %p32 = por %p30, %p31
    %p33 = scmp.ne.s32.totalorder %s22, %s23
    %p34 = scmp.eq.s32.totalorder %s14, 0
    %p35 = por %p33, %p34
    %p36 = scmp.ne.s32.totalorder %s22, %s23
    %p37 = scmp.eq.s32.totalorder %s15, 1
    %p38 = por %p36, %p37
    %p40 = scmp.ne.s32.totalorder %s23, %s39
    %p41 = scmp.eq.s32.totalorder %s15, 0
    %p42 = por %p40, %p41
    %s43 = ssub.s32 %s9, %s16
    %p44 = scmp.eq.s32.totalorder %s43, 0
    %s46 = sadd.s32 %s45, 1
    %s47 = scalar_select %p44, %s45, %s46
    %p50 = pneg %p44
    %p51 = scmp.eq.s32.totalorder %s9, 1
    %p52 = por %p50, %p51
    %p53 = scmp.ne.s32.totalorder %s45, %s48
    %p54 = scmp.eq.s32.totalorder %s9, 0
    %p55 = por %p53, %p54
    %p56 = scmp.ne.s32.totalorder %s45, %s48
    %p57 = scmp.eq.s32.totalorder %s14, 1
    %p58 = por %p56, %p57
    %p59 = scmp.ne.s32.totalorder %s48, %s49
    %p60 = scmp.eq.s32.totalorder %s14, 0
    %p61 = por %p59, %p60
    %p62 = scmp.ne.s32.totalorder %s48, %s49
    %p63 = scmp.eq.s32.totalorder %s15, 1
    %p64 = por %p62, %p63
    %p66 = scmp.ne.s32.totalorder %s49, %s65
    %p67 = scmp.eq.s32.totalorder %s15, 0
    %p68 = por %p66, %p67
    %s69 = ssub.s32 %s9, %s16
    %p70 = scmp.eq.s32.totalorder %s69, 0
    %s72 = sadd.s32 %s71, 1
    %s73 = scalar_select %p70, %s71, %s72
    %p76 = pneg %p70
    %p77 = scmp.eq.s32.totalorder %s9, 1
    %p78 = por %p76, %p77
    %p79 = scmp.ne.s32.totalorder %s71, %s74
    %p80 = scmp.eq.s32.totalorder %s9, 0
    %p81 = por %p79, %p80
    %p82 = scmp.ne.s32.totalorder %s71, %s74
    %p83 = scmp.eq.s32.totalorder %s14, 1
    %p84 = por %p82, %p83
    %p85 = scmp.ne.s32.totalorder %s74, %s75
    %p86 = scmp.eq.s32.totalorder %s14, 0
    %p87 = por %p85, %p86
    %p88 = scmp.ne.s32.totalorder %s74, %s75
    %p89 = scmp.eq.s32.totalorder %s15, 1
    %p90 = por %p88, %p89
    %p92 = scmp.ne.s32.totalorder %s75, %s91
    %p93 = scmp.eq.s32.totalorder %s15, 0
    %p94 = por %p92, %p93
    %s95 = ssub.s32 %s9, %s16
    %p96 = scmp.eq.s32.totalorder %s95, 0
    %s98 = sadd.s32 %s97, 1
    %s99 = scalar_select %p96, %s97, %s98
    %p102 = pneg %p96
    %p103 = scmp.eq.s32.totalorder %s9, 1
    %p104 = por %p102, %p103
    %p105 = scmp.ne.s32.totalorder %s97, %s100
    %p106 = scmp.eq.s32.totalorder %s9, 0
    %p107 = por %p105, %p106
    %p108 = scmp.ne.s32.totalorder %s97, %s100
    %p109 = scmp.eq.s32.totalorder %s14, 1
    %p110 = por %p108, %p109
    %p111 = scmp.ne.s32.totalorder %s100, %s101
    %p112 = scmp.eq.s32.totalorder %s14, 0
    %p113 = por %p111, %p112
    %p114 = scmp.ne.s32.totalorder %s100, %s101
    %p115 = scmp.eq.s32.totalorder %s15, 1
    %p116 = por %p114, %p115
    %p118 = scmp.ne.s32.totalorder %s101, %s117
    %p119 = scmp.eq.s32.totalorder %s15, 0
    %p120 = por %p118, %p119
    %p121 = scmp.le.s32.totalorder 1, %s9
    %p122 = scmp.lt.s32.totalorder %s9, 3
    %p123 = pnand %p121, %p122
    %p124 = pneg %p123
    // Predicated region
    $region9: #{_lambda_.3} parent=5 // pred_check
      _
    $region10: #{_lambda_.3} parent=5 // pred_check_branch
      %126 = sbr.rel (%p123) target = $region12
    $region11: #{_lambda_.3} parent=5 // pred_region
      %s127 = ssub.s32 %s9, 1
    $region12: #{_lambda_.3} parent=5 // pred_fallthru
      _
    %p128 = scmp.lt.s32.totalorder %s9, 2
    // Predicated region
    $region13: #{_lambda_.3} parent=5 // pred_check
      %p129 = pneg %p128
    $region14: #{_lambda_.3} parent=5 // pred_check_branch
      %131 = sbr.rel (%p129) target = $region16
    $region15: #{_lambda_.3} parent=5 // pred_region
      // Predicated region
      $region17: #{_lambda_.3} parent=15 // pred_check
        %p132 = pneg %p29
      $region18: #{_lambda_.3} parent=15 // pred_check_branch
        %134 = sbr.rel (%p132) target = $region20
      $region19: #{_lambda_.3} parent=15 // pred_region
        %p135 = scmp.lt.s32.totalorder %s9, 1
        %s136 = scalar_select %p135, %s9, 1
        %s137 = smul.addr %s136, 24
        %s138 = smul.addr %s137, 2
        %s139 = scalar_lea.vmem %s0, %s138
      $region20: #{_lambda_.3} parent=15 // pred_fallthru
        _
      // Predicated region
      $region21: #{_lambda_.3} parent=15 // pred_check
        %p140 = pneg %p55
      $region22: #{_lambda_.3} parent=15 // pred_check_branch
        %142 = sbr.rel (%p140) target = $region24
      $region23: #{_lambda_.3} parent=15 // pred_region
        %p143 = scmp.lt.s32.totalorder %s9, 1
        %s144 = scalar_select %p143, %s9, 1
        %s145 = smul.addr %s144, 12
        %s146 = smul.addr %s145, 8
        %s147 = scalar_lea.vmem %s1, %s146
      $region24: #{_lambda_.3} parent=15 // pred_fallthru
        _
      // Predicated region
      $region25: #{_lambda_.3} parent=15 // pred_check
        %p148 = pneg %p81
      $region26: #{_lambda_.3} parent=15 // pred_check_branch
        %150 = sbr.rel (%p148) target = $region28
      $region27: #{_lambda_.3} parent=15 // pred_region
        %p151 = scmp.lt.s32.totalorder %s9, 1
        %s152 = scalar_select %p151, %s9, 1
        %s153 = smul.addr %s152, 3
        %s154 = scalar_lea.vmem %s2, %s153
      $region28: #{_lambda_.3} parent=15 // pred_fallthru
        _
    $region16: #{_lambda_.3} parent=5 // pred_fallthru
      _
    %p155 = scmp.le.s32.totalorder 1, %s9
    %p156 = scmp.lt.s32.totalorder %s9, 3
    %p157 = pnand %p155, %p156
    %p158 = pneg %p157
    // Predicated region
    $region29: #{_lambda_.3} parent=5 // pred_check
      _
    $region30: #{_lambda_.3} parent=5 // pred_check_branch
      %160 = sbr.rel (%p157) target = $region32
    $region31: #{_lambda_.3} parent=5 // pred_region
      %s161 = ssub.s32 %s9, 1
      %p162 = scmp.lt.s32.totalorder %s14, 1
      %s163 = scalar_select %p162, %s14, 1
      %s164 = smul.addr %s163, 24
      %s165 = smul.addr %s164, 2
      %s166 = scalar_lea.vmem %s0, %s165
      %p167 = pneg %p35
      %p168 = pneg %p32
      %p169 = scmp.lt.s32.totalorder %s14, 1
      %s170 = scalar_select %p169, %s14, 1
      %s171 = smul.addr %s170, 12
      %s172 = smul.addr %s171, 8
      %s173 = scalar_lea.vmem %s1, %s172
      %p174 = pneg %p61
      %p175 = pneg %p58
      %p176 = scmp.lt.s32.totalorder %s14, 1
      %s177 = scalar_select %p176, %s14, 1
      %s178 = smul.addr %s177, 3
      %s179 = scalar_lea.vmem %s2, %s178
      %p180 = pneg %p87
      %p181 = pneg %p84
      %p182 = pneg %p113
      %p183 = pneg %p110
      %p184 = scmp.lt.s32.totalorder %s14, 1
      %s185 = scalar_select %p184, %s14, 1
      %s186 = smul.addr %s185, 8
      %s187 = smul.addr %s186, 2
      %s188 = scalar_lea.vmem %s3, %s187
      %p189 = scmp.lt.s32.totalorder %s14, 1
      %s190 = scalar_select %p189, %s14, 1
      %s191 = smul.addr %s190, 24
      %s192 = smul.addr %s191, 2
      %s193 = scalar_lea.vmem %s0, %s192
      %p194 = scmp.lt.s32.totalorder %s14, 1
      %s195 = scalar_select %p194, %s14, 1
      %s196 = smul.addr %s195, 12
      %s197 = smul.addr %s196, 8
      %s198 = scalar_lea.vmem %s1, %s197
      %p199 = scmp.lt.s32.totalorder %s14, 1
      %s200 = scalar_select %p199, %s14, 1
      %s201 = smul.addr %s200, 3
      %s202 = scalar_lea.vmem %s2, %s201
      %p203 = scmp.lt.s32.totalorder %s14, 1
      %s204 = scalar_select %p203, %s14, 1
      %s205 = smul.addr %s204, 8
      %s206 = smul.addr %s205, 2
      %s207 = scalar_lea.vmem %s3, %s206
      %v208 = vld [vmem:[%s198] sm:$0xff]
      %v209 = vld [vmem:[%s198 + $0x8] sm:$0xff]
      %v210 = vld [vmem:[%s198 + $0x10] sm:$0xff]
      %v211 = vld [vmem:[%s198 + $0x18] sm:$0xff]
      %s212 = scalar_lea.vmem %s198, 32
      %v213 = vld [vmem:[%s212] sm:$0xff]
      %v214 = vld [vmem:[%s212 + $0x8] sm:$0xff]
      %v215 = vld [vmem:[%s212 + $0x10] sm:$0xff]
      %v216 = vld [vmem:[%s212 + $0x18] sm:$0xff]
      %s217 = scalar_lea.vmem %s198, 64
      %v218 = vld [vmem:[%s217] sm:$0xff]
      %v219 = vld [vmem:[%s217 + $0x8] sm:$0xff]
      %v220 = vld [vmem:[%s217 + $0x10] sm:$0xff]
      %v221 = vld [vmem:[%s217 + $0x18] sm:$0xff]
      %v222 = vld [vmem:[%s202] sm:$0x1]
      %s223 = scalar_lea.vmem %s202, 1
      %v224 = vld [vmem:[%s223] sm:$0x1]
      %s225 = scalar_lea.vmem %s202, 2
      %v226 = vld [vmem:[%s225] sm:$0x1]
      %p227 = scmp.eq.s32.totalorder %s14, 0
      %s228 = scalar_select %p227, 0, 7
      %s229 = smul.u32 %s228, 6
      %s230 = scalar_lea.vmem %s193, %s229
      %v231 = vld [vmem:[%s230] sm:$0x3]
      %v232 = vld [vmem:[%s230 + $0x2] sm:$0x3]
      %v233 = vld [vmem:[%s230 + $0x4] sm:$0x3]
      %v235 = vlaneseq
      %v236 = vshrl.u32 %v235, 7
      %v237 = vsub.s32 0, %v236
      %v238 = vrot.slane %v222, %v237
      %vm240 = vcmask 261120
      %v242 = vsel %vm240, 0.0, 0
      %244 = vmatprep.subr.mxu0 0.0
      %245 = vmatpush1.msra.mxu0 %v208
      %246 = vmatprep.subr.mxu0 0.0
      %247 = vmatpush1.msra.mxu0 %v209
      %248 = vmatprep.subr.mxu0 0.0
      %249 = vmatpush1.msra.mxu0 %v210
      %250 = vmatprep.subr.mxu0 0.0
      %251 = vmatpush1.msra.mxu0 %v211
      %252 = vmatprep.subr.mxu0 0.0
      %253 = vmatpush1.msra.mxu0 0.0
      %254 = vmatprep.subr.mxu0 0.0
      %255 = vmatpush1.msra.mxu0 0.0
      %256 = vmatprep.subr.mxu0 0.0
      %257 = vmatpush1.msra.mxu0 0.0
      %258 = vmatprep.subr.mxu0 0.0
      %259 = vmatpush1.msra.mxu0 0.0
      %260 = vmatprep.subr.mxu0 0.0
      %261 = vmatpush1.msra.mxu0 0.0
      %262 = vmatprep.subr.mxu0 0.0
      %263 = vmatpush1.msra.mxu0 0.0
      %264 = vmatprep.subr.mxu0 0.0
      %265 = vmatpush1.msra.mxu0 0.0
      %266 = vmatprep.subr.mxu0 0.0
      %267 = vmatpush1.msra.mxu0 0.0
      %268 = vmatprep.subr.mxu0 0.0
      %269 = vmatpush1.msra.mxu0 0.0
      %270 = vmatprep.subr.mxu0 0.0
      %271 = vmatpush1.msra.mxu0 0.0
      %272 = vmatprep.subr.mxu0 0.0
      %273 = vmatpush1.msra.mxu0 0.0
      %274 = vmatprep.subr.mxu0 0.0
      %275 = vmatpush1.msra.mxu0 0.0
      %276 = vmatprep.subr.mxu0 0.0
      %277 = vmatpush1.msra.mxu0 0.0
      %278 = vmatprep.subr.mxu0 0.0
      %279 = vmatpush1.msra.mxu0 0.0
      %280 = vmatprep.subr.mxu0 0.0
      %281 = vmatpush1.msra.mxu0 0.0
      %282 = vmatprep.subr.mxu0 0.0
      %283 = vmatpush1.msra.mxu0 0.0
      %284 = vmatprep.subr.mxu0 0.0
      %285 = vmatpush1.msra.mxu0 0.0
      %286 = vmatprep.subr.mxu0 0.0
      %287 = vmatpush1.msra.mxu0 0.0
      %288 = vmatprep.subr.mxu0 0.0
      %289 = vmatpush1.msra.mxu0 0.0
      %290 = vmatprep.subr.mxu0 0.0
      %291 = vmatpush1.msra.mxu0 0.0
      %292 = vmatprep.subr.mxu0 0.0
      %293 = vmatpush1.msra.mxu0 0.0
      %294 = vmatprep.subr.mxu0 0.0
      %295 = vmatpush1.msra.mxu0 0.0
      %296 = vmatprep.subr.mxu0 0.0
      %297 = vmatpush1.msra.mxu0 0.0
      %298 = vmatprep.subr.mxu0 0.0
      %299 = vmatpush1.msra.mxu0 0.0
      %300 = vmatprep.subr.mxu0 0.0
      %301 = vmatpush1.msra.mxu0 0.0
      %302 = vmatprep.subr.mxu0 0.0
      %303 = vmatpush1.msra.mxu0 0.0
      %304 = vmatprep.subr.mxu0 0.0
      %305 = vmatpush1.msra.mxu0 0.0
      %306 = vmatprep.subr.mxu0 0.0
      %307 = vmatpush1.msra.mxu0 0.0
      %308 = vmatprep.mubr.f32.mxu0 0.0
      %309 = vmatmul.mubr.f32.gmra.mrb[0].mxu0 %v242
      %v310 = vpop.f32.mrb[0].mxu0
      %v311 = vadd.f32 %v238, %v310
      %v312 = vpop.f32.mrb[0].mxu0
      %313 = vdwg.mxu0
      %v315 = vlaneseq
      %v316 = vshrl.u32 %v315, 7
      %v317 = vsub.s32 0, %v316
      %v318 = vrot.slane %v224, %v317
      %320 = vmatprep.subr.mxu0 0.0
      %321 = vmatpush1.msra.mxu0 %v213
      %322 = vmatprep.subr.mxu0 0.0
      %323 = vmatpush1.msra.mxu0 %v214
      %324 = vmatprep.subr.mxu0 0.0
      %325 = vmatpush1.msra.mxu0 %v215
      %326 = vmatprep.subr.mxu0 0.0
      %327 = vmatpush1.msra.mxu0 %v216
      %328 = vmatprep.subr.mxu0 0.0
      %329 = vmatpush1.msra.mxu0 0.0
      %330 = vmatprep.subr.mxu0 0.0
      %331 = vmatpush1.msra.mxu0 0.0
      %332 = vmatprep.subr.mxu0 0.0
      %333 = vmatpush1.msra.mxu0 0.0
      %334 = vmatprep.subr.mxu0 0.0
      %335 = vmatpush1.msra.mxu0 0.0
      %336 = vmatprep.subr.mxu0 0.0
      %337 = vmatpush1.msra.mxu0 0.0
      %338 = vmatprep.subr.mxu0 0.0
      %339 = vmatpush1.msra.mxu0 0.0
      %340 = vmatprep.subr.mxu0 0.0
      %341 = vmatpush1.msra.mxu0 0.0
      %342 = vmatprep.subr.mxu0 0.0
      %343 = vmatpush1.msra.mxu0 0.0
      %344 = vmatprep.subr.mxu0 0.0
      %345 = vmatpush1.msra.mxu0 0.0
      %346 = vmatprep.subr.mxu0 0.0
      %347 = vmatpush1.msra.mxu0 0.0
      %348 = vmatprep.subr.mxu0 0.0
      %349 = vmatpush1.msra.mxu0 0.0
      %350 = vmatprep.subr.mxu0 0.0
      %351 = vmatpush1.msra.mxu0 0.0
      %352 = vmatprep.subr.mxu0 0.0
      %353 = vmatpush1.msra.mxu0 0.0
      %354 = vmatprep.subr.mxu0 0.0
      %355 = vmatpush1.msra.mxu0 0.0
      %356 = vmatprep.subr.mxu0 0.0
      %357 = vmatpush1.msra.mxu0 0.0
      %358 = vmatprep.subr.mxu0 0.0
      %359 = vmatpush1.msra.mxu0 0.0
      %360 = vmatprep.subr.mxu0 0.0
      %361 = vmatpush1.msra.mxu0 0.0
      %362 = vmatprep.subr.mxu0 0.0
      %363 = vmatpush1.msra.mxu0 0.0
      %364 = vmatprep.subr.mxu0 0.0
      %365 = vmatpush1.msra.mxu0 0.0
      %366 = vmatprep.subr.mxu0 0.0
      %367 = vmatpush1.msra.mxu0 0.0
      %368 = vmatprep.subr.mxu0 0.0
      %369 = vmatpush1.msra.mxu0 0.0
      %370 = vmatprep.subr.mxu0 0.0
      %371 = vmatpush1.msra.mxu0 0.0
      %372 = vmatprep.subr.mxu0 0.0
      %373 = vmatpush1.msra.mxu0 0.0
      %374 = vmatprep.subr.mxu0 0.0
      %375 = vmatpush1.msra.mxu0 0.0
      %376 = vmatprep.subr.mxu0 0.0
      %377 = vmatpush1.msra.mxu0 0.0
      %378 = vmatprep.subr.mxu0 0.0
      %379 = vmatpush1.msra.mxu0 0.0
      %380 = vmatprep.subr.mxu0 0.0
      %381 = vmatpush1.msra.mxu0 0.0
      %382 = vmatprep.subr.mxu0 0.0
      %383 = vmatpush1.msra.mxu0 0.0
      %384 = vmatprep.mubr.f32.mxu0 0.0
      %385 = vmatmul.mubr.f32.gmra.mrb[0].mxu0 %v242
      %v386 = vpop.f32.mrb[0].mxu0
      %v387 = vadd.f32 %v318, %v386
      %v388 = vpop.f32.mrb[0].mxu0
      %389 = vdwg.mxu0
      %v391 = vlaneseq
      %v392 = vshrl.u32 %v391, 7
      %v393 = vsub.s32 0, %v392
      %v394 = vrot.slane %v226, %v393
      %396 = vmatprep.subr.mxu0 0.0
      %397 = vmatpush1.msra.mxu0 %v218
      %398 = vmatprep.subr.mxu0 0.0
      %399 = vmatpush1.msra.mxu0 %v219
      %400 = vmatprep.subr.mxu0 0.0
      %401 = vmatpush1.msra.mxu0 %v220
      %402 = vmatprep.subr.mxu0 0.0
      %403 = vmatpush1.msra.mxu0 %v221
      %404 = vmatprep.subr.mxu0 0.0
      %405 = vmatpush1.msra.mxu0 0.0
      %406 = vmatprep.subr.mxu0 0.0
      %407 = vmatpush1.msra.mxu0 0.0
      %408 = vmatprep.subr.mxu0 0.0
      %409 = vmatpush1.msra.mxu0 0.0
      %410 = vmatprep.subr.mxu0 0.0
      %411 = vmatpush1.msra.mxu0 0.0
      %412 = vmatprep.subr.mxu0 0.0
      %413 = vmatpush1.msra.mxu0 0.0
      %414 = vmatprep.subr.mxu0 0.0
      %415 = vmatpush1.msra.mxu0 0.0
      %416 = vmatprep.subr.mxu0 0.0
      %417 = vmatpush1.msra.mxu0 0.0
      %418 = vmatprep.subr.mxu0 0.0
      %419 = vmatpush1.msra.mxu0 0.0
      %420 = vmatprep.subr.mxu0 0.0
      %421 = vmatpush1.msra.mxu0 0.0
      %422 = vmatprep.subr.mxu0 0.0
      %423 = vmatpush1.msra.mxu0 0.0
      %424 = vmatprep.subr.mxu0 0.0
      %425 = vmatpush1.msra.mxu0 0.0
      %426 = vmatprep.subr.mxu0 0.0
      %427 = vmatpush1.msra.mxu0 0.0
      %428 = vmatprep.subr.mxu0 0.0
      %429 = vmatpush1.msra.mxu0 0.0
      %430 = vmatprep.subr.mxu0 0.0
      %431 = vmatpush1.msra.mxu0 0.0
      %432 = vmatprep.subr.mxu0 0.0
      %433 = vmatpush1.msra.mxu0 0.0
      %434 = vmatprep.subr.mxu0 0.0
      %435 = vmatpush1.msra.mxu0 0.0
      %436 = vmatprep.subr.mxu0 0.0
      %437 = vmatpush1.msra.mxu0 0.0
      %438 = vmatprep.subr.mxu0 0.0
      %439 = vmatpush1.msra.mxu0 0.0
      %440 = vmatprep.subr.mxu0 0.0
      %441 = vmatpush1.msra.mxu0 0.0
      %442 = vmatprep.subr.mxu0 0.0
      %443 = vmatpush1.msra.mxu0 0.0
      %444 = vmatprep.subr.mxu0 0.0
      %445 = vmatpush1.msra.mxu0 0.0
      %446 = vmatprep.subr.mxu0 0.0
      %447 = vmatpush1.msra.mxu0 0.0
      %448 = vmatprep.subr.mxu0 0.0
      %449 = vmatpush1.msra.mxu0 0.0
      %450 = vmatprep.subr.mxu0 0.0
      %451 = vmatpush1.msra.mxu0 0.0
      %452 = vmatprep.subr.mxu0 0.0
      %453 = vmatpush1.msra.mxu0 0.0
      %454 = vmatprep.subr.mxu0 0.0
      %455 = vmatpush1.msra.mxu0 0.0
      %456 = vmatprep.subr.mxu0 0.0
      %457 = vmatpush1.msra.mxu0 0.0
      %458 = vmatprep.subr.mxu0 0.0
      %459 = vmatpush1.msra.mxu0 0.0
      %460 = vmatprep.mubr.f32.mxu0 0.0
      %461 = vmatmul.mubr.f32.gmra.mrb[0].mxu0 %v242
      %v462 = vpop.f32.mrb[0].mxu0
      %v463 = vadd.f32 %v394, %v462
      %v464 = vpop.f32.mrb[0].mxu0
      %465 = vdwg.mxu0
      %v466 = vadd.f32 %v231, %v311
      %v467 = vxor.u32 %v466, 2147483648
      %v468 = vmul.f32 %v467, 1.442695
      %v469 = vpow.pop %v468
      %v470 = vadd.f32 %v469, 1.0
      %v471 = vrcp.pop %v470
      %v472 = vmul.f32 1.0, %v471
      %v473 = vadd.f32 %v232, %v387
      %v474 = vxor.u32 %v473, 2147483648
      %v475 = vmul.f32 %v474, 1.442695
      %v476 = vpow.pop %v475
      %v477 = vadd.f32 %v476, 1.0
      %v478 = vrcp.pop %v477
      %v479 = vmul.f32 1.0, %v478
      %v480 = vmul.f32 %v472, %v463
      %v481 = vadd.f32 %v233, %v480
      %v482 = vtanh.pop %v481
      %v483 = vsub.f32 1.0, %v479
      %v484 = vmul.f32 %v483, %v482
      %v485 = vmul.f32 %v479, 0.0
      %v486 = vadd.f32 %v484, %v485
      %s487 = smul.u32 %s228, 2
      %s488 = scalar_lea.vmem %s207, %s487
      %vm489 = vcmask 254976
      %490 = vst.msk [vmem:[%s488] sm:$0x3] %vm489, %v486
      %s491 = scalar_select %p227, 1, 6
      %s492 = smul.u32 %s491, 6
      %s493 = scalar_lea.vmem %s193, %s492
      %v494 = vld [vmem:[%s493] sm:$0x3]
      %v495 = vld [vmem:[%s493 + $0x2] sm:$0x3]
      %v496 = vld [vmem:[%s493 + $0x4] sm:$0x3]
      %v498 = vsel %vm240, %v486, 0
      %500 = vmatprep.subr.mxu0 0.0
      %501 = vmatpush1.msra.mxu0 %v208
      %502 = vmatprep.subr.mxu0 0.0
      %503 = vmatpush1.msra.mxu0 %v209
      %504 = vmatprep.subr.mxu0 0.0
      %505 = vmatpush1.msra.mxu0 %v210
      %506 = vmatprep.subr.mxu0 0.0
      %507 = vmatpush1.msra.mxu0 %v211
      %508 = vmatprep.subr.mxu0 0.0
      %509 = vmatpush1.msra.mxu0 0.0
      %510 = vmatprep.subr.mxu0 0.0
      %511 = vmatpush1.msra.mxu0 0.0
      %512 = vmatprep.subr.mxu0 0.0
      %513 = vmatpush1.msra.mxu0 0.0
      %514 = vmatprep.subr.mxu0 0.0
      %515 = vmatpush1.msra.mxu0 0.0
      %516 = vmatprep.subr.mxu0 0.0
      %517 = vmatpush1.msra.mxu0 0.0
      %518 = vmatprep.subr.mxu0 0.0
      %519 = vmatpush1.msra.mxu0 0.0
      %520 = vmatprep.subr.mxu0 0.0
      %521 = vmatpush1.msra.mxu0 0.0
      %522 = vmatprep.subr.mxu0 0.0
      %523 = vmatpush1.msra.mxu0 0.0
      %524 = vmatprep.subr.mxu0 0.0
      %525 = vmatpush1.msra.mxu0 0.0
      %526 = vmatprep.subr.mxu0 0.0
      %527 = vmatpush1.msra.mxu0 0.0
      %528 = vmatprep.subr.mxu0 0.0
      %529 = vmatpush1.msra.mxu0 0.0
      %530 = vmatprep.subr.mxu0 0.0
      %531 = vmatpush1.msra.mxu0 0.0
      %532 = vmatprep.subr.mxu0 0.0
      %533 = vmatpush1.msra.mxu0 0.0
      %534 = vmatprep.subr.mxu0 0.0
      %535 = vmatpush1.msra.mxu0 0.0
      %536 = vmatprep.subr.mxu0 0.0
      %537 = vmatpush1.msra.mxu0 0.0
      %538 = vmatprep.subr.mxu0 0.0
      %539 = vmatpush1.msra.mxu0 0.0
      %540 = vmatprep.subr.mxu0 0.0
      %541 = vmatpush1.msra.mxu0 0.0
      %542 = vmatprep.subr.mxu0 0.0
      %543 = vmatpush1.msra.mxu0 0.0
      %544 = vmatprep.subr.mxu0 0.0
      %545 = vmatpush1.msra.mxu0 0.0
      %546 = vmatprep.subr.mxu0 0.0
      %547 = vmatpush1.msra.mxu0 0.0
      %548 = vmatprep.subr.mxu0 0.0
      %549 = vmatpush1.msra.mxu0 0.0
      %550 = vmatprep.subr.mxu0 0.0
      %551 = vmatpush1.msra.mxu0 0.0
      %552 = vmatprep.subr.mxu0 0.0
      %553 = vmatpush1.msra.mxu0 0.0
      %554 = vmatprep.subr.mxu0 0.0
      %555 = vmatpush1.msra.mxu0 0.0
      %556 = vmatprep.subr.mxu0 0.0
      %557 = vmatpush1.msra.mxu0 0.0
      %558 = vmatprep.subr.mxu0 0.0
      %559 = vmatpush1.msra.mxu0 0.0
      %560 = vmatprep.subr.mxu0 0.0
      %561 = vmatpush1.msra.mxu0 0.0
      %562 = vmatprep.subr.mxu0 0.0
      %563 = vmatpush1.msra.mxu0 0.0
      %564 = vmatprep.mubr.f32.mxu0 0.0
      %565 = vmatmul.mubr.f32.gmra.mrb[0].mxu0 %v498
      %v566 = vpop.f32.mrb[0].mxu0
      %v567 = vadd.f32 %v238, %v566
      %v568 = vpop.f32.mrb[0].mxu0
      %569 = vdwg.mxu0
      %570 = vmatprep.subr.mxu0 0.0
      %571 = vmatpush1.msra.mxu0 %v213
      %572 = vmatprep.subr.mxu0 0.0
      %573 = vmatpush1.msra.mxu0 %v214
      %574 = vmatprep.subr.mxu0 0.0
      %575 = vmatpush1.msra.mxu0 %v215
      %576 = vmatprep.subr.mxu0 0.0
      %577 = vmatpush1.msra.mxu0 %v216
      %578 = vmatprep.subr.mxu0 0.0
      %579 = vmatpush1.msra.mxu0 0.0
      %580 = vmatprep.subr.mxu0 0.0
      %581 = vmatpush1.msra.mxu0 0.0
      %582 = vmatprep.subr.mxu0 0.0
      %583 = vmatpush1.msra.mxu0 0.0
      %584 = vmatprep.subr.mxu0 0.0
      %585 = vmatpush1.msra.mxu0 0.0
      %586 = vmatprep.subr.mxu0 0.0
      %587 = vmatpush1.msra.mxu0 0.0
      %588 = vmatprep.subr.mxu0 0.0
      %589 = vmatpush1.msra.mxu0 0.0
      %590 = vmatprep.subr.mxu0 0.0
      %591 = vmatpush1.msra.mxu0 0.0
      %592 = vmatprep.subr.mxu0 0.0
      %593 = vmatpush1.msra.mxu0 0.0
      %594 = vmatprep.subr.mxu0 0.0
      %595 = vmatpush1.msra.mxu0 0.0
      %596 = vmatprep.subr.mxu0 0.0
      %597 = vmatpush1.msra.mxu0 0.0
      %598 = vmatprep.subr.mxu0 0.0
      %599 = vmatpush1.msra.mxu0 0.0
      %600 = vmatprep.subr.mxu0 0.0
      %601 = vmatpush1.msra.mxu0 0.0
      %602 = vmatprep.subr.mxu0 0.0
      %603 = vmatpush1.msra.mxu0 0.0
      %604 = vmatprep.subr.mxu0 0.0
      %605 = vmatpush1.msra.mxu0 0.0
      %606 = vmatprep.subr.mxu0 0.0
      %607 = vmatpush1.msra.mxu0 0.0
      %608 = vmatprep.subr.mxu0 0.0
      %609 = vmatpush1.msra.mxu0 0.0
      %610 = vmatprep.subr.mxu0 0.0
      %611 = vmatpush1.msra.mxu0 0.0
      %612 = vmatprep.subr.mxu0 0.0
      %613 = vmatpush1.msra.mxu0 0.0
      %614 = vmatprep.subr.mxu0 0.0
      %615 = vmatpush1.msra.mxu0 0.0
      %616 = vmatprep.subr.mxu0 0.0
      %617 = vmatpush1.msra.mxu0 0.0
      %618 = vmatprep.subr.mxu0 0.0
      %619 = vmatpush1.msra.mxu0 0.0
      %620 = vmatprep.subr.mxu0 0.0
      %621 = vmatpush1.msra.mxu0 0.0
      %622 = vmatprep.subr.mxu0 0.0
      %623 = vmatpush1.msra.mxu0 0.0
      %624 = vmatprep.subr.mxu0 0.0
      %625 = vmatpush1.msra.mxu0 0.0
      %626 = vmatprep.subr.mxu0 0.0
      %627 = vmatpush1.msra.mxu0 0.0
      %628 = vmatprep.subr.mxu0 0.0
      %629 = vmatpush1.msra.mxu0 0.0
      %630 = vmatprep.subr.mxu0 0.0
      %631 = vmatpush1.msra.mxu0 0.0
      %632 = vmatprep.subr.mxu0 0.0
      %633 = vmatpush1.msra.mxu0 0.0
      %634 = vmatprep.mubr.f32.mxu0 0.0
      %635 = vmatmul.mubr.f32.gmra.mrb[0].mxu0 %v498
      %v636 = vpop.f32.mrb[0].mxu0
      %v637 = vadd.f32 %v318, %v636
      %v638 = vpop.f32.mrb[0].mxu0
      %639 = vdwg.mxu0
      %640 = vmatprep.subr.mxu0 0.0
      %641 = vmatpush1.msra.mxu0 %v218
      %642 = vmatprep.subr.mxu0 0.0
      %643 = vmatpush1.msra.mxu0 %v219
      %644 = vmatprep.subr.mxu0 0.0
      %645 = vmatpush1.msra.mxu0 %v220
      %646 = vmatprep.subr.mxu0 0.0
      %647 = vmatpush1.msra.mxu0 %v221
      %648 = vmatprep.subr.mxu0 0.0
      %649 = vmatpush1.msra.mxu0 0.0
      %650 = vmatprep.subr.mxu0 0.0
      %651 = vmatpush1.msra.mxu0 0.0
      %652 = vmatprep.subr.mxu0 0.0
      %653 = vmatpush1.msra.mxu0 0.0
      %654 = vmatprep.subr.mxu0 0.0
      %655 = vmatpush1.msra.mxu0 0.0
      %656 = vmatprep.subr.mxu0 0.0
      %657 = vmatpush1.msra.mxu0 0.0
      %658 = vmatprep.subr.mxu0 0.0
      %659 = vmatpush1.msra.mxu0 0.0
      %660 = vmatprep.subr.mxu0 0.0
      %661 = vmatpush1.msra.mxu0 0.0
      %662 = vmatprep.subr.mxu0 0.0
      %663 = vmatpush1.msra.mxu0 0.0
      %664 = vmatprep.subr.mxu0 0.0
      %665 = vmatpush1.msra.mxu0 0.0
      %666 = vmatprep.subr.mxu0 0.0
      %667 = vmatpush1.msra.mxu0 0.0
      %668 = vmatprep.subr.mxu0 0.0
      %669 = vmatpush1.msra.mxu0 0.0
      %670 = vmatprep.subr.mxu0 0.0
      %671 = vmatpush1.msra.mxu0 0.0
      %672 = vmatprep.subr.mxu0 0.0
      %673 = vmatpush1.msra.mxu0 0.0
      %674 = vmatprep.subr.mxu0 0.0
      %675 = vmatpush1.msra.mxu0 0.0
      %676 = vmatprep.subr.mxu0 0.0
      %677 = vmatpush1.msra.mxu0 0.0
      %678 = vmatprep.subr.mxu0 0.0
      %679 = vmatpush1.msra.mxu0 0.0
      %680 = vmatprep.subr.mxu0 0.0
      %681 = vmatpush1.msra.mxu0 0.0
      %682 = vmatprep.subr.mxu0 0.0
      %683 = vmatpush1.msra.mxu0 0.0
      %684 = vmatprep.subr.mxu0 0.0
      %685 = vmatpush1.msra.mxu0 0.0
      %686 = vmatprep.subr.mxu0 0.0
      %687 = vmatpush1.msra.mxu0 0.0
      %688 = vmatprep.subr.mxu0 0.0
      %689 = vmatpush1.msra.mxu0 0.0
      %690 = vmatprep.subr.mxu0 0.0
      %691 = vmatpush1.msra.mxu0 0.0
      %692 = vmatprep.subr.mxu0 0.0
      %693 = vmatpush1.msra.mxu0 0.0
      %694 = vmatprep.subr.mxu0 0.0
      %695 = vmatpush1.msra.mxu0 0.0
      %696 = vmatprep.subr.mxu0 0.0
      %697 = vmatpush1.msra.mxu0 0.0
      %698 = vmatprep.subr.mxu0 0.0
      %699 = vmatpush1.msra.mxu0 0.0
      %700 = vmatprep.subr.mxu0 0.0
      %701 = vmatpush1.msra.mxu0 0.0
      %702 = vmatprep.subr.mxu0 0.0
      %703 = vmatpush1.msra.mxu0 0.0
      %704 = vmatprep.mubr.f32.mxu0 0.0
      %705 = vmatmul.mubr.f32.gmra.mrb[0].mxu0 %v498
      %v706 = vpop.f32.mrb[0].mxu0
      %v707 = vadd.f32 %v394, %v706
      %v708 = vpop.f32.mrb[0].mxu0
      %709 = vdwg.mxu0
      %v710 = vadd.f32 %v494, %v567
      %v711 = vxor.u32 %v710, 2147483648
      %v712 = vmul.f32 %v711, 1.442695
      %v713 = vpow.pop %v712
      %v714 = vadd.f32 %v713, 1.0
      %v715 = vrcp.pop %v714
      %v716 = vmul.f32 1.0, %v715
      %v717 = vadd.f32 %v495, %v637
      %v718 = vxor.u32 %v717, 2147483648
      %v719 = vmul.f32 %v718, 1.442695
      %v720 = vpow.pop %v719
      %v721 = vadd.f32 %v720, 1.0
      %v722 = vrcp.pop %v721
      %v723 = vmul.f32 1.0, %v722
      %v724 = vmul.f32 %v716, %v707
      %v725 = vadd.f32 %v496, %v724
      %v726 = vtanh.pop %v725
      %v727 = vsub.f32 1.0, %v723
      %v728 = vmul.f32 %v727, %v726
      %v729 = vmul.f32 %v723, %v486
      %v730 = vadd.f32 %v728, %v729
      %s731 = smul.u32 %s491, 2
      %s732 = scalar_lea.vmem %s207, %s731
      %733 = vst.msk [vmem:[%s732] sm:$0x3] %vm489, %v730
      %s734 = scalar_select %p227, 2, 5
      %s735 = smul.u32 %s734, 6
      %s736 = scalar_lea.vmem %s193, %s735
      %v737 = vld [vmem:[%s736] sm:$0x3]
      %v738 = vld [vmem:[%s736 + $0x2] sm:$0x3]
      %v739 = vld [vmem:[%s736 + $0x4] sm:$0x3]
      %v741 = vsel %vm240, %v730, 0
      %743 = vmatprep.subr.mxu0 0.0
      %744 = vmatpush1.msra.mxu0 %v208
      %745 = vmatprep.subr.mxu0 0.0
      %746 = vmatpush1.msra.mxu0 %v209
      %747 = vmatprep.subr.mxu0 0.0
      %748 = vmatpush1.msra.mxu0 %v210
      %749 = vmatprep.subr.mxu0 0.0
      %750 = vmatpush1.msra.mxu0 %v211
      %751 = vmatprep.subr.mxu0 0.0
      %752 = vmatpush1.msra.mxu0 0.0
      %753 = vmatprep.subr.mxu0 0.0
      %754 = vmatpush1.msra.mxu0 0.0
      %755 = vmatprep.subr.mxu0 0.0
      %756 = vmatpush1.msra.mxu0 0.0
      %757 = vmatprep.subr.mxu0 0.0
      %758 = vmatpush1.msra.mxu0 0.0
      %759 = vmatprep.subr.mxu0 0.0
      %760 = vmatpush1.msra.mxu0 0.0
      %761 = vmatprep.subr.mxu0 0.0
      %762 = vmatpush1.msra.mxu0 0.0
      %763 = vmatprep.subr.mxu0 0.0
      %764 = vmatpush1.msra.mxu0 0.0
      %765 = vmatprep.subr.mxu0 0.0
      %766 = vmatpush1.msra.mxu0 0.0
      %767 = vmatprep.subr.mxu0 0.0
      %768 = vmatpush1.msra.mxu0 0.0
      %769 = vmatprep.subr.mxu0 0.0
      %770 = vmatpush1.msra.mxu0 0.0
      %771 = vmatprep.subr.mxu0 0.0
      %772 = vmatpush1.msra.mxu0 0.0
      %773 = vmatprep.subr.mxu0 0.0
      %774 = vmatpush1.msra.mxu0 0.0
      %775 = vmatprep.subr.mxu0 0.0
      %776 = vmatpush1.msra.mxu0 0.0
      %777 = vmatprep.subr.mxu0 0.0
      %778 = vmatpush1.msra.mxu0 0.0
      %779 = vmatprep.subr.mxu0 0.0
      %780 = vmatpush1.msra.mxu0 0.0
      %781 = vmatprep.subr.mxu0 0.0
      %782 = vmatpush1.msra.mxu0 0.0
      %783 = vmatprep.subr.mxu0 0.0
      %784 = vmatpush1.msra.mxu0 0.0
      %785 = vmatprep.subr.mxu0 0.0
      %786 = vmatpush1.msra.mxu0 0.0
      %787 = vmatprep.subr.mxu0 0.0
      %788 = vmatpush1.msra.mxu0 0.0
      %789 = vmatprep.subr.mxu0 0.0
      %790 = vmatpush1.msra.mxu0 0.0
      %791 = vmatprep.subr.mxu0 0.0
      %792 = vmatpush1.msra.mxu0 0.0
      %793 = vmatprep.subr.mxu0 0.0
      %794 = vmatpush1.msra.mxu0 0.0
      %795 = vmatprep.subr.mxu0 0.0
      %796 = vmatpush1.msra.mxu0 0.0
      %797 = vmatprep.subr.mxu0 0.0
      %798 = vmatpush1.msra.mxu0 0.0
      %799 = vmatprep.subr.mxu0 0.0
      %800 = vmatpush1.msra.mxu0 0.0
      %801 = vmatprep.subr.mxu0 0.0
      %802 = vmatpush1.msra.mxu0 0.0
      %803 = vmatprep.subr.mxu0 0.0
      %804 = vmatpush1.msra.mxu0 0.0
      %805 = vmatprep.subr.mxu0 0.0
      %806 = vmatpush1.msra.mxu0 0.0
      %807 = vmatprep.mubr.f32.mxu0 0.0
      %808 = vmatmul.mubr.f32.gmra.mrb[0].mxu0 %v741
      %v809 = vpop.f32.mrb[0].mxu0
      %v810 = vadd.f32 %v238, %v809
      %v811 = vpop.f32.mrb[0].mxu0
      %812 = vdwg.mxu0
      %813 = vmatprep.subr.mxu0 0.0
      %814 = vmatpush1.msra.mxu0 %v213
      %815 = vmatprep.subr.mxu0 0.0
      %816 = vmatpush1.msra.mxu0 %v214
      %817 = vmatprep.subr.mxu0 0.0
      %818 = vmatpush1.msra.mxu0 %v215
      %819 = vmatprep.subr.mxu0 0.0
      %820 = vmatpush1.msra.mxu0 %v216
      %821 = vmatprep.subr.mxu0 0.0
      %822 = vmatpush1.msra.mxu0 0.0
      %823 = vmatprep.subr.mxu0 0.0
      %824 = vmatpush1.msra.mxu0 0.0
      %825 = vmatprep.subr.mxu0 0.0
      %826 = vmatpush1.msra.mxu0 0.0
      %827 = vmatprep.subr.mxu0 0.0
      %828 = vmatpush1.msra.mxu0 0.0
      %829 = vmatprep.subr.mxu0 0.0
      %830 = vmatpush1.msra.mxu0 0.0
      %831 = vmatprep.subr.mxu0 0.0
      %832 = vmatpush1.msra.mxu0 0.0
      %833 = vmatprep.subr.mxu0 0.0
      %834 = vmatpush1.msra.mxu0 0.0
      %835 = vmatprep.subr.mxu0 0.0
      %836 = vmatpush1.msra.mxu0 0.0
      %837 = vmatprep.subr.mxu0 0.0
      %838 = vmatpush1.msra.mxu0 0.0
      %839 = vmatprep.subr.mxu0 0.0
      %840 = vmatpush1.msra.mxu0 0.0
      %841 = vmatprep.subr.mxu0 0.0
      %842 = vmatpush1.msra.mxu0 0.0
      %843 = vmatprep.subr.mxu0 0.0
      %844 = vmatpush1.msra.mxu0 0.0
      %845 = vmatprep.subr.mxu0 0.0
      %846 = vmatpush1.msra.mxu0 0.0
      %847 = vmatprep.subr.mxu0 0.0
      %848 = vmatpush1.msra.mxu0 0.0
      %849 = vmatprep.subr.mxu0 0.0
      %850 = vmatpush1.msra.mxu0 0.0
      %851 = vmatprep.subr.mxu0 0.0
      %852 = vmatpush1.msra.mxu0 0.0
      %853 = vmatprep.subr.mxu0 0.0
      %854 = vmatpush1.msra.mxu0 0.0
      %855 = vmatprep.subr.mxu0 0.0
      %856 = vmatpush1.msra.mxu0 0.0
      %857 = vmatprep.subr.mxu0 0.0
      %858 = vmatpush1.msra.mxu0 0.0
      %859 = vmatprep.subr.mxu0 0.0
      %860 = vmatpush1.msra.mxu0 0.0
      %861 = vmatprep.subr.mxu0 0.0
      %862 = vmatpush1.msra.mxu0 0.0
      %863 = vmatprep.subr.mxu0 0.0
      %864 = vmatpush1.msra.mxu0 0.0
      %865 = vmatprep.subr.mxu0 0.0
      %866 = vmatpush1.msra.mxu0 0.0
      %867 = vmatprep.subr.mxu0 0.0
      %868 = vmatpush1.msra.mxu0 0.0
      %869 = vmatprep.subr.mxu0 0.0
      %870 = vmatpush1.msra.mxu0 0.0
      %871 = vmatprep.subr.mxu0 0.0
      %872 = vmatpush1.msra.mxu0 0.0
      %873 = vmatprep.subr.mxu0 0.0
      %874 = vmatpush1.msra.mxu0 0.0
      %875 = vmatprep.subr.mxu0 0.0
      %876 = vmatpush1.msra.mxu0 0.0
      %877 = vmatprep.mubr.f32.mxu0 0.0
      %878 = vmatmul.mubr.f32.gmra.mrb[0].mxu0 %v741
      %v879 = vpop.f32.mrb[0].mxu0
      %v880 = vadd.f32 %v318, %v879
      %v881 = vpop.f32.mrb[0].mxu0
      %882 = vdwg.mxu0
      %883 = vmatprep.subr.mxu0 0.0
      %884 = vmatpush1.msra.mxu0 %v218
      %885 = vmatprep.subr.mxu0 0.0
      %886 = vmatpush1.msra.mxu0 %v219
      %887 = vmatprep.subr.mxu0 0.0
      %888 = vmatpush1.msra.mxu0 %v220
      %889 = vmatprep.subr.mxu0 0.0
      %890 = vmatpush1.msra.mxu0 %v221
      %891 = vmatprep.subr.mxu0 0.0
      %892 = vmatpush1.msra.mxu0 0.0
      %893 = vmatprep.subr.mxu0 0.0
      %894 = vmatpush1.msra.mxu0 0.0
      %895 = vmatprep.subr.mxu0 0.0
      %896 = vmatpush1.msra.mxu0 0.0
      %897 = vmatprep.subr.mxu0 0.0
      %898 = vmatpush1.msra.mxu0 0.0
      %899 = vmatprep.subr.mxu0 0.0
      %900 = vmatpush1.msra.mxu0 0.0
      %901 = vmatprep.subr.mxu0 0.0
      %902 = vmatpush1.msra.mxu0 0.0
      %903 = vmatprep.subr.mxu0 0.0
      %904 = vmatpush1.msra.mxu0 0.0
      %905 = vmatprep.subr.mxu0 0.0
      %906 = vmatpush1.msra.mxu0 0.0
      %907 = vmatprep.subr.mxu0 0.0
      %908 = vmatpush1.msra.mxu0 0.0
      %909 = vmatprep.subr.mxu0 0.0
      %910 = vmatpush1.msra.mxu0 0.0
      %911 = vmatprep.subr.mxu0 0.0
      %912 = vmatpush1.msra.mxu0 0.0
      %913 = vmatprep.subr.mxu0 0.0
      %914 = vmatpush1.msra.mxu0 0.0
      %915 = vmatprep.subr.mxu0 0.0
      %916 = vmatpush1.msra.mxu0 0.0
      %917 = vmatprep.subr.mxu0 0.0
      %918 = vmatpush1.msra.mxu0 0.0
      %919 = vmatprep.subr.mxu0 0.0
      %920 = vmatpush1.msra.mxu0 0.0
      %921 = vmatprep.subr.mxu0 0.0
      %922 = vmatpush1.msra.mxu0 0.0
      %923 = vmatprep.subr.mxu0 0.0
      %924 = vmatpush1.msra.mxu0 0.0
      %925 = vmatprep.subr.mxu0 0.0
      %926 = vmatpush1.msra.mxu0 0.0
      %927 = vmatprep.subr.mxu0 0.0
      %928 = vmatpush1.msra.mxu0 0.0
      %929 = vmatprep.subr.mxu0 0.0
      %930 = vmatpush1.msra.mxu0 0.0
      %931 = vmatprep.subr.mxu0 0.0
      %932 = vmatpush1.msra.mxu0 0.0
      %933 = vmatprep.subr.mxu0 0.0
      %934 = vmatpush1.msra.mxu0 0.0
      %935 = vmatprep.subr.mxu0 0.0
      %936 = vmatpush1.msra.mxu0 0.0
      %937 = vmatprep.subr.mxu0 0.0
      %938 = vmatpush1.msra.mxu0 0.0
      %939 = vmatprep.subr.mxu0 0.0
      %940 = vmatpush1.msra.mxu0 0.0
      %941 = vmatprep.subr.mxu0 0.0
      %942 = vmatpush1.msra.mxu0 0.0
      %943 = vmatprep.subr.mxu0 0.0
      %944 = vmatpush1.msra.mxu0 0.0
      %945 = vmatprep.subr.mxu0 0.0
      %946 = vmatpush1.msra.mxu0 0.0
      %947 = vmatprep.mubr.f32.mxu0 0.0
      %948 = vmatmul.mubr.f32.gmra.mrb[0].mxu0 %v741
      %v949 = vpop.f32.mrb[0].mxu0
      %v950 = vadd.f32 %v394, %v949
      %v951 = vpop.f32.mrb[0].mxu0
      %952 = vdwg.mxu0
      %v953 = vadd.f32 %v737, %v810
      %v954 = vxor.u32 %v953, 2147483648
      %v955 = vmul.f32 %v954, 1.442695
      %v956 = vpow.pop %v955
      %v957 = vadd.f32 %v956, 1.0
      %v958 = vrcp.pop %v957
      %v959 = vmul.f32 1.0, %v958
      %v960 = vadd.f32 %v738, %v880
      %v961 = vxor.u32 %v960, 2147483648
      %v962 = vmul.f32 %v961, 1.442695
      %v963 = vpow.pop %v962
      %v964 = vadd.f32 %v963, 1.0
      %v965 = vrcp.pop %v964
      %v966 = vmul.f32 1.0, %v965
      %v967 = vmul.f32 %v959, %v950
      %v968 = vadd.f32 %v739, %v967
      %v969 = vtanh.pop %v968
      %v970 = vsub.f32 1.0, %v966
      %v971 = vmul.f32 %v970, %v969
      %v972 = vmul.f32 %v966, %v730
      %v973 = vadd.f32 %v971, %v972
      %s974 = smul.u32 %s734, 2
      %s975 = scalar_lea.vmem %s207, %s974
      %976 = vst.msk [vmem:[%s975] sm:$0x3] %vm489, %v973
      %s977 = scalar_select %p227, 3, 4
      %s978 = smul.u32 %s977, 6
      %s979 = scalar_lea.vmem %s193, %s978
      %v980 = vld [vmem:[%s979] sm:$0x3]
      %v981 = vld [vmem:[%s979 + $0x2] sm:$0x3]
      %v982 = vld [vmem:[%s979 + $0x4] sm:$0x3]
      %v984 = vsel %vm240, %v973, 0
      %986 = vmatprep.subr.mxu0 0.0
      %987 = vmatpush1.msra.mxu0 %v208
      %988 = vmatprep.subr.mxu0 0.0
      %989 = vmatpush1.msra.mxu0 %v209
      %990 = vmatprep.subr.mxu0 0.0
      %991 = vmatpush1.msra.mxu0 %v210
      %992 = vmatprep.subr.mxu0 0.0
      %993 = vmatpush1.msra.mxu0 %v211
      %994 = vmatprep.subr.mxu0 0.0
      %995 = vmatpush1.msra.mxu0 0.0
      %996 = vmatprep.subr.mxu0 0.0
      %997 = vmatpush1.msra.mxu0 0.0
      %998 = vmatprep.subr.mxu0 0.0
      %999 = vmatpush1.msra.mxu0 0.0
      %1000 = vmatprep.subr.mxu0 0.0
      %1001 = vmatpush1.msra.mxu0 0.0
      %1002 = vmatprep.subr.mxu0 0.0
      %1003 = vmatpush1.msra.mxu0 0.0
      %1004 = vmatprep.subr.mxu0 0.0
      %1005 = vmatpush1.msra.mxu0 0.0
      %1006 = vmatprep.subr.mxu0 0.0
      %1007 = vmatpush1.msra.mxu0 0.0
      %1008 = vmatprep.subr.mxu0 0.0
      %1009 = vmatpush1.msra.mxu0 0.0
      %1010 = vmatprep.subr.mxu0 0.0
      %1011 = vmatpush1.msra.mxu0 0.0
      %1012 = vmatprep.subr.mxu0 0.0
      %1013 = vmatpush1.msra.mxu0 0.0
      %1014 = vmatprep.subr.mxu0 0.0
      %1015 = vmatpush1.msra.mxu0 0.0
      %1016 = vmatprep.subr.mxu0 0.0
      %1017 = vmatpush1.msra.mxu0 0.0
      %1018 = vmatprep.subr.mxu0 0.0
      %1019 = vmatpush1.msra.mxu0 0.0
      %1020 = vmatprep.subr.mxu0 0.0
      %1021 = vmatpush1.msra.mxu0 0.0
      %1022 = vmatprep.subr.mxu0 0.0
      %1023 = vmatpush1.msra.mxu0 0.0
      %1024 = vmatprep.subr.mxu0 0.0
      %1025 = vmatpush1.msra.mxu0 0.0
      %1026 = vmatprep.subr.mxu0 0.0
      %1027 = vmatpush1.msra.mxu0 0.0
      %1028 = vmatprep.subr.mxu0 0.0
      %1029 = vmatpush1.msra.mxu0 0.0
      %1030 = vmatprep.subr.mxu0 0.0
      %1031 = vmatpush1.msra.mxu0 0.0
      %1032 = vmatprep.subr.mxu0 0.0
      %1033 = vmatpush1.msra.mxu0 0.0
      %1034 = vmatprep.subr.mxu0 0.0
      %1035 = vmatpush1.msra.mxu0 0.0
      %1036 = vmatprep.subr.mxu0 0.0
      %1037 = vmatpush1.msra.mxu0 0.0
      %1038 = vmatprep.subr.mxu0 0.0
      %1039 = vmatpush1.msra.mxu0 0.0
      %1040 = vmatprep.subr.mxu0 0.0
      %1041 = vmatpush1.msra.mxu0 0.0
      %1042 = vmatprep.subr.mxu0 0.0
      %1043 = vmatpush1.msra.mxu0 0.0
      %1044 = vmatprep.subr.mxu0 0.0
      %1045 = vmatpush1.msra.mxu0 0.0
      %1046 = vmatprep.subr.mxu0 0.0
      %1047 = vmatpush1.msra.mxu0 0.0
      %1048 = vmatprep.subr.mxu0 0.0
      %1049 = vmatpush1.msra.mxu0 0.0
      %1050 = vmatprep.mubr.f32.mxu0 0.0
      %1051 = vmatmul.mubr.f32.gmra.mrb[0].mxu0 %v984
      %v1052 = vpop.f32.mrb[0].mxu0
      %v1053 = vadd.f32 %v238, %v1052
      %v1054 = vpop.f32.mrb[0].mxu0
      %1055 = vdwg.mxu0
      %1056 = vmatprep.subr.mxu0 0.0
      %1057 = vmatpush1.msra.mxu0 %v213
      %1058 = vmatprep.subr.mxu0 0.0
      %1059 = vmatpush1.msra.mxu0 %v214
      %1060 = vmatprep.subr.mxu0 0.0
      %1061 = vmatpush1.msra.mxu0 %v215
      %1062 = vmatprep.subr.mxu0 0.0
      %1063 = vmatpush1.msra.mxu0 %v216
      %1064 = vmatprep.subr.mxu0 0.0
      %1065 = vmatpush1.msra.mxu0 0.0
      %1066 = vmatprep.subr.mxu0 0.0
      %1067 = vmatpush1.msra.mxu0 0.0
      %1068 = vmatprep.subr.mxu0 0.0
      %1069 = vmatpush1.msra.mxu0 0.0
      %1070 = vmatprep.subr.mxu0 0.0
      %1071 = vmatpush1.msra.mxu0 0.0
      %1072 = vmatprep.subr.mxu0 0.0
      %1073 = vmatpush1.msra.mxu0 0.0
      %1074 = vmatprep.subr.mxu0 0.0
      %1075 = vmatpush1.msra.mxu0 0.0
      %1076 = vmatprep.subr.mxu0 0.0
      %1077 = vmatpush1.msra.mxu0 0.0
      %1078 = vmatprep.subr.mxu0 0.0
      %1079 = vmatpush1.msra.mxu0 0.0
      %1080 = vmatprep.subr.mxu0 0.0
      %1081 = vmatpush1.msra.mxu0 0.0
      %1082 = vmatprep.subr.mxu0 0.0
      %1083 = vmatpush1.msra.mxu0 0.0
      %1084 = vmatprep.subr.mxu0 0.0
      %1085 = vmatpush1.msra.mxu0 0.0
      %1086 = vmatprep.subr.mxu0 0.0
      %1087 = vmatpush1.msra.mxu0 0.0
      %1088 = vmatprep.subr.mxu0 0.0
      %1089 = vmatpush1.msra.mxu0 0.0
      %1090 = vmatprep.subr.mxu0 0.0
      %1091 = vmatpush1.msra.mxu0 0.0
      %1092 = vmatprep.subr.mxu0 0.0
      %1093 = vmatpush1.msra.mxu0 0.0
      %1094 = vmatprep.subr.mxu0 0.0
      %1095 = vmatpush1.msra.mxu0 0.0
      %1096 = vmatprep.subr.mxu0 0.0
      %1097 = vmatpush1.msra.mxu0 0.0
      %1098 = vmatprep.subr.mxu0 0.0
      %1099 = vmatpush1.msra.mxu0 0.0
      %1100 = vmatprep.subr.mxu0 0.0
      %1101 = vmatpush1.msra.mxu0 0.0
      %1102 = vmatprep.subr.mxu0 0.0
      %1103 = vmatpush1.msra.mxu0 0.0
      %1104 = vmatprep.subr.mxu0 0.0
      %1105 = vmatpush1.msra.mxu0 0.0
      %1106 = vmatprep.subr.mxu0 0.0
      %1107 = vmatpush1.msra.mxu0 0.0
      %1108 = vmatprep.subr.mxu0 0.0
      %1109 = vmatpush1.msra.mxu0 0.0
      %1110 = vmatprep.subr.mxu0 0.0
      %1111 = vmatpush1.msra.mxu0 0.0
      %1112 = vmatprep.subr.mxu0 0.0
      %1113 = vmatpush1.msra.mxu0 0.0
      %1114 = vmatprep.subr.mxu0 0.0
      %1115 = vmatpush1.msra.mxu0 0.0
      %1116 = vmatprep.subr.mxu0 0.0
      %1117 = vmatpush1.msra.mxu0 0.0
      %1118 = vmatprep.subr.mxu0 0.0
      %1119 = vmatpush1.msra.mxu0 0.0
      %1120 = vmatprep.mubr.f32.mxu0 0.0
      %1121 = vmatmul.mubr.f32.gmra.mrb[0].mxu0 %v984
      %v1122 = vpop.f32.mrb[0].mxu0
      %v1123 = vadd.f32 %v318, %v1122
      %v1124 = vpop.f32.mrb[0].mxu0
      %1125 = vdwg.mxu0
      %1126 = vmatprep.subr.mxu0 0.0
      %1127 = vmatpush1.msra.mxu0 %v218
      %1128 = vmatprep.subr.mxu0 0.0
      %1129 = vmatpush1.msra.mxu0 %v219
      %1130 = vmatprep.subr.mxu0 0.0
      %1131 = vmatpush1.msra.mxu0 %v220
      %1132 = vmatprep.subr.mxu0 0.0
      %1133 = vmatpush1.msra.mxu0 %v221
      %1134 = vmatprep.subr.mxu0 0.0
      %1135 = vmatpush1.msra.mxu0 0.0
      %1136 = vmatprep.subr.mxu0 0.0
      %1137 = vmatpush1.msra.mxu0 0.0
      %1138 = vmatprep.subr.mxu0 0.0
      %1139 = vmatpush1.msra.mxu0 0.0
      %1140 = vmatprep.subr.mxu0 0.0
      %1141 = vmatpush1.msra.mxu0 0.0
      %1142 = vmatprep.subr.mxu0 0.0
      %1143 = vmatpush1.msra.mxu0 0.0
      %1144 = vmatprep.subr.mxu0 0.0
      %1145 = vmatpush1.msra.mxu0 0.0
      %1146 = vmatprep.subr.mxu0 0.0
      %1147 = vmatpush1.msra.mxu0 0.0
      %1148 = vmatprep.subr.mxu0 0.0
      %1149 = vmatpush1.msra.mxu0 0.0
      %1150 = vmatprep.subr.mxu0 0.0
      %1151 = vmatpush1.msra.mxu0 0.0
      %1152 = vmatprep.subr.mxu0 0.0
      %1153 = vmatpush1.msra.mxu0 0.0
      %1154 = vmatprep.subr.mxu0 0.0
      %1155 = vmatpush1.msra.mxu0 0.0
      %1156 = vmatprep.subr.mxu0 0.0
      %1157 = vmatpush1.msra.mxu0 0.0
      %1158 = vmatprep.subr.mxu0 0.0
      %1159 = vmatpush1.msra.mxu0 0.0
      %1160 = vmatprep.subr.mxu0 0.0
      %1161 = vmatpush1.msra.mxu0 0.0
      %1162 = vmatprep.subr.mxu0 0.0
      %1163 = vmatpush1.msra.mxu0 0.0
      %1164 = vmatprep.subr.mxu0 0.0
      %1165 = vmatpush1.msra.mxu0 0.0
      %1166 = vmatprep.subr.mxu0 0.0
      %1167 = vmatpush1.msra.mxu0 0.0
      %1168 = vmatprep.subr.mxu0 0.0
      %1169 = vmatpush1.msra.mxu0 0.0
      %1170 = vmatprep.subr.mxu0 0.0
      %1171 = vmatpush1.msra.mxu0 0.0
      %1172 = vmatprep.subr.mxu0 0.0
      %1173 = vmatpush1.msra.mxu0 0.0
      %1174 = vmatprep.subr.mxu0 0.0
      %1175 = vmatpush1.msra.mxu0 0.0
      %1176 = vmatprep.subr.mxu0 0.0
      %1177 = vmatpush1.msra.mxu0 0.0
      %1178 = vmatprep.subr.mxu0 0.0
      %1179 = vmatpush1.msra.mxu0 0.0
      %1180 = vmatprep.subr.mxu0 0.0
      %1181 = vmatpush1.msra.mxu0 0.0
      %1182 = vmatprep.subr.mxu0 0.0
      %1183 = vmatpush1.msra.mxu0 0.0
      %1184 = vmatprep.subr.mxu0 0.0
      %1185 = vmatpush1.msra.mxu0 0.0
      %1186 = vmatprep.subr.mxu0 0.0
      %1187 = vmatpush1.msra.mxu0 0.0
      %1188 = vmatprep.subr.mxu0 0.0
      %1189 = vmatpush1.msra.mxu0 0.0
      %1190 = vmatprep.mubr.f32.mxu0 0.0
      %1191 = vmatmul.mubr.f32.gmra.mrb[0].mxu0 %v984
      %v1192 = vpop.f32.mrb[0].mxu0
      %v1193 = vadd.f32 %v394, %v1192
      %v1194 = vpop.f32.mrb[0].mxu0
      %1195 = vdwg.mxu0
      %v1196 = vadd.f32 %v980, %v1053
      %v1197 = vxor.u32 %v1196, 2147483648
      %v1198 = vmul.f32 %v1197, 1.442695
      %v1199 = vpow.pop %v1198
      %v1200 = vadd.f32 %v1199, 1.0
      %v1201 = vrcp.pop %v1200
      %v1202 = vmul.f32 1.0, %v1201
      %v1203 = vadd.f32 %v981, %v1123
      %v1204 = vxor.u32 %v1203, 2147483648
      %v1205 = vmul.f32 %v1204, 1.442695
      %v1206 = vpow.pop %v1205
      %v1207 = vadd.f32 %v1206, 1.0
      %v1208 = vrcp.pop %v1207
      %v1209 = vmul.f32 1.0, %v1208
      %v1210 = vmul.f32 %v1202, %v1193
      %v1211 = vadd.f32 %v982, %v1210
      %v1212 = vtanh.pop %v1211
      %v1213 = vsub.f32 1.0, %v1209
      %v1214 = vmul.f32 %v1213, %v1212
      %v1215 = vmul.f32 %v1209, %v973
      %v1216 = vadd.f32 %v1214, %v1215
      %s1217 = smul.u32 %s977, 2
      %s1218 = scalar_lea.vmem %s207, %s1217
      %1219 = vst.msk [vmem:[%s1218] sm:$0x3] %vm489, %v1216
      %s1220 = scalar_select %p227, 4, 3
      %s1221 = smul.u32 %s1220, 6
      %s1222 = scalar_lea.vmem %s193, %s1221
      %v1223 = vld [vmem:[%s1222] sm:$0x3]
      %v1224 = vld [vmem:[%s1222 + $0x2] sm:$0x3]
      %v1225 = vld [vmem:[%s1222 + $0x4] sm:$0x3]
      %v1227 = vsel %vm240, %v1216, 0
      %1229 = vmatprep.subr.mxu0 0.0
      %1230 = vmatpush1.msra.mxu0 %v208
      %1231 = vmatprep.subr.mxu0 0.0
      %1232 = vmatpush1.msra.mxu0 %v209
      %1233 = vmatprep.subr.mxu0 0.0
      %1234 = vmatpush1.msra.mxu0 %v210
      %1235 = vmatprep.subr.mxu0 0.0
      %1236 = vmatpush1.msra.mxu0 %v211
      %1237 = vmatprep.subr.mxu0 0.0
      %1238 = vmatpush1.msra.mxu0 0.0
      %1239 = vmatprep.subr.mxu0 0.0
      %1240 = vmatpush1.msra.mxu0 0.0
      %1241 = vmatprep.subr.mxu0 0.0
      %1242 = vmatpush1.msra.mxu0 0.0
      %1243 = vmatprep.subr.mxu0 0.0
      %1244 = vmatpush1.msra.mxu0 0.0
      %1245 = vmatprep.subr.mxu0 0.0
      %1246 = vmatpush1.msra.mxu0 0.0
      %1247 = vmatprep.subr.mxu0 0.0
      %1248 = vmatpush1.msra.mxu0 0.0
      %1249 = vmatprep.subr.mxu0 0.0
      %1250 = vmatpush1.msra.mxu0 0.0
      %1251 = vmatprep.subr.mxu0 0.0
      %1252 = vmatpush1.msra.mxu0 0.0
      %1253 = vmatprep.subr.mxu0 0.0
      %1254 = vmatpush1.msra.mxu0 0.0
      %1255 = vmatprep.subr.mxu0 0.0
      %1256 = vmatpush1.msra.mxu0 0.0
      %1257 = vmatprep.subr.mxu0 0.0
      %1258 = vmatpush1.msra.mxu0 0.0
      %1259 = vmatprep.subr.mxu0 0.0
      %1260 = vmatpush1.msra.mxu0 0.0
      %1261 = vmatprep.subr.mxu0 0.0
      %1262 = vmatpush1.msra.mxu0 0.0
      %1263 = vmatprep.subr.mxu0 0.0
      %1264 = vmatpush1.msra.mxu0 0.0
      %1265 = vmatprep.subr.mxu0 0.0
      %1266 = vmatpush1.msra.mxu0 0.0
      %1267 = vmatprep.subr.mxu0 0.0
      %1268 = vmatpush1.msra.mxu0 0.0
      %1269 = vmatprep.subr.mxu0 0.0
      %1270 = vmatpush1.msra.mxu0 0.0
      %1271 = vmatprep.subr.mxu0 0.0
      %1272 = vmatpush1.msra.mxu0 0.0
      %1273 = vmatprep.subr.mxu0 0.0
      %1274 = vmatpush1.msra.mxu0 0.0
      %1275 = vmatprep.subr.mxu0 0.0
      %1276 = vmatpush1.msra.mxu0 0.0
      %1277 = vmatprep.subr.mxu0 0.0
      %1278 = vmatpush1.msra.mxu0 0.0
      %1279 = vmatprep.subr.mxu0 0.0
      %1280 = vmatpush1.msra.mxu0 0.0
      %1281 = vmatprep.subr.mxu0 0.0
      %1282 = vmatpush1.msra.mxu0 0.0
      %1283 = vmatprep.subr.mxu0 0.0
      %1284 = vmatpush1.msra.mxu0 0.0
      %1285 = vmatprep.subr.mxu0 0.0
      %1286 = vmatpush1.msra.mxu0 0.0
      %1287 = vmatprep.subr.mxu0 0.0
      %1288 = vmatpush1.msra.mxu0 0.0
      %1289 = vmatprep.subr.mxu0 0.0
      %1290 = vmatpush1.msra.mxu0 0.0
      %1291 = vmatprep.subr.mxu0 0.0
      %1292 = vmatpush1.msra.mxu0 0.0
      %1293 = vmatprep.mubr.f32.mxu0 0.0
      %1294 = vmatmul.mubr.f32.gmra.mrb[0].mxu0 %v1227
      %v1295 = vpop.f32.mrb[0].mxu0
      %v1296 = vadd.f32 %v238, %v1295
      %v1297 = vpop.f32.mrb[0].mxu0
      %1298 = vdwg.mxu0
      %1299 = vmatprep.subr.mxu0 0.0
      %1300 = vmatpush1.msra.mxu0 %v213
      %1301 = vmatprep.subr.mxu0 0.0
      %1302 = vmatpush1.msra.mxu0 %v214
      %1303 = vmatprep.subr.mxu0 0.0
      %1304 = vmatpush1.msra.mxu0 %v215
      %1305 = vmatprep.subr.mxu0 0.0
      %1306 = vmatpush1.msra.mxu0 %v216
      %1307 = vmatprep.subr.mxu0 0.0
      %1308 = vmatpush1.msra.mxu0 0.0
      %1309 = vmatprep.subr.mxu0 0.0
      %1310 = vmatpush1.msra.mxu0 0.0
      %1311 = vmatprep.subr.mxu0 0.0
      %1312 = vmatpush1.msra.mxu0 0.0
      %1313 = vmatprep.subr.mxu0 0.0
      %1314 = vmatpush1.msra.mxu0 0.0
      %1315 = vmatprep.subr.mxu0 0.0
      %1316 = vmatpush1.msra.mxu0 0.0
      %1317 = vmatprep.subr.mxu0 0.0
      %1318 = vmatpush1.msra.mxu0 0.0
      %1319 = vmatprep.subr.mxu0 0.0
      %1320 = vmatpush1.msra.mxu0 0.0
      %1321 = vmatprep.subr.mxu0 0.0
      %1322 = vmatpush1.msra.mxu0 0.0
      %1323 = vmatprep.subr.mxu0 0.0
      %1324 = vmatpush1.msra.mxu0 0.0
      %1325 = vmatprep.subr.mxu0 0.0
      %1326 = vmatpush1.msra.mxu0 0.0
      %1327 = vmatprep.subr.mxu0 0.0
      %1328 = vmatpush1.msra.mxu0 0.0
      %1329 = vmatprep.subr.mxu0 0.0
      %1330 = vmatpush1.msra.mxu0 0.0
      %1331 = vmatprep.subr.mxu0 0.0
      %1332 = vmatpush1.msra.mxu0 0.0
      %1333 = vmatprep.subr.mxu0 0.0
      %1334 = vmatpush1.msra.mxu0 0.0
      %1335 = vmatprep.subr.mxu0 0.0
      %1336 = vmatpush1.msra.mxu0 0.0
      %1337 = vmatprep.subr.mxu0 0.0
      %1338 = vmatpush1.msra.mxu0 0.0
      %1339 = vmatprep.subr.mxu0 0.0
      %1340 = vmatpush1.msra.mxu0 0.0
      %1341 = vmatprep.subr.mxu0 0.0
      %1342 = vmatpush1.msra.mxu0 0.0
      %1343 = vmatprep.subr.mxu0 0.0
      %1344 = vmatpush1.msra.mxu0 0.0
      %1345 = vmatprep.subr.mxu0 0.0
      %1346 = vmatpush1.msra.mxu0 0.0
      %1347 = vmatprep.subr.mxu0 0.0
      %1348 = vmatpush1.msra.mxu0 0.0
      %1349 = vmatprep.subr.mxu0 0.0
      %1350 = vmatpush1.msra.mxu0 0.0
      %1351 = vmatprep.subr.mxu0 0.0
      %1352 = vmatpush1.msra.mxu0 0.0
      %1353 = vmatprep.subr.mxu0 0.0
      %1354 = vmatpush1.msra.mxu0 0.0
      %1355 = vmatprep.subr.mxu0 0.0
      %1356 = vmatpush1.msra.mxu0 0.0
      %1357 = vmatprep.subr.mxu0 0.0
      %1358 = vmatpush1.msra.mxu0 0.0
      %1359 = vmatprep.subr.mxu0 0.0
      %1360 = vmatpush1.msra.mxu0 0.0
      %1361 = vmatprep.subr.mxu0 0.0
      %1362 = vmatpush1.msra.mxu0 0.0
      %1363 = vmatprep.mubr.f32.mxu0 0.0
      %1364 = vmatmul.mubr.f32.gmra.mrb[0].mxu0 %v1227
      %v1365 = vpop.f32.mrb[0].mxu0
      %v1366 = vadd.f32 %v318, %v1365
      %v1367 = vpop.f32.mrb[0].mxu0
      %1368 = vdwg.mxu0
      %1369 = vmatprep.subr.mxu0 0.0
      %1370 = vmatpush1.msra.mxu0 %v218
      %1371 = vmatprep.subr.mxu0 0.0
      %1372 = vmatpush1.msra.mxu0 %v219
      %1373 = vmatprep.subr.mxu0 0.0
      %1374 = vmatpush1.msra.mxu0 %v220
      %1375 = vmatprep.subr.mxu0 0.0
      %1376 = vmatpush1.msra.mxu0 %v221
      %1377 = vmatprep.subr.mxu0 0.0
      %1378 = vmatpush1.msra.mxu0 0.0
      %1379 = vmatprep.subr.mxu0 0.0
      %1380 = vmatpush1.msra.mxu0 0.0
      %1381 = vmatprep.subr.mxu0 0.0
      %1382 = vmatpush1.msra.mxu0 0.0
      %1383 = vmatprep.subr.mxu0 0.0
      %1384 = vmatpush1.msra.mxu0 0.0
      %1385 = vmatprep.subr.mxu0 0.0
      %1386 = vmatpush1.msra.mxu0 0.0
      %1387 = vmatprep.subr.mxu0 0.0
      %1388 = vmatpush1.msra.mxu0 0.0
      %1389 = vmatprep.subr.mxu0 0.0
      %1390 = vmatpush1.msra.mxu0 0.0
      %1391 = vmatprep.subr.mxu0 0.0
      %1392 = vmatpush1.msra.mxu0 0.0
      %1393 = vmatprep.subr.mxu0 0.0
      %1394 = vmatpush1.msra.mxu0 0.0
      %1395 = vmatprep.subr.mxu0 0.0
      %1396 = vmatpush1.msra.mxu0 0.0
      %1397 = vmatprep.subr.mxu0 0.0
      %1398 = vmatpush1.msra.mxu0 0.0
      %1399 = vmatprep.subr.mxu0 0.0
      %1400 = vmatpush1.msra.mxu0 0.0
      %1401 = vmatprep.subr.mxu0 0.0
      %1402 = vmatpush1.msra.mxu0 0.0
      %1403 = vmatprep.subr.mxu0 0.0
      %1404 = vmatpush1.msra.mxu0 0.0
      %1405 = vmatprep.subr.mxu0 0.0
      %1406 = vmatpush1.msra.mxu0 0.0
      %1407 = vmatprep.subr.mxu0 0.0
      %1408 = vmatpush1.msra.mxu0 0.0
      %1409 = vmatprep.subr.mxu0 0.0
      %1410 = vmatpush1.msra.mxu0 0.0
      %1411 = vmatprep.subr.mxu0 0.0
      %1412 = vmatpush1.msra.mxu0 0.0
      %1413 = vmatprep.subr.mxu0 0.0
      %1414 = vmatpush1.msra.mxu0 0.0
      %1415 = vmatprep.subr.mxu0 0.0
      %1416 = vmatpush1.msra.mxu0 0.0
      %1417 = vmatprep.subr.mxu0 0.0
      %1418 = vmatpush1.msra.mxu0 0.0
      %1419 = vmatprep.subr.mxu0 0.0
      %1420 = vmatpush1.msra.mxu0 0.0
      %1421 = vmatprep.subr.mxu0 0.0
      %1422 = vmatpush1.msra.mxu0 0.0
      %1423 = vmatprep.subr.mxu0 0.0
      %1424 = vmatpush1.msra.mxu0 0.0
      %1425 = vmatprep.subr.mxu0 0.0
      %1426 = vmatpush1.msra.mxu0 0.0
      %1427 = vmatprep.subr.mxu0 0.0
      %1428 = vmatpush1.msra.mxu0 0.0
      %1429 = vmatprep.subr.mxu0 0.0
      %1430 = vmatpush1.msra.mxu0 0.0
      %1431 = vmatprep.subr.mxu0 0.0
      %1432 = vmatpush1.msra.mxu0 0.0
      %1433 = vmatprep.mubr.f32.mxu0 0.0
      %1434 = vmatmul.mubr.f32.gmra.mrb[0].mxu0 %v1227
      %v1435 = vpop.f32.mrb[0].mxu0
      %v1436 = vadd.f32 %v394, %v1435
      %v1437 = vpop.f32.mrb[0].mxu0
      %1438 = vdwg.mxu0
      %v1439 = vadd.f32 %v1223, %v1296
      %v1440 = vxor.u32 %v1439, 2147483648
      %v1441 = vmul.f32 %v1440, 1.442695
      %v1442 = vpow.pop %v1441
      %v1443 = vadd.f32 %v1442, 1.0
      %v1444 = vrcp.pop %v1443
      %v1445 = vmul.f32 1.0, %v1444
      %v1446 = vadd.f32 %v1224, %v1366
      %v1447 = vxor.u32 %v1446, 2147483648
      %v1448 = vmul.f32 %v1447, 1.442695
      %v1449 = vpow.pop %v1448
      %v1450 = vadd.f32 %v1449, 1.0
      %v1451 = vrcp.pop %v1450
      %v1452 = vmul.f32 1.0, %v1451
      %v1453 = vmul.f32 %v1445, %v1436
      %v1454 = vadd.f32 %v1225, %v1453
      %v1455 = vtanh.pop %v1454
      %v1456 = vsub.f32 1.0, %v1452
      %v1457 = vmul.f32 %v1456, %v1455
      %v1458 = vmul.f32 %v1452, %v1216
      %v1459 = vadd.f32 %v1457, %v1458
      %s1460 = smul.u32 %s1220, 2
      %s1461 = scalar_lea.vmem %s207, %s1460
      %1462 = vst.msk [vmem:[%s1461] sm:$0x3] %vm489, %v1459
      %s1463 = scalar_select %p227, 5, 2
      %s1464 = smul.u32 %s1463, 6
      %s1465 = scalar_lea.vmem %s193, %s1464
      %v1466 = vld [vmem:[%s1465] sm:$0x3]
      %v1467 = vld [vmem:[%s1465 + $0x2] sm:$0x3]
      %v1468 = vld [vmem:[%s1465 + $0x4] sm:$0x3]
      %v1470 = vsel %vm240, %v1459, 0
      %1472 = vmatprep.subr.mxu0 0.0
      %1473 = vmatpush1.msra.mxu0 %v208
      %1474 = vmatprep.subr.mxu0 0.0
      %1475 = vmatpush1.msra.mxu0 %v209
      %1476 = vmatprep.subr.mxu0 0.0
      %1477 = vmatpush1.msra.mxu0 %v210
      %1478 = vmatprep.subr.mxu0 0.0
      %1479 = vmatpush1.msra.mxu0 %v211
      %1480 = vmatprep.subr.mxu0 0.0
      %1481 = vmatpush1.msra.mxu0 0.0
      %1482 = vmatprep.subr.mxu0 0.0
      %1483 = vmatpush1.msra.mxu0 0.0
      %1484 = vmatprep.subr.mxu0 0.0
      %1485 = vmatpush1.msra.mxu0 0.0
      %1486 = vmatprep.subr.mxu0 0.0
      %1487 = vmatpush1.msra.mxu0 0.0
      %1488 = vmatprep.subr.mxu0 0.0
      %1489 = vmatpush1.msra.mxu0 0.0
      %1490 = vmatprep.subr.mxu0 0.0
      %1491 = vmatpush1.msra.mxu0 0.0
      %1492 = vmatprep.subr.mxu0 0.0
      %1493 = vmatpush1.msra.mxu0 0.0
      %1494 = vmatprep.subr.mxu0 0.0
      %1495 = vmatpush1.msra.mxu0 0.0
      %1496 = vmatprep.subr.mxu0 0.0
      %1497 = vmatpush1.msra.mxu0 0.0
      %1498 = vmatprep.subr.mxu0 0.0
      %1499 = vmatpush1.msra.mxu0 0.0
      %1500 = vmatprep.subr.mxu0 0.0
      %1501 = vmatpush1.msra.mxu0 0.0
      %1502 = vmatprep.subr.mxu0 0.0
      %1503 = vmatpush1.msra.mxu0 0.0
      %1504 = vmatprep.subr.mxu0 0.0
      %1505 = vmatpush1.msra.mxu0 0.0
      %1506 = vmatprep.subr.mxu0 0.0
      %1507 = vmatpush1.msra.mxu0 0.0
      %1508 = vmatprep.subr.mxu0 0.0
      %1509 = vmatpush1.msra.mxu0 0.0
      %1510 = vmatprep.subr.mxu0 0.0
      %1511 = vmatpush1.msra.mxu0 0.0
      %1512 = vmatprep.subr.mxu0 0.0
      %1513 = vmatpush1.msra.mxu0 0.0
      %1514 = vmatprep.subr.mxu0 0.0
      %1515 = vmatpush1.msra.mxu0 0.0
      %1516 = vmatprep.subr.mxu0 0.0
      %1517 = vmatpush1.msra.mxu0 0.0
      %1518 = vmatprep.subr.mxu0 0.0
      %1519 = vmatpush1.msra.mxu0 0.0
      %1520 = vmatprep.subr.mxu0 0.0
      %1521 = vmatpush1.msra.mxu0 0.0
      %1522 = vmatprep.subr.mxu0 0.0
      %1523 = vmatpush1.msra.mxu0 0.0
      %1524 = vmatprep.subr.mxu0 0.0
      %1525 = vmatpush1.msra.mxu0 0.0
      %1526 = vmatprep.subr.mxu0 0.0
      %1527 = vmatpush1.msra.mxu0 0.0
      %1528 = vmatprep.subr.mxu0 0.0
      %1529 = vmatpush1.msra.mxu0 0.0
      %1530 = vmatprep.subr.mxu0 0.0
      %1531 = vmatpush1.msra.mxu0 0.0
      %1532 = vmatprep.subr.mxu0 0.0
      %1533 = vmatpush1.msra.mxu0 0.0
      %1534 = vmatprep.subr.mxu0 0.0
      %1535 = vmatpush1.msra.mxu0 0.0
      %1536 = vmatprep.mubr.f32.mxu0 0.0
      %1537 = vmatmul.mubr.f32.gmra.mrb[0].mxu0 %v1470
      %v1538 = vpop.f32.mrb[0].mxu0
      %v1539 = vadd.f32 %v238, %v1538
      %v1540 = vpop.f32.mrb[0].mxu0
      %1541 = vdwg.mxu0
      %1542 = vmatprep.subr.mxu0 0.0
      %1543 = vmatpush1.msra.mxu0 %v213
      %1544 = vmatprep.subr.mxu0 0.0
      %1545 = vmatpush1.msra.mxu0 %v214
      %1546 = vmatprep.subr.mxu0 0.0
      %1547 = vmatpush1.msra.mxu0 %v215
      %1548 = vmatprep.subr.mxu0 0.0
      %1549 = vmatpush1.msra.mxu0 %v216
      %1550 = vmatprep.subr.mxu0 0.0
      %1551 = vmatpush1.msra.mxu0 0.0
      %1552 = vmatprep.subr.mxu0 0.0
      %1553 = vmatpush1.msra.mxu0 0.0
      %1554 = vmatprep.subr.mxu0 0.0
      %1555 = vmatpush1.msra.mxu0 0.0
      %1556 = vmatprep.subr.mxu0 0.0
      %1557 = vmatpush1.msra.mxu0 0.0
      %1558 = vmatprep.subr.mxu0 0.0
      %1559 = vmatpush1.msra.mxu0 0.0
      %1560 = vmatprep.subr.mxu0 0.0
      %1561 = vmatpush1.msra.mxu0 0.0
      %1562 = vmatprep.subr.mxu0 0.0
      %1563 = vmatpush1.msra.mxu0 0.0
      %1564 = vmatprep.subr.mxu0 0.0
      %1565 = vmatpush1.msra.mxu0 0.0
      %1566 = vmatprep.subr.mxu0 0.0
      %1567 = vmatpush1.msra.mxu0 0.0
      %1568 = vmatprep.subr.mxu0 0.0
      %1569 = vmatpush1.msra.mxu0 0.0
      %1570 = vmatprep.subr.mxu0 0.0
      %1571 = vmatpush1.msra.mxu0 0.0
      %1572 = vmatprep.subr.mxu0 0.0
      %1573 = vmatpush1.msra.mxu0 0.0
      %1574 = vmatprep.subr.mxu0 0.0
      %1575 = vmatpush1.msra.mxu0 0.0
      %1576 = vmatprep.subr.mxu0 0.0
      %1577 = vmatpush1.msra.mxu0 0.0
      %1578 = vmatprep.subr.mxu0 0.0
      %1579 = vmatpush1.msra.mxu0 0.0
      %1580 = vmatprep.subr.mxu0 0.0
      %1581 = vmatpush1.msra.mxu0 0.0
      %1582 = vmatprep.subr.mxu0 0.0
      %1583 = vmatpush1.msra.mxu0 0.0
      %1584 = vmatprep.subr.mxu0 0.0
      %1585 = vmatpush1.msra.mxu0 0.0
      %1586 = vmatprep.subr.mxu0 0.0
      %1587 = vmatpush1.msra.mxu0 0.0
      %1588 = vmatprep.subr.mxu0 0.0
      %1589 = vmatpush1.msra.mxu0 0.0
      %1590 = vmatprep.subr.mxu0 0.0
      %1591 = vmatpush1.msra.mxu0 0.0
      %1592 = vmatprep.subr.mxu0 0.0
      %1593 = vmatpush1.msra.mxu0 0.0
      %1594 = vmatprep.subr.mxu0 0.0
      %1595 = vmatpush1.msra.mxu0 0.0
      %1596 = vmatprep.subr.mxu0 0.0
      %1597 = vmatpush1.msra.mxu0 0.0
      %1598 = vmatprep.subr.mxu0 0.0
      %1599 = vmatpush1.msra.mxu0 0.0
      %1600 = vmatprep.subr.mxu0 0.0
      %1601 = vmatpush1.msra.mxu0 0.0
      %1602 = vmatprep.subr.mxu0 0.0
      %1603 = vmatpush1.msra.mxu0 0.0
      %1604 = vmatprep.subr.mxu0 0.0
      %1605 = vmatpush1.msra.mxu0 0.0
      %1606 = vmatprep.mubr.f32.mxu0 0.0
      %1607 = vmatmul.mubr.f32.gmra.mrb[0].mxu0 %v1470
      %v1608 = vpop.f32.mrb[0].mxu0
      %v1609 = vadd.f32 %v318, %v1608
      %v1610 = vpop.f32.mrb[0].mxu0
      %1611 = vdwg.mxu0
      %1612 = vmatprep.subr.mxu0 0.0
      %1613 = vmatpush1.msra.mxu0 %v218
      %1614 = vmatprep.subr.mxu0 0.0
      %1615 = vmatpush1.msra.mxu0 %v219
      %1616 = vmatprep.subr.mxu0 0.0
      %1617 = vmatpush1.msra.mxu0 %v220
      %1618 = vmatprep.subr.mxu0 0.0
      %1619 = vmatpush1.msra.mxu0 %v221
      %1620 = vmatprep.subr.mxu0 0.0
      %1621 = vmatpush1.msra.mxu0 0.0
      %1622 = vmatprep.subr.mxu0 0.0
      %1623 = vmatpush1.msra.mxu0 0.0
      %1624 = vmatprep.subr.mxu0 0.0
      %1625 = vmatpush1.msra.mxu0 0.0
      %1626 = vmatprep.subr.mxu0 0.0
      %1627 = vmatpush1.msra.mxu0 0.0
      %1628 = vmatprep.subr.mxu0 0.0
      %1629 = vmatpush1.msra.mxu0 0.0
      %1630 = vmatprep.subr.mxu0 0.0
      %1631 = vmatpush1.msra.mxu0 0.0
      %1632 = vmatprep.subr.mxu0 0.0
      %1633 = vmatpush1.msra.mxu0 0.0
      %1634 = vmatprep.subr.mxu0 0.0
      %1635 = vmatpush1.msra.mxu0 0.0
      %1636 = vmatprep.subr.mxu0 0.0
      %1637 = vmatpush1.msra.mxu0 0.0
      %1638 = vmatprep.subr.mxu0 0.0
      %1639 = vmatpush1.msra.mxu0 0.0
      %1640 = vmatprep.subr.mxu0 0.0
      %1641 = vmatpush1.msra.mxu0 0.0
      %1642 = vmatprep.subr.mxu0 0.0
      %1643 = vmatpush1.msra.mxu0 0.0
      %1644 = vmatprep.subr.mxu0 0.0
      %1645 = vmatpush1.msra.mxu0 0.0
      %1646 = vmatprep.subr.mxu0 0.0
      %1647 = vmatpush1.msra.mxu0 0.0
      %1648 = vmatprep.subr.mxu0 0.0
      %1649 = vmatpush1.msra.mxu0 0.0
      %1650 = vmatprep.subr.mxu0 0.0
      %1651 = vmatpush1.msra.mxu0 0.0
      %1652 = vmatprep.subr.mxu0 0.0
      %1653 = vmatpush1.msra.mxu0 0.0
      %1654 = vmatprep.subr.mxu0 0.0
      %1655 = vmatpush1.msra.mxu0 0.0
      %1656 = vmatprep.subr.mxu0 0.0
      %1657 = vmatpush1.msra.mxu0 0.0
      %1658 = vmatprep.subr.mxu0 0.0
      %1659 = vmatpush1.msra.mxu0 0.0
      %1660 = vmatprep.subr.mxu0 0.0
      %1661 = vmatpush1.msra.mxu0 0.0
      %1662 = vmatprep.subr.mxu0 0.0
      %1663 = vmatpush1.msra.mxu0 0.0
      %1664 = vmatprep.subr.mxu0 0.0
      %1665 = vmatpush1.msra.mxu0 0.0
      %1666 = vmatprep.subr.mxu0 0.0
      %1667 = vmatpush1.msra.mxu0 0.0
      %1668 = vmatprep.subr.mxu0 0.0
      %1669 = vmatpush1.msra.mxu0 0.0
      %1670 = vmatprep.subr.mxu0 0.0
      %1671 = vmatpush1.msra.mxu0 0.0
      %1672 = vmatprep.subr.mxu0 0.0
      %1673 = vmatpush1.msra.mxu0 0.0
      %1674 = vmatprep.subr.mxu0 0.0
      %1675 = vmatpush1.msra.mxu0 0.0
      %1676 = vmatprep.mubr.f32.mxu0 0.0
      %1677 = vmatmul.mubr.f32.gmra.mrb[0].mxu0 %v1470
      %v1678 = vpop.f32.mrb[0].mxu0
      %v1679 = vadd.f32 %v394, %v1678
      %v1680 = vpop.f32.mrb[0].mxu0
      %1681 = vdwg.mxu0
      %v1682 = vadd.f32 %v1466, %v1539
      %v1683 = vxor.u32 %v1682, 2147483648
      %v1684 = vmul.f32 %v1683, 1.442695
      %v1685 = vpow.pop %v1684
      %v1686 = vadd.f32 %v1685, 1.0
      %v1687 = vrcp.pop %v1686
      %v1688 = vmul.f32 1.0, %v1687
      %v1689 = vadd.f32 %v1467, %v1609
      %v1690 = vxor.u32 %v1689, 2147483648
      %v1691 = vmul.f32 %v1690, 1.442695
      %v1692 = vpow.pop %v1691
      %v1693 = vadd.f32 %v1692, 1.0
      %v1694 = vrcp.pop %v1693
      %v1695 = vmul.f32 1.0, %v1694
      %v1696 = vmul.f32 %v1688, %v1679
      %v1697 = vadd.f32 %v1468, %v1696
      %v1698 = vtanh.pop %v1697
      %v1699 = vsub.f32 1.0, %v1695
      %v1700 = vmul.f32 %v1699, %v1698
      %v1701 = vmul.f32 %v1695, %v1459
      %v1702 = vadd.f32 %v1700, %v1701
      %s1703 = smul.u32 %s1463, 2
      %s1704 = scalar_lea.vmem %s207, %s1703
      %1705 = vst.msk [vmem:[%s1704] sm:$0x3] %vm489, %v1702
      %s1706 = scalar_select %p227, 6, 1
      %s1707 = smul.u32 %s1706, 6
      %s1708 = scalar_lea.vmem %s193, %s1707
      %v1709 = vld [vmem:[%s1708] sm:$0x3]
      %v1710 = vld [vmem:[%s1708 + $0x2] sm:$0x3]
      %v1711 = vld [vmem:[%s1708 + $0x4] sm:$0x3]
      %v1713 = vsel %vm240, %v1702, 0
      %1715 = vmatprep.subr.mxu0 0.0
      %1716 = vmatpush1.msra.mxu0 %v208
      %1717 = vmatprep.subr.mxu0 0.0
      %1718 = vmatpush1.msra.mxu0 %v209
      %1719 = vmatprep.subr.mxu0 0.0
      %1720 = vmatpush1.msra.mxu0 %v210
      %1721 = vmatprep.subr.mxu0 0.0
      %1722 = vmatpush1.msra.mxu0 %v211
      %1723 = vmatprep.subr.mxu0 0.0
      %1724 = vmatpush1.msra.mxu0 0.0
      %1725 = vmatprep.subr.mxu0 0.0
      %1726 = vmatpush1.msra.mxu0 0.0
      %1727 = vmatprep.subr.mxu0 0.0
      %1728 = vmatpush1.msra.mxu0 0.0
      %1729 = vmatprep.subr.mxu0 0.0
      %1730 = vmatpush1.msra.mxu0 0.0
      %1731 = vmatprep.subr.mxu0 0.0
      %1732 = vmatpush1.msra.mxu0 0.0
      %1733 = vmatprep.subr.mxu0 0.0
      %1734 = vmatpush1.msra.mxu0 0.0
      %1735 = vmatprep.subr.mxu0 0.0
      %1736 = vmatpush1.msra.mxu0 0.0
      %1737 = vmatprep.subr.mxu0 0.0
      %1738 = vmatpush1.msra.mxu0 0.0
      %1739 = vmatprep.subr.mxu0 0.0
      %1740 = vmatpush1.msra.mxu0 0.0
      %1741 = vmatprep.subr.mxu0 0.0
      %1742 = vmatpush1.msra.mxu0 0.0
      %1743 = vmatprep.subr.mxu0 0.0
      %1744 = vmatpush1.msra.mxu0 0.0
      %1745 = vmatprep.subr.mxu0 0.0
      %1746 = vmatpush1.msra.mxu0 0.0
      %1747 = vmatprep.subr.mxu0 0.0
      %1748 = vmatpush1.msra.mxu0 0.0
      %1749 = vmatprep.subr.mxu0 0.0
      %1750 = vmatpush1.msra.mxu0 0.0
      %1751 = vmatprep.subr.mxu0 0.0
      %1752 = vmatpush1.msra.mxu0 0.0
      %1753 = vmatprep.subr.mxu0 0.0
      %1754 = vmatpush1.msra.mxu0 0.0
      %1755 = vmatprep.subr.mxu0 0.0
      %1756 = vmatpush1.msra.mxu0 0.0
      %1757 = vmatprep.subr.mxu0 0.0
      %1758 = vmatpush1.msra.mxu0 0.0
      %1759 = vmatprep.subr.mxu0 0.0
      %1760 = vmatpush1.msra.mxu0 0.0
      %1761 = vmatprep.subr.mxu0 0.0
      %1762 = vmatpush1.msra.mxu0 0.0
      %1763 = vmatprep.subr.mxu0 0.0
      %1764 = vmatpush1.msra.mxu0 0.0
      %1765 = vmatprep.subr.mxu0 0.0
      %1766 = vmatpush1.msra.mxu0 0.0
      %1767 = vmatprep.subr.mxu0 0.0
      %1768 = vmatpush1.msra.mxu0 0.0
      %1769 = vmatprep.subr.mxu0 0.0
      %1770 = vmatpush1.msra.mxu0 0.0
      %1771 = vmatprep.subr.mxu0 0.0
      %1772 = vmatpush1.msra.mxu0 0.0
      %1773 = vmatprep.subr.mxu0 0.0
      %1774 = vmatpush1.msra.mxu0 0.0
      %1775 = vmatprep.subr.mxu0 0.0
      %1776 = vmatpush1.msra.mxu0 0.0
      %1777 = vmatprep.subr.mxu0 0.0
      %1778 = vmatpush1.msra.mxu0 0.0
      %1779 = vmatprep.mubr.f32.mxu0 0.0
      %1780 = vmatmul.mubr.f32.gmra.mrb[0].mxu0 %v1713
      %v1781 = vpop.f32.mrb[0].mxu0
      %v1782 = vadd.f32 %v238, %v1781
      %v1783 = vpop.f32.mrb[0].mxu0
      %1784 = vdwg.mxu0
      %1785 = vmatprep.subr.mxu0 0.0
      %1786 = vmatpush1.msra.mxu0 %v213
      %1787 = vmatprep.subr.mxu0 0.0
      %1788 = vmatpush1.msra.mxu0 %v214
      %1789 = vmatprep.subr.mxu0 0.0
      %1790 = vmatpush1.msra.mxu0 %v215
      %1791 = vmatprep.subr.mxu0 0.0
      %1792 = vmatpush1.msra.mxu0 %v216
      %1793 = vmatprep.subr.mxu0 0.0
      %1794 = vmatpush1.msra.mxu0 0.0
      %1795 = vmatprep.subr.mxu0 0.0
      %1796 = vmatpush1.msra.mxu0 0.0
      %1797 = vmatprep.subr.mxu0 0.0
      %1798 = vmatpush1.msra.mxu0 0.0
      %1799 = vmatprep.subr.mxu0 0.0
      %1800 = vmatpush1.msra.mxu0 0.0
      %1801 = vmatprep.subr.mxu0 0.0
      %1802 = vmatpush1.msra.mxu0 0.0
      %1803 = vmatprep.subr.mxu0 0.0
      %1804 = vmatpush1.msra.mxu0 0.0
      %1805 = vmatprep.subr.mxu0 0.0
      %1806 = vmatpush1.msra.mxu0 0.0
      %1807 = vmatprep.subr.mxu0 0.0
      %1808 = vmatpush1.msra.mxu0 0.0
      %1809 = vmatprep.subr.mxu0 0.0
      %1810 = vmatpush1.msra.mxu0 0.0
      %1811 = vmatprep.subr.mxu0 0.0
      %1812 = vmatpush1.msra.mxu0 0.0
      %1813 = vmatprep.subr.mxu0 0.0
      %1814 = vmatpush1.msra.mxu0 0.0
      %1815 = vmatprep.subr.mxu0 0.0
      %1816 = vmatpush1.msra.mxu0 0.0
      %1817 = vmatprep.subr.mxu0 0.0
      %1818 = vmatpush1.msra.mxu0 0.0
      %1819 = vmatprep.subr.mxu0 0.0
      %1820 = vmatpush1.msra.mxu0 0.0
      %1821 = vmatprep.subr.mxu0 0.0
      %1822 = vmatpush1.msra.mxu0 0.0
      %1823 = vmatprep.subr.mxu0 0.0
      %1824 = vmatpush1.msra.mxu0 0.0
      %1825 = vmatprep.subr.mxu0 0.0
      %1826 = vmatpush1.msra.mxu0 0.0
      %1827 = vmatprep.subr.mxu0 0.0
      %1828 = vmatpush1.msra.mxu0 0.0
      %1829 = vmatprep.subr.mxu0 0.0
      %1830 = vmatpush1.msra.mxu0 0.0
      %1831 = vmatprep.subr.mxu0 0.0
      %1832 = vmatpush1.msra.mxu0 0.0
      %1833 = vmatprep.subr.mxu0 0.0
      %1834 = vmatpush1.msra.mxu0 0.0
      %1835 = vmatprep.subr.mxu0 0.0
      %1836 = vmatpush1.msra.mxu0 0.0
      %1837 = vmatprep.subr.mxu0 0.0
      %1838 = vmatpush1.msra.mxu0 0.0
      %1839 = vmatprep.subr.mxu0 0.0
      %1840 = vmatpush1.msra.mxu0 0.0
      %1841 = vmatprep.subr.mxu0 0.0
      %1842 = vmatpush1.msra.mxu0 0.0
      %1843 = vmatprep.subr.mxu0 0.0
      %1844 = vmatpush1.msra.mxu0 0.0
      %1845 = vmatprep.subr.mxu0 0.0
      %1846 = vmatpush1.msra.mxu0 0.0
      %1847 = vmatprep.subr.mxu0 0.0
      %1848 = vmatpush1.msra.mxu0 0.0
      %1849 = vmatprep.mubr.f32.mxu0 0.0
      %1850 = vmatmul.mubr.f32.gmra.mrb[0].mxu0 %v1713
      %v1851 = vpop.f32.mrb[0].mxu0
      %v1852 = vadd.f32 %v318, %v1851
      %v1853 = vpop.f32.mrb[0].mxu0
      %1854 = vdwg.mxu0
      %1855 = vmatprep.subr.mxu0 0.0
      %1856 = vmatpush1.msra.mxu0 %v218
      %1857 = vmatprep.subr.mxu0 0.0
      %1858 = vmatpush1.msra.mxu0 %v219
      %1859 = vmatprep.subr.mxu0 0.0
      %1860 = vmatpush1.msra.mxu0 %v220
      %1861 = vmatprep.subr.mxu0 0.0
      %1862 = vmatpush1.msra.mxu0 %v221
      %1863 = vmatprep.subr.mxu0 0.0
      %1864 = vmatpush1.msra.mxu0 0.0
      %1865 = vmatprep.subr.mxu0 0.0
      %1866 = vmatpush1.msra.mxu0 0.0
      %1867 = vmatprep.subr.mxu0 0.0
      %1868 = vmatpush1.msra.mxu0 0.0
      %1869 = vmatprep.subr.mxu0 0.0
      %1870 = vmatpush1.msra.mxu0 0.0
      %1871 = vmatprep.subr.mxu0 0.0
      %1872 = vmatpush1.msra.mxu0 0.0
      %1873 = vmatprep.subr.mxu0 0.0
      %1874 = vmatpush1.msra.mxu0 0.0
      %1875 = vmatprep.subr.mxu0 0.0
      %1876 = vmatpush1.msra.mxu0 0.0
      %1877 = vmatprep.subr.mxu0 0.0
      %1878 = vmatpush1.msra.mxu0 0.0
      %1879 = vmatprep.subr.mxu0 0.0
      %1880 = vmatpush1.msra.mxu0 0.0
      %1881 = vmatprep.subr.mxu0 0.0
      %1882 = vmatpush1.msra.mxu0 0.0
      %1883 = vmatprep.subr.mxu0 0.0
      %1884 = vmatpush1.msra.mxu0 0.0
      %1885 = vmatprep.subr.mxu0 0.0
      %1886 = vmatpush1.msra.mxu0 0.0
      %1887 = vmatprep.subr.mxu0 0.0
      %1888 = vmatpush1.msra.mxu0 0.0
      %1889 = vmatprep.subr.mxu0 0.0
      %1890 = vmatpush1.msra.mxu0 0.0
      %1891 = vmatprep.subr.mxu0 0.0
      %1892 = vmatpush1.msra.mxu0 0.0
      %1893 = vmatprep.subr.mxu0 0.0
      %1894 = vmatpush1.msra.mxu0 0.0
      %1895 = vmatprep.subr.mxu0 0.0
      %1896 = vmatpush1.msra.mxu0 0.0
      %1897 = vmatprep.subr.mxu0 0.0
      %1898 = vmatpush1.msra.mxu0 0.0
      %1899 = vmatprep.subr.mxu0 0.0
      %1900 = vmatpush1.msra.mxu0 0.0
      %1901 = vmatprep.subr.mxu0 0.0
      %1902 = vmatpush1.msra.mxu0 0.0
      %1903 = vmatprep.subr.mxu0 0.0
      %1904 = vmatpush1.msra.mxu0 0.0
      %1905 = vmatprep.subr.mxu0 0.0
      %1906 = vmatpush1.msra.mxu0 0.0
      %1907 = vmatprep.subr.mxu0 0.0
      %1908 = vmatpush1.msra.mxu0 0.0
      %1909 = vmatprep.subr.mxu0 0.0
      %1910 = vmatpush1.msra.mxu0 0.0
      %1911 = vmatprep.subr.mxu0 0.0
      %1912 = vmatpush1.msra.mxu0 0.0
      %1913 = vmatprep.subr.mxu0 0.0
      %1914 = vmatpush1.msra.mxu0 0.0
      %1915 = vmatprep.subr.mxu0 0.0
      %1916 = vmatpush1.msra.mxu0 0.0
      %1917 = vmatprep.subr.mxu0 0.0
      %1918 = vmatpush1.msra.mxu0 0.0
      %1919 = vmatprep.mubr.f32.mxu0 0.0
      %1920 = vmatmul.mubr.f32.gmra.mrb[0].mxu0 %v1713
      %v1921 = vpop.f32.mrb[0].mxu0
      %v1922 = vadd.f32 %v394, %v1921
      %v1923 = vpop.f32.mrb[0].mxu0
      %1924 = vdwg.mxu0
      %v1925 = vadd.f32 %v1709, %v1782
      %v1926 = vxor.u32 %v1925, 2147483648
      %v1927 = vmul.f32 %v1926, 1.442695
      %v1928 = vpow.pop %v1927
      %v1929 = vadd.f32 %v1928, 1.0
      %v1930 = vrcp.pop %v1929
      %v1931 = vmul.f32 1.0, %v1930
      %v1932 = vadd.f32 %v1710, %v1852
      %v1933 = vxor.u32 %v1932, 2147483648
      %v1934 = vmul.f32 %v1933, 1.442695
      %v1935 = vpow.pop %v1934
      %v1936 = vadd.f32 %v1935, 1.0
      %v1937 = vrcp.pop %v1936
      %v1938 = vmul.f32 1.0, %v1937
      %v1939 = vmul.f32 %v1931, %v1922
      %v1940 = vadd.f32 %v1711, %v1939
      %v1941 = vtanh.pop %v1940
      %v1942 = vsub.f32 1.0, %v1938
      %v1943 = vmul.f32 %v1942, %v1941
      %v1944 = vmul.f32 %v1938, %v1702
      %v1945 = vadd.f32 %v1943, %v1944
      %s1946 = smul.u32 %s1706, 2
      %s1947 = scalar_lea.vmem %s207, %s1946
      %1948 = vst.msk [vmem:[%s1947] sm:$0x3] %vm489, %v1945
      %s1949 = scalar_select %p227, 7, 0
      %s1950 = smul.u32 %s1949, 6
      %s1951 = scalar_lea.vmem %s193, %s1950
      %v1952 = vld [vmem:[%s1951] sm:$0x3]
      %v1953 = vld [vmem:[%s1951 + $0x2] sm:$0x3]
      %v1954 = vld [vmem:[%s1951 + $0x4] sm:$0x3]
      %v1956 = vsel %vm240, %v1945, 0
      %1958 = vmatprep.subr.mxu0 0.0
      %1959 = vmatpush1.msra.mxu0 %v208
      %1960 = vmatprep.subr.mxu0 0.0
      %1961 = vmatpush1.msra.mxu0 %v209
      %1962 = vmatprep.subr.mxu0 0.0
      %1963 = vmatpush1.msra.mxu0 %v210
      %1964 = vmatprep.subr.mxu0 0.0
      %1965 = vmatpush1.msra.mxu0 %v211
      %1966 = vmatprep.subr.mxu0 0.0
      %1967 = vmatpush1.msra.mxu0 0.0
      %1968 = vmatprep.subr.mxu0 0.0
      %1969 = vmatpush1.msra.mxu0 0.0
      %1970 = vmatprep.subr.mxu0 0.0
      %1971 = vmatpush1.msra.mxu0 0.0
      %1972 = vmatprep.subr.mxu0 0.0
      %1973 = vmatpush1.msra.mxu0 0.0
      %1974 = vmatprep.subr.mxu0 0.0
      %1975 = vmatpush1.msra.mxu0 0.0
      %1976 = vmatprep.subr.mxu0 0.0
      %1977 = vmatpush1.msra.mxu0 0.0
      %1978 = vmatprep.subr.mxu0 0.0
      %1979 = vmatpush1.msra.mxu0 0.0
      %1980 = vmatprep.subr.mxu0 0.0
      %1981 = vmatpush1.msra.mxu0 0.0
      %1982 = vmatprep.subr.mxu0 0.0
      %1983 = vmatpush1.msra.mxu0 0.0
      %1984 = vmatprep.subr.mxu0 0.0
      %1985 = vmatpush1.msra.mxu0 0.0
      %1986 = vmatprep.subr.mxu0 0.0
      %1987 = vmatpush1.msra.mxu0 0.0
      %1988 = vmatprep.subr.mxu0 0.0
      %1989 = vmatpush1.msra.mxu0 0.0
      %1990 = vmatprep.subr.mxu0 0.0
      %1991 = vmatpush1.msra.mxu0 0.0
      %1992 = vmatprep.subr.mxu0 0.0
      %1993 = vmatpush1.msra.mxu0 0.0
      %1994 = vmatprep.subr.mxu0 0.0
      %1995 = vmatpush1.msra.mxu0 0.0
      %1996 = vmatprep.subr.mxu0 0.0
      %1997 = vmatpush1.msra.mxu0 0.0
      %1998 = vmatprep.subr.mxu0 0.0
      %1999 = vmatpush1.msra.mxu0 0.0
      %2000 = vmatprep.subr.mxu0 0.0
      %2001 = vmatpush1.msra.mxu0 0.0
      %2002 = vmatprep.subr.mxu0 0.0
      %2003 = vmatpush1.msra.mxu0 0.0
      %2004 = vmatprep.subr.mxu0 0.0
      %2005 = vmatpush1.msra.mxu0 0.0
      %2006 = vmatprep.subr.mxu0 0.0
      %2007 = vmatpush1.msra.mxu0 0.0
      %2008 = vmatprep.subr.mxu0 0.0
      %2009 = vmatpush1.msra.mxu0 0.0
      %2010 = vmatprep.subr.mxu0 0.0
      %2011 = vmatpush1.msra.mxu0 0.0
      %2012 = vmatprep.subr.mxu0 0.0
      %2013 = vmatpush1.msra.mxu0 0.0
      %2014 = vmatprep.subr.mxu0 0.0
      %2015 = vmatpush1.msra.mxu0 0.0
      %2016 = vmatprep.subr.mxu0 0.0
      %2017 = vmatpush1.msra.mxu0 0.0
      %2018 = vmatprep.subr.mxu0 0.0
      %2019 = vmatpush1.msra.mxu0 0.0
      %2020 = vmatprep.subr.mxu0 0.0
      %2021 = vmatpush1.msra.mxu0 0.0
      %2022 = vmatprep.mubr.f32.mxu0 0.0
      %2023 = vmatmul.mubr.f32.gmra.mrb[0].mxu0 %v1956
      %v2024 = vpop.f32.mrb[0].mxu0
      %v2025 = vadd.f32 %v238, %v2024
      %v2026 = vpop.f32.mrb[0].mxu0
      %2027 = vdwg.mxu0
      %2028 = vmatprep.subr.mxu0 0.0
      %2029 = vmatpush1.msra.mxu0 %v213
      %2030 = vmatprep.subr.mxu0 0.0
      %2031 = vmatpush1.msra.mxu0 %v214
      %2032 = vmatprep.subr.mxu0 0.0
      %2033 = vmatpush1.msra.mxu0 %v215
      %2034 = vmatprep.subr.mxu0 0.0
      %2035 = vmatpush1.msra.mxu0 %v216
      %2036 = vmatprep.subr.mxu0 0.0
      %2037 = vmatpush1.msra.mxu0 0.0
      %2038 = vmatprep.subr.mxu0 0.0
      %2039 = vmatpush1.msra.mxu0 0.0
      %2040 = vmatprep.subr.mxu0 0.0
      %2041 = vmatpush1.msra.mxu0 0.0
      %2042 = vmatprep.subr.mxu0 0.0
      %2043 = vmatpush1.msra.mxu0 0.0
      %2044 = vmatprep.subr.mxu0 0.0
      %2045 = vmatpush1.msra.mxu0 0.0
      %2046 = vmatprep.subr.mxu0 0.0
      %2047 = vmatpush1.msra.mxu0 0.0
      %2048 = vmatprep.subr.mxu0 0.0
      %2049 = vmatpush1.msra.mxu0 0.0
      %2050 = vmatprep.subr.mxu0 0.0
      %2051 = vmatpush1.msra.mxu0 0.0
      %2052 = vmatprep.subr.mxu0 0.0
      %2053 = vmatpush1.msra.mxu0 0.0
      %2054 = vmatprep.subr.mxu0 0.0
      %2055 = vmatpush1.msra.mxu0 0.0
      %2056 = vmatprep.subr.mxu0 0.0
      %2057 = vmatpush1.msra.mxu0 0.0
      %2058 = vmatprep.subr.mxu0 0.0
      %2059 = vmatpush1.msra.mxu0 0.0
      %2060 = vmatprep.subr.mxu0 0.0
      %2061 = vmatpush1.msra.mxu0 0.0
      %2062 = vmatprep.subr.mxu0 0.0
      %2063 = vmatpush1.msra.mxu0 0.0
      %2064 = vmatprep.subr.mxu0 0.0
      %2065 = vmatpush1.msra.mxu0 0.0
      %2066 = vmatprep.subr.mxu0 0.0
      %2067 = vmatpush1.msra.mxu0 0.0
      %2068 = vmatprep.subr.mxu0 0.0
      %2069 = vmatpush1.msra.mxu0 0.0
      %2070 = vmatprep.subr.mxu0 0.0
      %2071 = vmatpush1.msra.mxu0 0.0
      %2072 = vmatprep.subr.mxu0 0.0
      %2073 = vmatpush1.msra.mxu0 0.0
      %2074 = vmatprep.subr.mxu0 0.0
      %2075 = vmatpush1.msra.mxu0 0.0
      %2076 = vmatprep.subr.mxu0 0.0
      %2077 = vmatpush1.msra.mxu0 0.0
      %2078 = vmatprep.subr.mxu0 0.0
      %2079 = vmatpush1.msra.mxu0 0.0
      %2080 = vmatprep.subr.mxu0 0.0
      %2081 = vmatpush1.msra.mxu0 0.0
      %2082 = vmatprep.subr.mxu0 0.0
      %2083 = vmatpush1.msra.mxu0 0.0
      %2084 = vmatprep.subr.mxu0 0.0
      %2085 = vmatpush1.msra.mxu0 0.0
      %2086 = vmatprep.subr.mxu0 0.0
      %2087 = vmatpush1.msra.mxu0 0.0
      %2088 = vmatprep.subr.mxu0 0.0
      %2089 = vmatpush1.msra.mxu0 0.0
      %2090 = vmatprep.subr.mxu0 0.0
      %2091 = vmatpush1.msra.mxu0 0.0
      %2092 = vmatprep.mubr.f32.mxu0 0.0
      %2093 = vmatmul.mubr.f32.gmra.mrb[0].mxu0 %v1956
      %v2094 = vpop.f32.mrb[0].mxu0
      %v2095 = vadd.f32 %v318, %v2094
      %v2096 = vpop.f32.mrb[0].mxu0
      %2097 = vdwg.mxu0
      %2098 = vmatprep.subr.mxu0 0.0
      %2099 = vmatpush1.msra.mxu0 %v218
      %2100 = vmatprep.subr.mxu0 0.0
      %2101 = vmatpush1.msra.mxu0 %v219
      %2102 = vmatprep.subr.mxu0 0.0
      %2103 = vmatpush1.msra.mxu0 %v220
      %2104 = vmatprep.subr.mxu0 0.0
      %2105 = vmatpush1.msra.mxu0 %v221
      %2106 = vmatprep.subr.mxu0 0.0
      %2107 = vmatpush1.msra.mxu0 0.0
      %2108 = vmatprep.subr.mxu0 0.0
      %2109 = vmatpush1.msra.mxu0 0.0
      %2110 = vmatprep.subr.mxu0 0.0
      %2111 = vmatpush1.msra.mxu0 0.0
      %2112 = vmatprep.subr.mxu0 0.0
      %2113 = vmatpush1.msra.mxu0 0.0
      %2114 = vmatprep.subr.mxu0 0.0
      %2115 = vmatpush1.msra.mxu0 0.0
      %2116 = vmatprep.subr.mxu0 0.0
      %2117 = vmatpush1.msra.mxu0 0.0
      %2118 = vmatprep.subr.mxu0 0.0
      %2119 = vmatpush1.msra.mxu0 0.0
      %2120 = vmatprep.subr.mxu0 0.0
      %2121 = vmatpush1.msra.mxu0 0.0
      %2122 = vmatprep.subr.mxu0 0.0
      %2123 = vmatpush1.msra.mxu0 0.0
      %2124 = vmatprep.subr.mxu0 0.0
      %2125 = vmatpush1.msra.mxu0 0.0
      %2126 = vmatprep.subr.mxu0 0.0
      %2127 = vmatpush1.msra.mxu0 0.0
      %2128 = vmatprep.subr.mxu0 0.0
      %2129 = vmatpush1.msra.mxu0 0.0
      %2130 = vmatprep.subr.mxu0 0.0
      %2131 = vmatpush1.msra.mxu0 0.0
      %2132 = vmatprep.subr.mxu0 0.0
      %2133 = vmatpush1.msra.mxu0 0.0
      %2134 = vmatprep.subr.mxu0 0.0
      %2135 = vmatpush1.msra.mxu0 0.0
      %2136 = vmatprep.subr.mxu0 0.0
      %2137 = vmatpush1.msra.mxu0 0.0
      %2138 = vmatprep.subr.mxu0 0.0
      %2139 = vmatpush1.msra.mxu0 0.0
      %2140 = vmatprep.subr.mxu0 0.0
      %2141 = vmatpush1.msra.mxu0 0.0
      %2142 = vmatprep.subr.mxu0 0.0
      %2143 = vmatpush1.msra.mxu0 0.0
      %2144 = vmatprep.subr.mxu0 0.0
      %2145 = vmatpush1.msra.mxu0 0.0
      %2146 = vmatprep.subr.mxu0 0.0
      %2147 = vmatpush1.msra.mxu0 0.0
      %2148 = vmatprep.subr.mxu0 0.0
      %2149 = vmatpush1.msra.mxu0 0.0
      %2150 = vmatprep.subr.mxu0 0.0
      %2151 = vmatpush1.msra.mxu0 0.0
      %2152 = vmatprep.subr.mxu0 0.0
      %2153 = vmatpush1.msra.mxu0 0.0
      %2154 = vmatprep.subr.mxu0 0.0
      %2155 = vmatpush1.msra.mxu0 0.0
      %2156 = vmatprep.subr.mxu0 0.0
      %2157 = vmatpush1.msra.mxu0 0.0
      %2158 = vmatprep.subr.mxu0 0.0
      %2159 = vmatpush1.msra.mxu0 0.0
      %2160 = vmatprep.subr.mxu0 0.0
      %2161 = vmatpush1.msra.mxu0 0.0
      %2162 = vmatprep.mubr.f32.mxu0 0.0
      %2163 = vmatmul.mubr.f32.gmra.mrb[0].mxu0 %v1956
      %v2164 = vpop.f32.mrb[0].mxu0
      %v2165 = vadd.f32 %v394, %v2164
      %v2166 = vpop.f32.mrb[0].mxu0
      %2167 = vdwg.mxu0
      %v2168 = vadd.f32 %v1952, %v2025
      %v2169 = vxor.u32 %v2168, 2147483648
      %v2170 = vmul.f32 %v2169, 1.442695
      %v2171 = vpow.pop %v2170
      %v2172 = vadd.f32 %v2171, 1.0
      %v2173 = vrcp.pop %v2172
      %v2174 = vmul.f32 1.0, %v2173
      %v2175 = vadd.f32 %v1953, %v2095
      %v2176 = vxor.u32 %v2175, 2147483648
      %v2177 = vmul.f32 %v2176, 1.442695
      %v2178 = vpow.pop %v2177
      %v2179 = vadd.f32 %v2178, 1.0
      %v2180 = vrcp.pop %v2179
      %v2181 = vmul.f32 1.0, %v2180
      %v2182 = vmul.f32 %v2174, %v2165
      %v2183 = vadd.f32 %v1954, %v2182
      %v2184 = vtanh.pop %v2183
      %v2185 = vsub.f32 1.0, %v2181
      %v2186 = vmul.f32 %v2185, %v2184
      %v2187 = vmul.f32 %v2181, %v1945
      %v2188 = vadd.f32 %v2186, %v2187
      %s2189 = smul.u32 %s1949, 2
      %s2190 = scalar_lea.vmem %s207, %s2189
      %2191 = vst.msk [vmem:[%s2190] sm:$0x3] %vm489, %v2188
      %p2192 = scmp.lt.s32.totalorder %s14, 1
      %s2193 = scalar_select %p2192, %s14, 1
      %s2194 = smul.addr %s2193, 8
      %s2195 = smul.addr %s2194, 2
      %s2196 = scalar_lea.vmem %s3, %s2195
      // Predicated region
      $region33: #{_lambda_.3} parent=31 // pred_check
        %p2197 = pneg %p110
      $region34: #{_lambda_.3} parent=31 // pred_check_branch
        %2199 = sbr.rel (%p2197) target = $region36
      $region35: #{_lambda_.3} parent=31 // pred_region
        _
      $region36: #{_lambda_.3} parent=31 // pred_fallthru
        _
    $region32: #{_lambda_.3} parent=5 // pred_fallthru
      _
    %p2200 = scmp.le.s32.totalorder 2, %s9
    // Predicated region
    $region37: #{_lambda_.3} parent=5 // pred_check
      %p2201 = pneg %p2200
    $region38: #{_lambda_.3} parent=5 // pred_check_branch
      %2203 = sbr.rel (%p2201) target = $region40
    $region39: #{_lambda_.3} parent=5 // pred_region
      %s2204 = ssub.s32 %s9, 2
      // Predicated region
      $region41: #{_lambda_.3} parent=39 // pred_check
        %p2205 = pneg %p116
      $region42: #{_lambda_.3} parent=39 // pred_check_branch
        %2207 = sbr.rel (%p2205) target = $region44
      $region43: #{_lambda_.3} parent=39 // pred_region
        %p2208 = scmp.lt.s32.totalorder %s15, 1
        %s2209 = scalar_select %p2208, %s15, 1
        %s2210 = smul.addr %s2209, 8
        %s2211 = smul.addr %s2210, 2
        %s2212 = scalar_lea.vmem %s3, %s2211
      $region44: #{_lambda_.3} parent=39 // pred_fallthru
        _
    $region40: #{_lambda_.3} parent=5 // pred_fallthru
      _
  $region6: #{_lambda_.3} parent=0 // loop_footer
    %s13 = sadd.s32 1, %s9
  $region7: #{_lambda_.3} parent=0 // loop_footer_branch
    %8 = sbr.rel target = $region3
  $region8: #{_lambda_.3} parent=0 // loop_exit
    _

</llo_original>
